<compile_context>
chip_gen: v7x
topology: tpu7x:2x2x1
jax: 0.10.0
libtpu: 0.0.40
codegen_flags: <defaults>
</compile_context>

<pallas_src>
import jax
import jax.numpy as jnp
from jax.experimental import pallas as pl
from jax.experimental.pallas import tpu as pltpu

# ----- module parameters (deterministic, from __init__ defaults) -------------
SIGMAONF = 0.4
MIN_WL = 15.0
NSCALE = 3
MULT = 1.75


# ----- plain-JAX glue: filter / DFT-matrix construction ----------------------
def create_monogenic_filters(rows, cols):
    yf = jnp.fft.fftfreq(rows).astype(jnp.float32)
    xf = jnp.fft.fftfreq(cols).astype(jnp.float32)
    y_grid, x_grid = jnp.meshgrid(yf, xf, indexing="ij")
    w = jnp.sqrt(x_grid ** 2 + y_grid ** 2)
    w = w.at[0, 0].set(1.0)

    wls = jnp.array([MIN_WL * MULT ** i for i in range(NSCALE)],
                    dtype=jnp.float32).reshape(-1, 1, 1)
    w0 = 1.0 / wls
    log_sig2 = jnp.log(jnp.float32(SIGMAONF)) ** 2
    bp = jnp.exp(-jnp.log(w[None, :, :] / w0) ** 2 / (2.0 * log_sig2))
    bp = bp.at[:, 0, 0].set(0.0)
    if rows % 2 == 0:
        bp = bp.at[:, rows // 2, :].set(0.0)
    if cols % 2 == 0:
        bp = bp.at[:, :, cols // 2].set(0.0)
    bp = bp / jnp.max(jnp.sum(bp, axis=0))

    # riesz = (1j * y - x) / w
    r_re = -x_grid / w
    r_im = y_grid / w
    return bp.astype(jnp.float32), r_re.astype(jnp.float32), r_im.astype(jnp.float32)


def dft_matrix(n):
    """D[u, m] = exp(-2*pi*i*u*m/n), split into real / imag parts."""
    k = jnp.arange(n, dtype=jnp.float32)
    ang = -2.0 * jnp.pi * jnp.outer(k, k) / n
    return jnp.cos(ang), jnp.sin(ang)


# ----- Pallas kernel ----------------------------------------------------------
def monogenic_kernel(x_ref, dhre_ref, dhim_ref, dwre_ref, dwim_ref,
                     bp_ref, brre_ref, brim_ref, out_ref):
    bf16 = jnp.bfloat16
    f32 = jnp.float32

    dh_re = dhre_ref[...]                       # (H, H) bf16
    dh_im = dhim_ref[...]
    dw_re = dwre_ref[...]                       # (W, W) bf16
    dw_im = dwim_ref[...]
    bp = bp_ref[...]                            # (H, ns*W) f32  band-pass
    br_re = brre_ref[...]                       # (H, ns*W) f32  band-pass * riesz_re
    br_im = brim_ref[...]                       # (H, ns*W) f32  band-pass * riesz_im

    H = dh_re.shape[0]
    W = dw_re.shape[0]
    ns = bp.shape[1] // W
    x = x_ref[0]                                # (H, Bt*W) bf16, lane-stacked batch
    Bt = x.shape[1] // W

    def dot(a, b):                              # bf16 inputs, f32 MXU accumulation
        return jnp.dot(a.astype(bf16), b.astype(bf16),
                       preferred_element_type=f32)

    def rowstack(slab):                         # (H, n*W) -> (n*H, W), block order kept
        n = slab.shape[1] // W
        return jnp.concatenate([slab[:, i * W:(i + 1) * W] for i in range(n)],
                               axis=0)

    def lanestack(slab):                        # (n*H, W) -> (H, n*W), block order kept
        n = slab.shape[0] // H
        return jnp.concatenate([slab[i * H:(i + 1) * H, :] for i in range(n)],
                               axis=1)

    # ---- forward DFT, H direction: 2 fat MXU dots over the whole block (x real)
    yh_re = dot(dh_re, x)                       # (H, Bt*W) f32
    yh_im = dot(dh_im, x)

    # ---- forward DFT, W direction: row-stack (b-major) -> 4 fat dots ----------
    yr = rowstack(yh_re)                        # (Bt*H, W)
    yi = rowstack(yh_im)
    f_rs_re = dot(yr, dw_re) - dot(yi, dw_im)   # spectrum, rows (b, h)
    f_rs_im = dot(yr, dw_im) + dot(yi, dw_re)

    # ---- band-pass / Riesz filtering (no K-fold spectrum tiling) --------------
    # even half (k < nscale) uses the purely-real band-pass; filtered spectra
    # are cast to bf16 immediately (they are only ever MXU dot inputs).
    ge_re, ge_im, go_re, go_im = [], [], [], []
    for b in range(Bt):
        fb_re = f_rs_re[b * H:(b + 1) * H, :]               # (H, W) f32
        fb_im = f_rs_im[b * H:(b + 1) * H, :]
        frep = jnp.concatenate([fb_re] * ns, axis=1)         # (H, ns*W)
        irep = jnp.concatenate([fb_im] * ns, axis=1)
        ge_re.append((frep * bp).astype(bf16))
        ge_im.append((irep * bp).astype(bf16))
        go_re.append((frep * br_re - irep * br_im).astype(bf16))
        go_im.append((frep * br_im + irep * br_re).astype(bf16))

    # wide slab column order: (parity, b, s, w)
    g_re = jnp.concatenate(ge_re + go_re, axis=1)            # (H, 2*Bt*ns*W) bf16
    g_im = jnp.concatenate(ge_im + go_im, axis=1)

    # ---- inverse DFT, H direction: conj(D_H) folded into the +/- signs,
    #      fused across batch * parity * scale -> 4 fat MXU dots
    v_re = (dot(dh_re, g_re) + dot(dh_im, g_im)).astype(bf16)
    v_im = (dot(dh_re, g_im) - dot(dh_im, g_re)).astype(bf16)

    half = Bt * ns * W
    ver = rowstack(v_re[:, :half])              # even planes, rows (b, s, h)
    vei = rowstack(v_im[:, :half])
    vor = rowstack(v_re[:, half:])              # odd planes
    voi = rowstack(v_im[:, half:])

    # ---- inverse DFT, W direction: 6 fat dots; the even path only needs the
    #      real part (m1).  The 1/(H*W) normalisation cancels inside atan2.
    m1 = dot(ver, dw_re) + dot(vei, dw_im)      # (Bt*ns*H, W) f32
    m2 = dot(vor, dw_re) + dot(voi, dw_im)
    m3 = dot(voi, dw_re) - dot(vor, dw_im)

    lp = jnp.arctan2(jnp.sqrt(m2 * m2 + m3 * m3), m1)        # local phase
    lo = jnp.arctan2(-m2, m3)                                # local orientation

    # two lane-dense stores (no full-slab staging concatenate)
    out_ref[0, :, :half] = lanestack(lp)
    out_ref[0, :, half:] = lanestack(lo)


# ----- VMEM sizing helpers -----------------------------------------------------
def _estimate_vmem_bytes(H, W, Bt, ns):
    K = 2 * ns
    bf, f4 = 2, 4
    x_blk = 2 * H * Bt * W * bf                 # double-buffered bf16 input
    out_blk = 2 * H * K * Bt * W * f4           # double-buffered f32 output
    consts = (2 * H * H + 2 * W * W) * bf + 3 * H * ns * W * f4
    interm = (4 * H * Bt * W * f4               # yh re/im (f32)
              + 4 * H * Bt * W * f4             # row-stacked copies + spectrum
              + 2 * H * K * Bt * W * bf         # g slab (bf16)
              + 2 * H * K * Bt * W * (f4 + bf)  # v slab f32 + bf16
              + 2 * H * K * Bt * W * bf         # row-stacked v copies
              + 3 * H * ns * Bt * W * f4        # m1 / m2 / m3
              + 2 * H * ns * Bt * W * f4)       # lp / lo
    return x_blk + out_blk + consts + interm


def _pick_block_batch(B, H, W, ns, budget):
    cands = [bt for bt in range(min(B, 8), 0, -1) if B % bt == 0]
    for bt in cands:
        if B > 1 and B // bt < 2:               # keep >= 2 grid steps (dual-TC v7x)
            continue
        if _estimate_vmem_bytes(H, W, bt, ns) <= budget:
            return bt
    return 1


# ----- wrapper ----------------------------------------------------------------
def monogenic_forward(x, block_batch=None):
    B, C, H, W = x.shape
    assert C == 1, "Monogenic module broadcasting requires a single input channel"
    ns = NSCALE
    K = 2 * ns

    try:
        vmem_phys = int(pltpu.get_tpu_info().vmem_capacity_bytes)
    except Exception:
        vmem_phys = 64 * 1024 * 1024            # conservative (v7x per-core VMEM)
    budget = int(vmem_phys * 0.6)

    if block_batch is None:
        block_batch = _pick_block_batch(B, H, W, ns, budget)
    Bt = block_batch
    assert B % Bt == 0
    nb = B // Bt

    # input: lane-stacked (b, w) per block, bf16 (rounded to bf16 at the first
    # MXU dot anyway)
    xl = x[:, 0].astype(jnp.bfloat16).reshape(nb, Bt, H, W)
    xl = jnp.transpose(xl, (0, 2, 1, 3)).reshape(nb, H, Bt * W)

    # constants: DFT matrices bf16 (MXU native); filters f32 (VPU path), shipped
    # once at (H, ns*W) -- no per-batch replication, no zero imaginary half.
    bp, r_re, r_im = create_monogenic_filters(H, W)

    def widen(f):                               # (ns, H, W) -> (H, ns*W), cols (s, w)
        return jnp.transpose(f, (1, 0, 2)).reshape(H, ns * W)

    bp_w = widen(bp)
    br_w = widen(bp * r_re[None])
    bi_w = widen(bp * r_im[None])

    dh_re, dh_im = dft_matrix(H)
    dw_re, dw_im = dft_matrix(W)
    dh_re = dh_re.astype(jnp.bfloat16)
    dh_im = dh_im.astype(jnp.bfloat16)
    dw_re = dw_re.astype(jnp.bfloat16)
    dw_im = dw_im.astype(jnp.bfloat16)

    vmem_est = _estimate_vmem_bytes(H, W, Bt, ns)
    vmem_limit = int(min(max(2 * vmem_est, 32 * 1024 * 1024),
                         int(vmem_phys * 0.9)))

    def mmf(m, k, n):
        return 2 * m * k * n
    flops_per_image = (2 * mmf(H, H, W)         # forward H (x real)
                       + 4 * mmf(H, W, W)       # forward W
                       + 4 * mmf(H, H, K * W)   # inverse H (fused)
                       + 6 * mmf(ns * H, W, W))  # inverse W (m1 imag cut)
    cost = pl.CostEstimate(
        flops=int(B * flops_per_image),
        transcendentals=int(3 * B * ns * H * W),
        bytes_accessed=int(2 * B * H * W + 4 * B * K * H * W
                           + 2 * (H * H + W * W) * 2 + 4 * 3 * H * ns * W),
    )

    def build(single_buffer_consts):
        cmode = dict(pipeline_mode=pl.Buffered(1)) if single_buffer_consts else {}

        def const_spec(shape):
            return pl.BlockSpec(shape, lambda b: (0, 0), **cmode)

        return pl.pallas_call(
            monogenic_kernel,
            out_shape=jax.ShapeDtypeStruct((nb, H, K * Bt * W), jnp.float32),
            grid_spec=pltpu.PrefetchScalarGridSpec(
                num_scalar_prefetch=0,
                grid=(nb,),
                in_specs=[
                    pl.BlockSpec((1, H, Bt * W), lambda b: (b, 0, 0)),   # x (bf16)
                    const_spec((H, H)),                                  # D_H real
                    const_spec((H, H)),                                  # D_H imag
                    const_spec((W, W)),                                  # D_W real
                    const_spec((W, W)),                                  # D_W imag
                    const_spec((H, ns * W)),                             # band-pass
                    const_spec((H, ns * W)),                             # bp*riesz_re
                    const_spec((H, ns * W)),                             # bp*riesz_im
                ],
                out_specs=pl.BlockSpec((1, H, K * Bt * W), lambda b: (b, 0, 0)),
            ),
            compiler_params=pltpu.CompilerParams(
                dimension_semantics=("parallel",),
                vmem_limit_bytes=vmem_limit,
            ),
            cost_estimate=cost,
        )

    args = (xl, dh_re, dh_im, dw_re, dw_im, bp_w, br_w, bi_w)
    try:
        out_wide = jax.block_until_ready(build(True)(*args))
    except Exception:
        # pl.Buffered(1) unsupported in this jax build -> default double-buffering
        out_wide = build(False)(*args)

    # lane-dense slab (cols: parity, b, s, w) -> (B, 2*nscale, H, W)
    out = out_wide.reshape(nb, H, 2, Bt, ns, W)
    out = jnp.transpose(out, (0, 3, 2, 4, 1, 5)).reshape(B, K, H, W)
    return out


# ----- float32 FFT reference (mirrors the torch module) ------------------------
def monogenic_fft_ref(x):
    B, C, H, W = x.shape
    bp, r_re, r_im = create_monogenic_filters(H, W)
    riesz = (r_re + 1j * r_im).astype(jnp.complex64)
    F = jnp.fft.fft2(x[:, 0].astype(jnp.float32))
    Ff = F[:, None, :, :] * bp[None]
    m1 = jnp.fft.ifft2(Ff).real
    modd = jnp.fft.ifft2(Ff * riesz)
    m2, m3 = modd.real, modd.imag
    lp = jnp.arctan2(jnp.sqrt(m2 ** 2 + m3 ** 2), m1)
    lo = jnp.arctan2(-m2, m3)
    out = jnp.concatenate([lp, lo], axis=1)
    amp_lp = jnp.sqrt(m1 ** 2 + m2 ** 2 + m3 ** 2)   # conditioning of lp
    amp_lo = jnp.sqrt(m2 ** 2 + m3 ** 2)             # conditioning of lo
    return out, amp_lp, amp_lo


if __name__ == "__main__":
    key = jax.random.PRNGKey(0)
    x = jax.random.normal(key, (2, 1, 16, 16), dtype=jnp.float32)

    out = jax.block_until_ready(monogenic_forward(x))
    assert out.shape == (2, 2 * NSCALE, 16, 16)
    assert bool(jnp.all(jnp.isfinite(out)))

    # semantic check vs. the float32 jnp.fft reference on well-conditioned
    # pixels (local phase / orientation are undefined as the amplitude -> 0).
    ref, amp_lp, amp_lo = monogenic_fft_ref(x)
    jax.block_until_ready(ref)
    mf = jnp.mean(amp_lp, axis=(0, 2, 3), keepdims=True)
    mo = jnp.mean(amp_lo, axis=(0, 2, 3), keepdims=True)
    amp = jnp.concatenate([amp_lp, amp_lo], axis=1)
    thr = jnp.concatenate([jnp.broadcast_to(mf, amp_lp.shape),
                           jnp.broadcast_to(mo, amp_lo.shape)], axis=1)

    def circ_err(a, b):     # compare on the unit circle (avoids +/-pi wrap issues)
        return jnp.maximum(jnp.abs(jnp.sin(a) - jnp.sin(b)),
                           jnp.abs(jnp.cos(a) - jnp.cos(b)))

    err = float(jnp.max(jnp.where(amp > thr, circ_err(out, ref), 0.0)))
    assert err < 0.15, f"mismatch vs float32 FFT reference: {err}"

    print("KERNEL_OK")
</pallas_src>

<mosaic_0001>
module attributes {stable_mosaic.version = 11 : i64} {
  func.func @monogenic_kernel(%arg0: i32, %arg1: memref<1x16x16xbf16, #tpu.memory_space<vmem>>, %arg2: memref<16x16xbf16, #tpu.memory_space<vmem>>, %arg3: memref<16x16xbf16, #tpu.memory_space<vmem>>, %arg4: memref<16x16xbf16, #tpu.memory_space<vmem>>, %arg5: memref<16x16xbf16, #tpu.memory_space<vmem>>, %arg6: memref<16x48xf32, #tpu.memory_space<vmem>>, %arg7: memref<16x48xf32, #tpu.memory_space<vmem>>, %arg8: memref<16x48xf32, #tpu.memory_space<vmem>>, %arg9: memref<1x16x96xf32, #tpu.memory_space<vmem>>) attributes {dimension_semantics = [#tpu.dimension_semantics<parallel>], iteration_bounds = array<i64: 2>, scalar_prefetch = 0 : i64, scratch_operands = 0 : i64, tpu.core_type = #tpu.core_type<tc>, window_params = [{transform_indices = @transform_0, window_bounds = array<i64: 1, 16, 16>}, {pipeline_mode = #tpu.pipeline_mode<synchronous>, transform_indices = @transform_1, window_bounds = array<i64: 16, 16>}, {pipeline_mode = #tpu.pipeline_mode<synchronous>, transform_indices = @transform_2, window_bounds = array<i64: 16, 16>}, {pipeline_mode = #tpu.pipeline_mode<synchronous>, transform_indices = @transform_3, window_bounds = array<i64: 16, 16>}, {pipeline_mode = #tpu.pipeline_mode<synchronous>, transform_indices = @transform_4, window_bounds = array<i64: 16, 16>}, {pipeline_mode = #tpu.pipeline_mode<synchronous>, transform_indices = @transform_5, window_bounds = array<i64: 16, 48>}, {pipeline_mode = #tpu.pipeline_mode<synchronous>, transform_indices = @transform_6, window_bounds = array<i64: 16, 48>}, {pipeline_mode = #tpu.pipeline_mode<synchronous>, transform_indices = @transform_7, window_bounds = array<i64: 16, 48>}, {transform_indices = @transform_8, window_bounds = array<i64: 1, 16, 96>}]} {
    %c0 = arith.constant 0 : index
    %c0_0 = arith.constant 0 : index
    %0 = vector.load %arg2[%c0, %c0_0] : memref<16x16xbf16, #tpu.memory_space<vmem>>, vector<16x16xbf16>
    %c0_1 = arith.constant 0 : index
    %c0_2 = arith.constant 0 : index
    %1 = vector.load %arg3[%c0_1, %c0_2] : memref<16x16xbf16, #tpu.memory_space<vmem>>, vector<16x16xbf16>
    %c0_3 = arith.constant 0 : index
    %c0_4 = arith.constant 0 : index
    %2 = vector.load %arg4[%c0_3, %c0_4] : memref<16x16xbf16, #tpu.memory_space<vmem>>, vector<16x16xbf16>
    %c0_5 = arith.constant 0 : index
    %c0_6 = arith.constant 0 : index
    %3 = vector.load %arg5[%c0_5, %c0_6] : memref<16x16xbf16, #tpu.memory_space<vmem>>, vector<16x16xbf16>
    %c0_7 = arith.constant 0 : index
    %c0_8 = arith.constant 0 : index
    %4 = vector.load %arg6[%c0_7, %c0_8] : memref<16x48xf32, #tpu.memory_space<vmem>>, vector<16x48xf32>
    %c0_9 = arith.constant 0 : index
    %c0_10 = arith.constant 0 : index
    %5 = vector.load %arg7[%c0_9, %c0_10] : memref<16x48xf32, #tpu.memory_space<vmem>>, vector<16x48xf32>
    %c0_11 = arith.constant 0 : index
    %c0_12 = arith.constant 0 : index
    %6 = vector.load %arg8[%c0_11, %c0_12] : memref<16x48xf32, #tpu.memory_space<vmem>>, vector<16x48xf32>
    %c0_13 = arith.constant 0 : index
    %c0_14 = arith.constant 0 : index
    %c0_15 = arith.constant 0 : index
    %7 = vector.load %arg1[%c0_13, %c0_14, %c0_15] : memref<1x16x16xbf16, #tpu.memory_space<vmem>>, vector<1x16x16xbf16>
    %8 = vector.shape_cast %7 : vector<1x16x16xbf16> to vector<16x16xbf16>
    %cst = arith.constant dense<0.000000e+00> : vector<16x16xf32>
    %9 = tpu.matmul %0, %8, %cst {dimension_numbers = #tpu.dot_dimension_numbers<[1], [0], [0], [1], [0, 0, 1, 1], [], []>} : vector<16x16xbf16>, vector<16x16xbf16>, vector<16x16xf32> -> vector<16x16xf32>
    %cst_16 = arith.constant dense<0.000000e+00> : vector<16x16xf32>
    %10 = tpu.matmul %1, %8, %cst_16 {dimension_numbers = #tpu.dot_dimension_numbers<[1], [0], [0], [1], [0, 0, 1, 1], [], []>} : vector<16x16xbf16>, vector<16x16xbf16>, vector<16x16xf32> -> vector<16x16xf32>
    %11 = arith.truncf %9 : vector<16x16xf32> to vector<16x16xbf16>
    %cst_17 = arith.constant dense<0.000000e+00> : vector<16x16xf32>
    %12 = tpu.matmul %11, %2, %cst_17 {dimension_numbers = #tpu.dot_dimension_numbers<[1], [0], [0], [1], [0, 0, 1, 1], [], []>} : vector<16x16xbf16>, vector<16x16xbf16>, vector<16x16xf32> -> vector<16x16xf32>
    %13 = arith.truncf %10 : vector<16x16xf32> to vector<16x16xbf16>
    %cst_18 = arith.constant dense<0.000000e+00> : vector<16x16xf32>
    %14 = tpu.matmul %13, %3, %cst_18 {dimension_numbers = #tpu.dot_dimension_numbers<[1], [0], [0], [1], [0, 0, 1, 1], [], []>} : vector<16x16xbf16>, vector<16x16xbf16>, vector<16x16xf32> -> vector<16x16xf32>
    %15 = arith.subf %12, %14 : vector<16x16xf32>
    %16 = arith.truncf %9 : vector<16x16xf32> to vector<16x16xbf16>
    %cst_19 = arith.constant dense<0.000000e+00> : vector<16x16xf32>
    %17 = tpu.matmul %16, %3, %cst_19 {dimension_numbers = #tpu.dot_dimension_numbers<[1], [0], [0], [1], [0, 0, 1, 1], [], []>} : vector<16x16xbf16>, vector<16x16xbf16>, vector<16x16xf32> -> vector<16x16xf32>
    %18 = arith.truncf %10 : vector<16x16xf32> to vector<16x16xbf16>
    %cst_20 = arith.constant dense<0.000000e+00> : vector<16x16xf32>
    %19 = tpu.matmul %18, %2, %cst_20 {dimension_numbers = #tpu.dot_dimension_numbers<[1], [0], [0], [1], [0, 0, 1, 1], [], []>} : vector<16x16xbf16>, vector<16x16xbf16>, vector<16x16xf32> -> vector<16x16xf32>
    %20 = arith.addf %17, %19 : vector<16x16xf32>
    %21 = tpu.concatenate %15, %15, %15 in 1 : vector<16x16xf32>, vector<16x16xf32>, vector<16x16xf32> -> vector<16x48xf32>
    %22 = tpu.concatenate %20, %20, %20 in 1 : vector<16x16xf32>, vector<16x16xf32>, vector<16x16xf32> -> vector<16x48xf32>
    %23 = arith.mulf %21, %4 : vector<16x48xf32>
    %24 = arith.truncf %23 : vector<16x48xf32> to vector<16x48xbf16>
    %25 = arith.mulf %22, %4 : vector<16x48xf32>
    %26 = arith.truncf %25 : vector<16x48xf32> to vector<16x48xbf16>
    %27 = arith.mulf %21, %5 : vector<16x48xf32>
    %28 = arith.mulf %22, %6 : vector<16x48xf32>
    %29 = arith.subf %27, %28 : vector<16x48xf32>
    %30 = arith.truncf %29 : vector<16x48xf32> to vector<16x48xbf16>
    %31 = arith.mulf %21, %6 : vector<16x48xf32>
    %32 = arith.mulf %22, %5 : vector<16x48xf32>
    %33 = arith.addf %31, %32 : vector<16x48xf32>
    %34 = arith.truncf %33 : vector<16x48xf32> to vector<16x48xbf16>
    %35 = tpu.concatenate %24, %30 in 1 : vector<16x48xbf16>, vector<16x48xbf16> -> vector<16x96xbf16>
    %36 = tpu.concatenate %26, %34 in 1 : vector<16x48xbf16>, vector<16x48xbf16> -> vector<16x96xbf16>
    %cst_21 = arith.constant dense<0.000000e+00> : vector<16x96xf32>
    %37 = tpu.matmul %0, %35, %cst_21 {dimension_numbers = #tpu.dot_dimension_numbers<[1], [0], [0], [1], [0, 0, 1, 1], [], []>} : vector<16x16xbf16>, vector<16x96xbf16>, vector<16x96xf32> -> vector<16x96xf32>
    %cst_22 = arith.constant dense<0.000000e+00> : vector<16x96xf32>
    %38 = tpu.matmul %1, %36, %cst_22 {dimension_numbers = #tpu.dot_dimension_numbers<[1], [0], [0], [1], [0, 0, 1, 1], [], []>} : vector<16x16xbf16>, vector<16x96xbf16>, vector<16x96xf32> -> vector<16x96xf32>
    %39 = arith.addf %37, %38 : vector<16x96xf32>
    %40 = arith.truncf %39 : vector<16x96xf32> to vector<16x96xbf16>
    %cst_23 = arith.constant dense<0.000000e+00> : vector<16x96xf32>
    %41 = tpu.matmul %0, %36, %cst_23 {dimension_numbers = #tpu.dot_dimension_numbers<[1], [0], [0], [1], [0, 0, 1, 1], [], []>} : vector<16x16xbf16>, vector<16x96xbf16>, vector<16x96xf32> -> vector<16x96xf32>
    %cst_24 = arith.constant dense<0.000000e+00> : vector<16x96xf32>
    %42 = tpu.matmul %1, %35, %cst_24 {dimension_numbers = #tpu.dot_dimension_numbers<[1], [0], [0], [1], [0, 0, 1, 1], [], []>} : vector<16x16xbf16>, vector<16x96xbf16>, vector<16x96xf32> -> vector<16x96xf32>
    %43 = arith.subf %41, %42 : vector<16x96xf32>
    %44 = arith.truncf %43 : vector<16x96xf32> to vector<16x96xbf16>
    %45 = vector.extract_strided_slice %40 {offsets = [0, 0], sizes = [16, 48], strides = [1, 1]} : vector<16x96xbf16> to vector<16x48xbf16>
    %46 = vector.extract_strided_slice %45 {offsets = [0, 0], sizes = [16, 16], strides = [1, 1]} : vector<16x48xbf16> to vector<16x16xbf16>
    %47 = vector.extract_strided_slice %45 {offsets = [0, 16], sizes = [16, 16], strides = [1, 1]} : vector<16x48xbf16> to vector<16x16xbf16>
    %48 = vector.extract_strided_slice %45 {offsets = [0, 32], sizes = [16, 16], strides = [1, 1]} : vector<16x48xbf16> to vector<16x16xbf16>
    %49 = tpu.concatenate %46, %47, %48 in 0 : vector<16x16xbf16>, vector<16x16xbf16>, vector<16x16xbf16> -> vector<48x16xbf16>
    %50 = vector.extract_strided_slice %44 {offsets = [0, 0], sizes = [16, 48], strides = [1, 1]} : vector<16x96xbf16> to vector<16x48xbf16>
    %51 = vector.extract_strided_slice %50 {offsets = [0, 0], sizes = [16, 16], strides = [1, 1]} : vector<16x48xbf16> to vector<16x16xbf16>
    %52 = vector.extract_strided_slice %50 {offsets = [0, 16], sizes = [16, 16], strides = [1, 1]} : vector<16x48xbf16> to vector<16x16xbf16>
    %53 = vector.extract_strided_slice %50 {offsets = [0, 32], sizes = [16, 16], strides = [1, 1]} : vector<16x48xbf16> to vector<16x16xbf16>
    %54 = tpu.concatenate %51, %52, %53 in 0 : vector<16x16xbf16>, vector<16x16xbf16>, vector<16x16xbf16> -> vector<48x16xbf16>
    %55 = vector.extract_strided_slice %40 {offsets = [0, 48], sizes = [16, 48], strides = [1, 1]} : vector<16x96xbf16> to vector<16x48xbf16>
    %56 = vector.extract_strided_slice %55 {offsets = [0, 0], sizes = [16, 16], strides = [1, 1]} : vector<16x48xbf16> to vector<16x16xbf16>
    %57 = vector.extract_strided_slice %55 {offsets = [0, 16], sizes = [16, 16], strides = [1, 1]} : vector<16x48xbf16> to vector<16x16xbf16>
    %58 = vector.extract_strided_slice %55 {offsets = [0, 32], sizes = [16, 16], strides = [1, 1]} : vector<16x48xbf16> to vector<16x16xbf16>
    %59 = tpu.concatenate %56, %57, %58 in 0 : vector<16x16xbf16>, vector<16x16xbf16>, vector<16x16xbf16> -> vector<48x16xbf16>
    %60 = vector.extract_strided_slice %44 {offsets = [0, 48], sizes = [16, 48], strides = [1, 1]} : vector<16x96xbf16> to vector<16x48xbf16>
    %61 = vector.extract_strided_slice %60 {offsets = [0, 0], sizes = [16, 16], strides = [1, 1]} : vector<16x48xbf16> to vector<16x16xbf16>
    %62 = vector.extract_strided_slice %60 {offsets = [0, 16], sizes = [16, 16], strides = [1, 1]} : vector<16x48xbf16> to vector<16x16xbf16>
    %63 = vector.extract_strided_slice %60 {offsets = [0, 32], sizes = [16, 16], strides = [1, 1]} : vector<16x48xbf16> to vector<16x16xbf16>
    %64 = tpu.concatenate %61, %62, %63 in 0 : vector<16x16xbf16>, vector<16x16xbf16>, vector<16x16xbf16> -> vector<48x16xbf16>
    %cst_25 = arith.constant dense<0.000000e+00> : vector<48x16xf32>
    %65 = tpu.matmul %49, %2, %cst_25 {dimension_numbers = #tpu.dot_dimension_numbers<[1], [0], [0], [1], [0, 0, 1, 1], [], []>} : vector<48x16xbf16>, vector<16x16xbf16>, vector<48x16xf32> -> vector<48x16xf32>
    %cst_26 = arith.constant dense<0.000000e+00> : vector<48x16xf32>
    %66 = tpu.matmul %54, %3, %cst_26 {dimension_numbers = #tpu.dot_dimension_numbers<[1], [0], [0], [1], [0, 0, 1, 1], [], []>} : vector<48x16xbf16>, vector<16x16xbf16>, vector<48x16xf32> -> vector<48x16xf32>
    %67 = arith.addf %65, %66 : vector<48x16xf32>
    %cst_27 = arith.constant dense<0.000000e+00> : vector<48x16xf32>
    %68 = tpu.matmul %59, %2, %cst_27 {dimension_numbers = #tpu.dot_dimension_numbers<[1], [0], [0], [1], [0, 0, 1, 1], [], []>} : vector<48x16xbf16>, vector<16x16xbf16>, vector<48x16xf32> -> vector<48x16xf32>
    %cst_28 = arith.constant dense<0.000000e+00> : vector<48x16xf32>
    %69 = tpu.matmul %64, %3, %cst_28 {dimension_numbers = #tpu.dot_dimension_numbers<[1], [0], [0], [1], [0, 0, 1, 1], [], []>} : vector<48x16xbf16>, vector<16x16xbf16>, vector<48x16xf32> -> vector<48x16xf32>
    %70 = arith.addf %68, %69 : vector<48x16xf32>
    %cst_29 = arith.constant dense<0.000000e+00> : vector<48x16xf32>
    %71 = tpu.matmul %64, %2, %cst_29 {dimension_numbers = #tpu.dot_dimension_numbers<[1], [0], [0], [1], [0, 0, 1, 1], [], []>} : vector<48x16xbf16>, vector<16x16xbf16>, vector<48x16xf32> -> vector<48x16xf32>
    %cst_30 = arith.constant dense<0.000000e+00> : vector<48x16xf32>
    %72 = tpu.matmul %59, %3, %cst_30 {dimension_numbers = #tpu.dot_dimension_numbers<[1], [0], [0], [1], [0, 0, 1, 1], [], []>} : vector<48x16xbf16>, vector<16x16xbf16>, vector<48x16xf32> -> vector<48x16xf32>
    %73 = arith.subf %71, %72 : vector<48x16xf32>
    %74 = arith.mulf %70, %70 : vector<48x16xf32>
    %75 = arith.mulf %73, %73 : vector<48x16xf32>
    %76 = arith.addf %74, %75 : vector<48x16xf32>
    %77 = math.sqrt %76 : vector<48x16xf32>
    %78 = math.atan2 %77, %67 : vector<48x16xf32>
    %cst_31 = arith.constant 0.000000e+00 : f32
    %79 = vector.broadcast %cst_31 : f32 to vector<48x16xf32>
    %80 = arith.subf %79, %70 : vector<48x16xf32>
    %81 = math.atan2 %80, %73 : vector<48x16xf32>
    %82 = vector.extract_strided_slice %78 {offsets = [0, 0], sizes = [16, 16], strides = [1, 1]} : vector<48x16xf32> to vector<16x16xf32>
    %83 = vector.extract_strided_slice %78 {offsets = [16, 0], sizes = [16, 16], strides = [1, 1]} : vector<48x16xf32> to vector<16x16xf32>
    %84 = vector.extract_strided_slice %78 {offsets = [32, 0], sizes = [16, 16], strides = [1, 1]} : vector<48x16xf32> to vector<16x16xf32>
    %85 = tpu.concatenate %82, %83, %84 in 1 : vector<16x16xf32>, vector<16x16xf32>, vector<16x16xf32> -> vector<16x48xf32>
    %c0_32 = arith.constant 0 : index
    %c0_33 = arith.constant 0 : index
    %c0_34 = arith.constant 0 : index
    %86 = vector.load %arg9[%c0_32, %c0_33, %c0_34] : memref<1x16x96xf32, #tpu.memory_space<vmem>>, vector<1x16x48xf32>
    %87 = vector.shape_cast %86 : vector<1x16x48xf32> to vector<16x48xf32>
    %88 = vector.shape_cast %85 : vector<16x48xf32> to vector<1x16x48xf32>
    tpu.vector_store %arg9[%c0_32, %c0_33, %c0_34], %88 {strides = array<i32>} : memref<1x16x96xf32, #tpu.memory_space<vmem>>, vector<1x16x48xf32>,
    %89 = vector.extract_strided_slice %81 {offsets = [0, 0], sizes = [16, 16], strides = [1, 1]} : vector<48x16xf32> to vector<16x16xf32>
    %90 = vector.extract_strided_slice %81 {offsets = [16, 0], sizes = [16, 16], strides = [1, 1]} : vector<48x16xf32> to vector<16x16xf32>
    %91 = vector.extract_strided_slice %81 {offsets = [32, 0], sizes = [16, 16], strides = [1, 1]} : vector<48x16xf32> to vector<16x16xf32>
    %92 = tpu.concatenate %89, %90, %91 in 1 : vector<16x16xf32>, vector<16x16xf32>, vector<16x16xf32> -> vector<16x48xf32>
    %c0_35 = arith.constant 0 : index
    %c0_36 = arith.constant 0 : index
    %c48 = arith.constant 48 : index
    %93 = vector.load %arg9[%c0_35, %c0_36, %c48] : memref<1x16x96xf32, #tpu.memory_space<vmem>>, vector<1x16x48xf32>
    %94 = vector.shape_cast %93 : vector<1x16x48xf32> to vector<16x48xf32>
    %95 = vector.shape_cast %92 : vector<16x48xf32> to vector<1x16x48xf32>
    tpu.vector_store %arg9[%c0_35, %c0_36, %c48], %95 {strides = array<i32>} : memref<1x16x96xf32, #tpu.memory_space<vmem>>, vector<1x16x48xf32>,
    return
  }
  func.func @transform_0(%arg0: i32) -> (i32, i32, i32) {
    %c0_i32 = arith.constant 0 : i32
    %c0_i32_0 = arith.constant 0 : i32
    %c0_i32_1 = arith.constant 0 : i32
    return %arg0, %c0_i32, %c0_i32_0 : i32, i32, i32
  }
  func.func @transform_1(%arg0: i32) -> (i32, i32) {
    %c0_i32 = arith.constant 0 : i32
    %c0_i32_0 = arith.constant 0 : i32
    %c0_i32_1 = arith.constant 0 : i32
    return %c0_i32, %c0_i32_0 : i32, i32
  }
  func.func @transform_2(%arg0: i32) -> (i32, i32) {
    %c0_i32 = arith.constant 0 : i32
    %c0_i32_0 = arith.constant 0 : i32
    %c0_i32_1 = arith.constant 0 : i32
    return %c0_i32, %c0_i32_0 : i32, i32
  }
  func.func @transform_3(%arg0: i32) -> (i32, i32) {
    %c0_i32 = arith.constant 0 : i32
    %c0_i32_0 = arith.constant 0 : i32
    %c0_i32_1 = arith.constant 0 : i32
    return %c0_i32, %c0_i32_0 : i32, i32
  }
  func.func @transform_4(%arg0: i32) -> (i32, i32) {
    %c0_i32 = arith.constant 0 : i32
    %c0_i32_0 = arith.constant 0 : i32
    %c0_i32_1 = arith.constant 0 : i32
    return %c0_i32, %c0_i32_0 : i32, i32
  }
  func.func @transform_5(%arg0: i32) -> (i32, i32) {
    %c0_i32 = arith.constant 0 : i32
    %c0_i32_0 = arith.constant 0 : i32
    %c0_i32_1 = arith.constant 0 : i32
    return %c0_i32, %c0_i32_0 : i32, i32
  }
  func.func @transform_6(%arg0: i32) -> (i32, i32) {
    %c0_i32 = arith.constant 0 : i32
    %c0_i32_0 = arith.constant 0 : i32
    %c0_i32_1 = arith.constant 0 : i32
    return %c0_i32, %c0_i32_0 : i32, i32
  }
  func.func @transform_7(%arg0: i32) -> (i32, i32) {
    %c0_i32 = arith.constant 0 : i32
    %c0_i32_0 = arith.constant 0 : i32
    %c0_i32_1 = arith.constant 0 : i32
    return %c0_i32, %c0_i32_0 : i32, i32
  }
  func.func @transform_8(%arg0: i32) -> (i32, i32, i32) {
    %c0_i32 = arith.constant 0 : i32
    %c0_i32_0 = arith.constant 0 : i32
    %c0_i32_1 = arith.constant 0 : i32
    return %arg0, %c0_i32, %c0_i32_0 : i32, i32, i32
  }
}

module attributes {stable_mosaic.version = 11 : i64} {
  func.func @monogenic_kernel(%arg0: i32, %arg1: memref<1x16x16xbf16, #tpu.memory_space<vmem>>, %arg2: memref<16x16xbf16, #tpu.memory_space<vmem>>, %arg3: memref<16x16xbf16, #tpu.memory_space<vmem>>, %arg4: memref<16x16xbf16, #tpu.memory_space<vmem>>, %arg5: memref<16x16xbf16, #tpu.memory_space<vmem>>, %arg6: memref<16x48xf32, #tpu.memory_space<vmem>>, %arg7: memref<16x48xf32, #tpu.memory_space<vmem>>, %arg8: memref<16x48xf32, #tpu.memory_space<vmem>>, %arg9: memref<1x16x96xf32, #tpu.memory_space<vmem>>) attributes {dimension_semantics = [#tpu.dimension_semantics<parallel>], iteration_bounds = array<i64: 2>, scalar_prefetch = 0 : i64, scratch_operands = 0 : i64, tpu.core_type = #tpu.core_type<tc>, window_params = [{transform_indices = @transform_0, window_bounds = array<i64: 1, 16, 16>}, {pipeline_mode = #tpu.pipeline_mode<synchronous>, transform_indices = @transform_1, window_bounds = array<i64: 16, 16>}, {pipeline_mode = #tpu.pipeline_mode<synchronous>, transform_indices = @transform_2, window_bounds = array<i64: 16, 16>}, {pipeline_mode = #tpu.pipeline_mode<synchronous>, transform_indices = @transform_3, window_bounds = array<i64: 16, 16>}, {pipeline_mode = #tpu.pipeline_mode<synchronous>, transform_indices = @transform_4, window_bounds = array<i64: 16, 16>}, {pipeline_mode = #tpu.pipeline_mode<synchronous>, transform_indices = @transform_5, window_bounds = array<i64: 16, 48>}, {pipeline_mode = #tpu.pipeline_mode<synchronous>, transform_indices = @transform_6, window_bounds = array<i64: 16, 48>}, {pipeline_mode = #tpu.pipeline_mode<synchronous>, transform_indices = @transform_7, window_bounds = array<i64: 16, 48>}, {transform_indices = @transform_8, window_bounds = array<i64: 1, 16, 96>}]} {
    %c0 = arith.constant 0 : index
    %c0_0 = arith.constant 0 : index
    %0 = vector.load %arg2[%c0, %c0_0] : memref<16x16xbf16, #tpu.memory_space<vmem>>, vector<16x16xbf16>
    %c0_1 = arith.constant 0 : index
    %c0_2 = arith.constant 0 : index
    %1 = vector.load %arg3[%c0_1, %c0_2] : memref<16x16xbf16, #tpu.memory_space<vmem>>, vector<16x16xbf16>
    %c0_3 = arith.constant 0 : index
    %c0_4 = arith.constant 0 : index
    %2 = vector.load %arg4[%c0_3, %c0_4] : memref<16x16xbf16, #tpu.memory_space<vmem>>, vector<16x16xbf16>
    %c0_5 = arith.constant 0 : index
    %c0_6 = arith.constant 0 : index
    %3 = vector.load %arg5[%c0_5, %c0_6] : memref<16x16xbf16, #tpu.memory_space<vmem>>, vector<16x16xbf16>
    %c0_7 = arith.constant 0 : index
    %c0_8 = arith.constant 0 : index
    %4 = vector.load %arg6[%c0_7, %c0_8] : memref<16x48xf32, #tpu.memory_space<vmem>>, vector<16x48xf32>
    %c0_9 = arith.constant 0 : index
    %c0_10 = arith.constant 0 : index
    %5 = vector.load %arg7[%c0_9, %c0_10] : memref<16x48xf32, #tpu.memory_space<vmem>>, vector<16x48xf32>
    %c0_11 = arith.constant 0 : index
    %c0_12 = arith.constant 0 : index
    %6 = vector.load %arg8[%c0_11, %c0_12] : memref<16x48xf32, #tpu.memory_space<vmem>>, vector<16x48xf32>
    %c0_13 = arith.constant 0 : index
    %c0_14 = arith.constant 0 : index
    %c0_15 = arith.constant 0 : index
    %7 = vector.load %arg1[%c0_13, %c0_14, %c0_15] : memref<1x16x16xbf16, #tpu.memory_space<vmem>>, vector<1x16x16xbf16>
    %8 = vector.shape_cast %7 : vector<1x16x16xbf16> to vector<16x16xbf16>
    %cst = arith.constant dense<0.000000e+00> : vector<16x16xf32>
    %9 = tpu.matmul %0, %8, %cst {dimension_numbers = #tpu.dot_dimension_numbers<[1], [0], [0], [1], [0, 0, 1, 1], [], []>} : vector<16x16xbf16>, vector<16x16xbf16>, vector<16x16xf32> -> vector<16x16xf32>
    %cst_16 = arith.constant dense<0.000000e+00> : vector<16x16xf32>
    %10 = tpu.matmul %1, %8, %cst_16 {dimension_numbers = #tpu.dot_dimension_numbers<[1], [0], [0], [1], [0, 0, 1, 1], [], []>} : vector<16x16xbf16>, vector<16x16xbf16>, vector<16x16xf32> -> vector<16x16xf32>
    %11 = arith.truncf %9 : vector<16x16xf32> to vector<16x16xbf16>
    %cst_17 = arith.constant dense<0.000000e+00> : vector<16x16xf32>
    %12 = tpu.matmul %11, %2, %cst_17 {dimension_numbers = #tpu.dot_dimension_numbers<[1], [0], [0], [1], [0, 0, 1, 1], [], []>} : vector<16x16xbf16>, vector<16x16xbf16>, vector<16x16xf32> -> vector<16x16xf32>
    %13 = arith.truncf %10 : vector<16x16xf32> to vector<16x16xbf16>
    %cst_18 = arith.constant dense<0.000000e+00> : vector<16x16xf32>
    %14 = tpu.matmul %13, %3, %cst_18 {dimension_numbers = #tpu.dot_dimension_numbers<[1], [0], [0], [1], [0, 0, 1, 1], [], []>} : vector<16x16xbf16>, vector<16x16xbf16>, vector<16x16xf32> -> vector<16x16xf32>
    %15 = arith.subf %12, %14 : vector<16x16xf32>
    %16 = arith.truncf %9 : vector<16x16xf32> to vector<16x16xbf16>
    %cst_19 = arith.constant dense<0.000000e+00> : vector<16x16xf32>
    %17 = tpu.matmul %16, %3, %cst_19 {dimension_numbers = #tpu.dot_dimension_numbers<[1], [0], [0], [1], [0, 0, 1, 1], [], []>} : vector<16x16xbf16>, vector<16x16xbf16>, vector<16x16xf32> -> vector<16x16xf32>
    %18 = arith.truncf %10 : vector<16x16xf32> to vector<16x16xbf16>
    %cst_20 = arith.constant dense<0.000000e+00> : vector<16x16xf32>
    %19 = tpu.matmul %18, %2, %cst_20 {dimension_numbers = #tpu.dot_dimension_numbers<[1], [0], [0], [1], [0, 0, 1, 1], [], []>} : vector<16x16xbf16>, vector<16x16xbf16>, vector<16x16xf32> -> vector<16x16xf32>
    %20 = arith.addf %17, %19 : vector<16x16xf32>
    %21 = tpu.concatenate %15, %15, %15 in 1 : vector<16x16xf32>, vector<16x16xf32>, vector<16x16xf32> -> vector<16x48xf32>
    %22 = tpu.concatenate %20, %20, %20 in 1 : vector<16x16xf32>, vector<16x16xf32>, vector<16x16xf32> -> vector<16x48xf32>
    %23 = arith.mulf %21, %4 : vector<16x48xf32>
    %24 = arith.truncf %23 : vector<16x48xf32> to vector<16x48xbf16>
    %25 = arith.mulf %22, %4 : vector<16x48xf32>
    %26 = arith.truncf %25 : vector<16x48xf32> to vector<16x48xbf16>
    %27 = arith.mulf %21, %5 : vector<16x48xf32>
    %28 = arith.mulf %22, %6 : vector<16x48xf32>
    %29 = arith.subf %27, %28 : vector<16x48xf32>
    %30 = arith.truncf %29 : vector<16x48xf32> to vector<16x48xbf16>
    %31 = arith.mulf %21, %6 : vector<16x48xf32>
    %32 = arith.mulf %22, %5 : vector<16x48xf32>
    %33 = arith.addf %31, %32 : vector<16x48xf32>
    %34 = arith.truncf %33 : vector<16x48xf32> to vector<16x48xbf16>
    %35 = tpu.concatenate %24, %30 in 1 : vector<16x48xbf16>, vector<16x48xbf16> -> vector<16x96xbf16>
    %36 = tpu.concatenate %26, %34 in 1 : vector<16x48xbf16>, vector<16x48xbf16> -> vector<16x96xbf16>
    %cst_21 = arith.constant dense<0.000000e+00> : vector<16x96xf32>
    %37 = tpu.matmul %0, %35, %cst_21 {dimension_numbers = #tpu.dot_dimension_numbers<[1], [0], [0], [1], [0, 0, 1, 1], [], []>} : vector<16x16xbf16>, vector<16x96xbf16>, vector<16x96xf32> -> vector<16x96xf32>
    %cst_22 = arith.constant dense<0.000000e+00> : vector<16x96xf32>
    %38 = tpu.matmul %1, %36, %cst_22 {dimension_numbers = #tpu.dot_dimension_numbers<[1], [0], [0], [1], [0, 0, 1, 1], [], []>} : vector<16x16xbf16>, vector<16x96xbf16>, vector<16x96xf32> -> vector<16x96xf32>
    %39 = arith.addf %37, %38 : vector<16x96xf32>
    %40 = arith.truncf %39 : vector<16x96xf32> to vector<16x96xbf16>
    %cst_23 = arith.constant dense<0.000000e+00> : vector<16x96xf32>
    %41 = tpu.matmul %0, %36, %cst_23 {dimension_numbers = #tpu.dot_dimension_numbers<[1], [0], [0], [1], [0, 0, 1, 1], [], []>} : vector<16x16xbf16>, vector<16x96xbf16>, vector<16x96xf32> -> vector<16x96xf32>
    %cst_24 = arith.constant dense<0.000000e+00> : vector<16x96xf32>
    %42 = tpu.matmul %1, %35, %cst_24 {dimension_numbers = #tpu.dot_dimension_numbers<[1], [0], [0], [1], [0, 0, 1, 1], [], []>} : vector<16x16xbf16>, vector<16x96xbf16>, vector<16x96xf32> -> vector<16x96xf32>
    %43 = arith.subf %41, %42 : vector<16x96xf32>
    %44 = arith.truncf %43 : vector<16x96xf32> to vector<16x96xbf16>
    %45 = vector.extract_strided_slice %40 {offsets = [0, 0], sizes = [16, 48], strides = [1, 1]} : vector<16x96xbf16> to vector<16x48xbf16>
    %46 = vector.extract_strided_slice %45 {offsets = [0, 0], sizes = [16, 16], strides = [1, 1]} : vector<16x48xbf16> to vector<16x16xbf16>
    %47 = vector.extract_strided_slice %45 {offsets = [0, 16], sizes = [16, 16], strides = [1, 1]} : vector<16x48xbf16> to vector<16x16xbf16>
    %48 = vector.extract_strided_slice %45 {offsets = [0, 32], sizes = [16, 16], strides = [1, 1]} : vector<16x48xbf16> to vector<16x16xbf16>
    %49 = tpu.concatenate %46, %47, %48 in 0 : vector<16x16xbf16>, vector<16x16xbf16>, vector<16x16xbf16> -> vector<48x16xbf16>
    %50 = vector.extract_strided_slice %44 {offsets = [0, 0], sizes = [16, 48], strides = [1, 1]} : vector<16x96xbf16> to vector<16x48xbf16>
    %51 = vector.extract_strided_slice %50 {offsets = [0, 0], sizes = [16, 16], strides = [1, 1]} : vector<16x48xbf16> to vector<16x16xbf16>
    %52 = vector.extract_strided_slice %50 {offsets = [0, 16], sizes = [16, 16], strides = [1, 1]} : vector<16x48xbf16> to vector<16x16xbf16>
    %53 = vector.extract_strided_slice %50 {offsets = [0, 32], sizes = [16, 16], strides = [1, 1]} : vector<16x48xbf16> to vector<16x16xbf16>
    %54 = tpu.concatenate %51, %52, %53 in 0 : vector<16x16xbf16>, vector<16x16xbf16>, vector<16x16xbf16> -> vector<48x16xbf16>
    %55 = vector.extract_strided_slice %40 {offsets = [0, 48], sizes = [16, 48], strides = [1, 1]} : vector<16x96xbf16> to vector<16x48xbf16>
    %56 = vector.extract_strided_slice %55 {offsets = [0, 0], sizes = [16, 16], strides = [1, 1]} : vector<16x48xbf16> to vector<16x16xbf16>
    %57 = vector.extract_strided_slice %55 {offsets = [0, 16], sizes = [16, 16], strides = [1, 1]} : vector<16x48xbf16> to vector<16x16xbf16>
    %58 = vector.extract_strided_slice %55 {offsets = [0, 32], sizes = [16, 16], strides = [1, 1]} : vector<16x48xbf16> to vector<16x16xbf16>
    %59 = tpu.concatenate %56, %57, %58 in 0 : vector<16x16xbf16>, vector<16x16xbf16>, vector<16x16xbf16> -> vector<48x16xbf16>
    %60 = vector.extract_strided_slice %44 {offsets = [0, 48], sizes = [16, 48], strides = [1, 1]} : vector<16x96xbf16> to vector<16x48xbf16>
    %61 = vector.extract_strided_slice %60 {offsets = [0, 0], sizes = [16, 16], strides = [1, 1]} : vector<16x48xbf16> to vector<16x16xbf16>
    %62 = vector.extract_strided_slice %60 {offsets = [0, 16], sizes = [16, 16], strides = [1, 1]} : vector<16x48xbf16> to vector<16x16xbf16>
    %63 = vector.extract_strided_slice %60 {offsets = [0, 32], sizes = [16, 16], strides = [1, 1]} : vector<16x48xbf16> to vector<16x16xbf16>
    %64 = tpu.concatenate %61, %62, %63 in 0 : vector<16x16xbf16>, vector<16x16xbf16>, vector<16x16xbf16> -> vector<48x16xbf16>
    %cst_25 = arith.constant dense<0.000000e+00> : vector<48x16xf32>
    %65 = tpu.matmul %49, %2, %cst_25 {dimension_numbers = #tpu.dot_dimension_numbers<[1], [0], [0], [1], [0, 0, 1, 1], [], []>} : vector<48x16xbf16>, vector<16x16xbf16>, vector<48x16xf32> -> vector<48x16xf32>
    %cst_26 = arith.constant dense<0.000000e+00> : vector<48x16xf32>
    %66 = tpu.matmul %54, %3, %cst_26 {dimension_numbers = #tpu.dot_dimension_numbers<[1], [0], [0], [1], [0, 0, 1, 1], [], []>} : vector<48x16xbf16>, vector<16x16xbf16>, vector<48x16xf32> -> vector<48x16xf32>
    %67 = arith.addf %65, %66 : vector<48x16xf32>
    %cst_27 = arith.constant dense<0.000000e+00> : vector<48x16xf32>
    %68 = tpu.matmul %59, %2, %cst_27 {dimension_numbers = #tpu.dot_dimension_numbers<[1], [0], [0], [1], [0, 0, 1, 1], [], []>} : vector<48x16xbf16>, vector<16x16xbf16>, vector<48x16xf32> -> vector<48x16xf32>
    %cst_28 = arith.constant dense<0.000000e+00> : vector<48x16xf32>
    %69 = tpu.matmul %64, %3, %cst_28 {dimension_numbers = #tpu.dot_dimension_numbers<[1], [0], [0], [1], [0, 0, 1, 1], [], []>} : vector<48x16xbf16>, vector<16x16xbf16>, vector<48x16xf32> -> vector<48x16xf32>
    %70 = arith.addf %68, %69 : vector<48x16xf32>
    %cst_29 = arith.constant dense<0.000000e+00> : vector<48x16xf32>
    %71 = tpu.matmul %64, %2, %cst_29 {dimension_numbers = #tpu.dot_dimension_numbers<[1], [0], [0], [1], [0, 0, 1, 1], [], []>} : vector<48x16xbf16>, vector<16x16xbf16>, vector<48x16xf32> -> vector<48x16xf32>
    %cst_30 = arith.constant dense<0.000000e+00> : vector<48x16xf32>
    %72 = tpu.matmul %59, %3, %cst_30 {dimension_numbers = #tpu.dot_dimension_numbers<[1], [0], [0], [1], [0, 0, 1, 1], [], []>} : vector<48x16xbf16>, vector<16x16xbf16>, vector<48x16xf32> -> vector<48x16xf32>
    %73 = arith.subf %71, %72 : vector<48x16xf32>
    %74 = arith.mulf %70, %70 : vector<48x16xf32>
    %75 = arith.mulf %73, %73 : vector<48x16xf32>
    %76 = arith.addf %74, %75 : vector<48x16xf32>
    %77 = math.sqrt %76 : vector<48x16xf32>
    %78 = math.atan2 %77, %67 : vector<48x16xf32>
    %cst_31 = arith.constant 0.000000e+00 : f32
    %79 = vector.broadcast %cst_31 : f32 to vector<48x16xf32>
    %80 = arith.subf %79, %70 : vector<48x16xf32>
    %81 = math.atan2 %80, %73 : vector<48x16xf32>
    %82 = vector.extract_strided_slice %78 {offsets = [0, 0], sizes = [16, 16], strides = [1, 1]} : vector<48x16xf32> to vector<16x16xf32>
    %83 = vector.extract_strided_slice %78 {offsets = [16, 0], sizes = [16, 16], strides = [1, 1]} : vector<48x16xf32> to vector<16x16xf32>
    %84 = vector.extract_strided_slice %78 {offsets = [32, 0], sizes = [16, 16], strides = [1, 1]} : vector<48x16xf32> to vector<16x16xf32>
    %85 = tpu.concatenate %82, %83, %84 in 1 : vector<16x16xf32>, vector<16x16xf32>, vector<16x16xf32> -> vector<16x48xf32>
    %c0_32 = arith.constant 0 : index
    %c0_33 = arith.constant 0 : index
    %c0_34 = arith.constant 0 : index
    %86 = vector.load %arg9[%c0_32, %c0_33, %c0_34] : memref<1x16x96xf32, #tpu.memory_space<vmem>>, vector<1x16x48xf32>
    %87 = vector.shape_cast %86 : vector<1x16x48xf32> to vector<16x48xf32>
    %88 = vector.shape_cast %85 : vector<16x48xf32> to vector<1x16x48xf32>
    tpu.vector_store %arg9[%c0_32, %c0_33, %c0_34], %88 {strides = array<i32>} : memref<1x16x96xf32, #tpu.memory_space<vmem>>, vector<1x16x48xf32>,
    %89 = vector.extract_strided_slice %81 {offsets = [0, 0], sizes = [16, 16], strides = [1, 1]} : vector<48x16xf32> to vector<16x16xf32>
    %90 = vector.extract_strided_slice %81 {offsets = [16, 0], sizes = [16, 16], strides = [1, 1]} : vector<48x16xf32> to vector<16x16xf32>
    %91 = vector.extract_strided_slice %81 {offsets = [32, 0], sizes = [16, 16], strides = [1, 1]} : vector<48x16xf32> to vector<16x16xf32>
    %92 = tpu.concatenate %89, %90, %91 in 1 : vector<16x16xf32>, vector<16x16xf32>, vector<16x16xf32> -> vector<16x48xf32>
    %c0_35 = arith.constant 0 : index
    %c0_36 = arith.constant 0 : index
    %c48 = arith.constant 48 : index
    %93 = vector.load %arg9[%c0_35, %c0_36, %c48] : memref<1x16x96xf32, #tpu.memory_space<vmem>>, vector<1x16x48xf32>
    %94 = vector.shape_cast %93 : vector<1x16x48xf32> to vector<16x48xf32>
    %95 = vector.shape_cast %92 : vector<16x48xf32> to vector<1x16x48xf32>
    tpu.vector_store %arg9[%c0_35, %c0_36, %c48], %95 {strides = array<i32>} : memref<1x16x96xf32, #tpu.memory_space<vmem>>, vector<1x16x48xf32>,
    return
  }
  func.func @transform_0(%arg0: i32) -> (i32, i32, i32) {
    %c0_i32 = arith.constant 0 : i32
    %c0_i32_0 = arith.constant 0 : i32
    %c0_i32_1 = arith.constant 0 : i32
    return %arg0, %c0_i32, %c0_i32_0 : i32, i32, i32
  }
  func.func @transform_1(%arg0: i32) -> (i32, i32) {
    %c0_i32 = arith.constant 0 : i32
    %c0_i32_0 = arith.constant 0 : i32
    %c0_i32_1 = arith.constant 0 : i32
    return %c0_i32, %c0_i32_0 : i32, i32
  }
  func.func @transform_2(%arg0: i32) -> (i32, i32) {
    %c0_i32 = arith.constant 0 : i32
    %c0_i32_0 = arith.constant 0 : i32
    %c0_i32_1 = arith.constant 0 : i32
    return %c0_i32, %c0_i32_0 : i32, i32
  }
  func.func @transform_3(%arg0: i32) -> (i32, i32) {
    %c0_i32 = arith.constant 0 : i32
    %c0_i32_0 = arith.constant 0 : i32
    %c0_i32_1 = arith.constant 0 : i32
    return %c0_i32, %c0_i32_0 : i32, i32
  }
  func.func @transform_4(%arg0: i32) -> (i32, i32) {
    %c0_i32 = arith.constant 0 : i32
    %c0_i32_0 = arith.constant 0 : i32
    %c0_i32_1 = arith.constant 0 : i32
    return %c0_i32, %c0_i32_0 : i32, i32
  }
  func.func @transform_5(%arg0: i32) -> (i32, i32) {
    %c0_i32 = arith.constant 0 : i32
    %c0_i32_0 = arith.constant 0 : i32
    %c0_i32_1 = arith.constant 0 : i32
    return %c0_i32, %c0_i32_0 : i32, i32
  }
  func.func @transform_6(%arg0: i32) -> (i32, i32) {
    %c0_i32 = arith.constant 0 : i32
    %c0_i32_0 = arith.constant 0 : i32
    %c0_i32_1 = arith.constant 0 : i32
    return %c0_i32, %c0_i32_0 : i32, i32
  }
  func.func @transform_7(%arg0: i32) -> (i32, i32) {
    %c0_i32 = arith.constant 0 : i32
    %c0_i32_0 = arith.constant 0 : i32
    %c0_i32_1 = arith.constant 0 : i32
    return %c0_i32, %c0_i32_0 : i32, i32
  }
  func.func @transform_8(%arg0: i32) -> (i32, i32, i32) {
    %c0_i32 = arith.constant 0 : i32
    %c0_i32_0 = arith.constant 0 : i32
    %c0_i32_1 = arith.constant 0 : i32
    return %arg0, %c0_i32, %c0_i32_0 : i32, i32, i32
  }
}

</mosaic_0001>

<llo_original>
// kernel: tpu_custom_call.1
$region0: #{tpu_custom_call.1}
  #allocation0 [shape = 'u32[]', space=smem, size = 0x4, offset = 0x4, fixed_abs, tag = 'smem constant byte address 0x4 - core index']
  #allocation1 [shape = 'u32[144,128]{1,0:T(1,128)}', space=vmem, size = 0x12000, scoped, tag = 'internal scratch']
  %s0 = inlined_call_operand.hbm [shape: bf16[2,16,16], index: 0, kind: input, shape index: {}]
  %s1 = inlined_call_operand.hbm [shape: bf16[16,16], index: 1, kind: input, shape index: {}]
  %s2 = inlined_call_operand.hbm [shape: bf16[16,16], index: 2, kind: input, shape index: {}]
  %s3 = inlined_call_operand.hbm [shape: bf16[16,16], index: 3, kind: input, shape index: {}]
  %s4 = inlined_call_operand.hbm [shape: bf16[16,16], index: 4, kind: input, shape index: {}]
  %s5 = inlined_call_operand.vmem [shape: f32[16,48], index: 5, kind: input, shape index: {}]
  %s6 = inlined_call_operand.hbm [shape: f32[16,48], index: 6, kind: input, shape index: {}]
  %s7 = inlined_call_operand.hbm [shape: f32[16,48], index: 7, kind: input, shape index: {}]
  %s8 = inlined_call_operand.hbm [shape: f32[2,16,96], index: 8, kind: output, shape index: {}]
  %s9 = sld [smem:[#allocation0]]
  $region93: #{tpu_custom_call.1} parent=0
    _
  %s11 = ssub.s32 1, %s9
  %s12 = scalar_select 0, %s11, %s9
  $region1: #{tpu_custom_call.1} parent=0
    #allocation2 [shape = 'u8[8192]{0}', space=vmem, size = 0x2000, scoped, tag = 'input window, operand 0']
    #allocation3 [shape = 's32[2]{0}', space=sflag, size = 0x8, scoped, tag = 'scoped memory for tpu_custom_call.1']
    #allocation4 [shape = 's32[2]{0}', space=sflag, size = 0x8, scoped, tag = 'scoped memory for tpu_custom_call.1']
    #allocation5 [shape = 'u8[4096]{0}', space=vmem, size = 0x1000, scoped, tag = 'input window, operand 1, single buffered']
    #allocation6 [shape = 's32[1]{0}', space=sflag, size = 0x4, scoped, tag = 'scoped memory for tpu_custom_call.1']
    #allocation7 [shape = 'u8[4096]{0}', space=vmem, size = 0x1000, scoped, tag = 'input window, operand 2, single buffered']
    #allocation8 [shape = 'u8[4096]{0}', space=vmem, size = 0x1000, scoped, tag = 'input window, operand 3, single buffered']
    #allocation9 [shape = 's32[1]{0}', space=sflag, size = 0x4, scoped, tag = 'scoped memory for tpu_custom_call.1']
    #allocation10 [shape = 'u8[4096]{0}', space=vmem, size = 0x1000, scoped, tag = 'input window, operand 4, single buffered']
    #allocation11 [shape = 'u8[8192]{0}', space=vmem, size = 0x2000, scoped, tag = 'input window, operand 6, single buffered']
    #allocation12 [shape = 's32[1]{0}', space=sflag, size = 0x4, scoped, tag = 'scoped memory for tpu_custom_call.1']
    #allocation13 [shape = 'u8[8192]{0}', space=vmem, size = 0x2000, scoped, tag = 'input window, operand 7, single buffered']
    #allocation14 [shape = 'u8[16384]{0}', space=vmem, size = 0x4000, scoped, tag = 'output window, operand 0']
    %13 = vsyncpa [#allocation3], 0
    %s14 = scalar_lea.sflag [#allocation3], 1
    %15 = vsyncpa %s14, 0
    %16 = vsyncpa [#allocation6], 0
    %17 = vsyncpa [#allocation9], 0
    %18 = vsyncpa [#allocation12], 0
    %19 = vsyncpa [#allocation4], 0
    %s20 = scalar_lea.sflag [#allocation4], 1
    %21 = vsyncpa %s20, 0
    loop: start=0, step=1, limit=4
    $region2: #{tpu_custom_call.1} parent=1 // loop_pre_header
      _
    $region3: #{tpu_custom_call.1} parent=1 // loop_header
      %s23 = sphi 0, %s27
      %p24 = scmp.ge.s32.totalorder %s23, 4
      %s33 = sphi 0, %s35
      %s36 = sphi 0, %s33
      %s37 = sphi 0, %s36
      %s53 = sphi 0, %s37
      %s57 = sphi 0, %s57
      %s59 = sphi 0, %s57
      %s60 = sphi 0, %s59
      %s74 = sphi 0, %s60
      %s78 = sphi 0, %s78
      %s80 = sphi 0, %s78
      %s81 = sphi 0, %s80
      %s95 = sphi 0, %s81
      %s99 = sphi 0, %s99
      %s101 = sphi 0, %s99
      %s102 = sphi 0, %s101
      %s116 = sphi 0, %s102
      %s120 = sphi 0, %s120
      %s122 = sphi 0, %s120
      %s123 = sphi 0, %s122
      %s137 = sphi 0, %s123
      %s141 = sphi 0, %s141
      %s143 = sphi 0, %s141
      %s144 = sphi 0, %s143
      %s158 = sphi 0, %s144
      %s162 = sphi 0, %s162
      %s164 = sphi 0, %s162
      %s165 = sphi 0, %s164
      %s179 = sphi 0, %s165
      %s183 = sphi 0, %s183
      %s185 = sphi 0, %s183
      %s186 = sphi 0, %s185
      %s200 = sphi 0, %s186
      %s206 = sphi 0, %s208
      %s209 = sphi 0, %s206
      %s210 = sphi 0, %s209
      %s226 = sphi 0, %s210
    $region4: #{tpu_custom_call.1} parent=1 // loop_header_branch
      %26 = sbr.rel (%p24) target = $region8
    $region5: #{tpu_custom_call.1} parent=1 // loop_body
      %s28 = ssub.s32 %s23, 1
      %s29 = ssub.s32 %s23, 2
      %s30 = sadd.s32 %s23, 1
      %s31 = ssub.s32 %s23, %s30
      %p32 = scmp.eq.s32.totalorder %s31, 0
      %s34 = sadd.s32 %s33, 1
      %s35 = scalar_select %p32, %s33, %s34
      %p38 = pneg %p32
      %p39 = scmp.eq.s32.totalorder %s23, 1
      %p40 = por %p38, %p39
      %p41 = scmp.ne.s32.totalorder %s33, %s36
      %p42 = scmp.eq.s32.totalorder %s23, 0
      %p43 = por %p41, %p42
      %p44 = scmp.ne.s32.totalorder %s33, %s36
      %p45 = scmp.eq.s32.totalorder %s28, 1
      %p46 = por %p44, %p45
      %p47 = scmp.ne.s32.totalorder %s36, %s37
      %p48 = scmp.eq.s32.totalorder %s28, 0
      %p49 = por %p47, %p48
      %p50 = scmp.ne.s32.totalorder %s36, %s37
      %p51 = scmp.eq.s32.totalorder %s29, 1
      %p52 = por %p50, %p51
      %p54 = scmp.ne.s32.totalorder %s37, %s53
      %p55 = scmp.eq.s32.totalorder %s29, 0
      %p56 = por %p54, %p55
      %s58 = sadd.s32 %s57, 1
      %p61 = scmp.eq.s32.totalorder %s23, 1
      %p62 = scmp.ne.s32.totalorder %s57, %s59
      %p63 = scmp.eq.s32.totalorder %s23, 0
      %p64 = por %p62, %p63
      %p65 = scmp.ne.s32.totalorder %s57, %s59
      %p66 = scmp.eq.s32.totalorder %s28, 1
      %p67 = por %p65, %p66
      %p68 = scmp.ne.s32.totalorder %s59, %s60
      %p69 = scmp.eq.s32.totalorder %s28, 0
      %p70 = por %p68, %p69
      %p71 = scmp.ne.s32.totalorder %s59, %s60
      %p72 = scmp.eq.s32.totalorder %s29, 1
      %p73 = por %p71, %p72
      %p75 = scmp.ne.s32.totalorder %s60, %s74
      %p76 = scmp.eq.s32.totalorder %s29, 0
      %p77 = por %p75, %p76
      %s79 = sadd.s32 %s78, 1
      %p82 = scmp.eq.s32.totalorder %s23, 1
      %p83 = scmp.ne.s32.totalorder %s78, %s80
      %p84 = scmp.eq.s32.totalorder %s23, 0
      %p85 = por %p83, %p84
      %p86 = scmp.ne.s32.totalorder %s78, %s80
      %p87 = scmp.eq.s32.totalorder %s28, 1
      %p88 = por %p86, %p87
      %p89 = scmp.ne.s32.totalorder %s80, %s81
      %p90 = scmp.eq.s32.totalorder %s28, 0
      %p91 = por %p89, %p90
      %p92 = scmp.ne.s32.totalorder %s80, %s81
      %p93 = scmp.eq.s32.totalorder %s29, 1
      %p94 = por %p92, %p93
      %p96 = scmp.ne.s32.totalorder %s81, %s95
      %p97 = scmp.eq.s32.totalorder %s29, 0
      %p98 = por %p96, %p97
      %s100 = sadd.s32 %s99, 1
      %p103 = scmp.eq.s32.totalorder %s23, 1
      %p104 = scmp.ne.s32.totalorder %s99, %s101
      %p105 = scmp.eq.s32.totalorder %s23, 0
      %p106 = por %p104, %p105
      %p107 = scmp.ne.s32.totalorder %s99, %s101
      %p108 = scmp.eq.s32.totalorder %s28, 1
      %p109 = por %p107, %p108
      %p110 = scmp.ne.s32.totalorder %s101, %s102
      %p111 = scmp.eq.s32.totalorder %s28, 0
      %p112 = por %p110, %p111
      %p113 = scmp.ne.s32.totalorder %s101, %s102
      %p114 = scmp.eq.s32.totalorder %s29, 1
      %p115 = por %p113, %p114
      %p117 = scmp.ne.s32.totalorder %s102, %s116
      %p118 = scmp.eq.s32.totalorder %s29, 0
      %p119 = por %p117, %p118
      %s121 = sadd.s32 %s120, 1
      %p124 = scmp.eq.s32.totalorder %s23, 1
      %p125 = scmp.ne.s32.totalorder %s120, %s122
      %p126 = scmp.eq.s32.totalorder %s23, 0
      %p127 = por %p125, %p126
      %p128 = scmp.ne.s32.totalorder %s120, %s122
      %p129 = scmp.eq.s32.totalorder %s28, 1
      %p130 = por %p128, %p129
      %p131 = scmp.ne.s32.totalorder %s122, %s123
      %p132 = scmp.eq.s32.totalorder %s28, 0
      %p133 = por %p131, %p132
      %p134 = scmp.ne.s32.totalorder %s122, %s123
      %p135 = scmp.eq.s32.totalorder %s29, 1
      %p136 = por %p134, %p135
      %p138 = scmp.ne.s32.totalorder %s123, %s137
      %p139 = scmp.eq.s32.totalorder %s29, 0
      %p140 = por %p138, %p139
      %s142 = sadd.s32 %s141, 1
      %p145 = scmp.eq.s32.totalorder %s23, 1
      %p146 = scmp.ne.s32.totalorder %s141, %s143
      %p147 = scmp.eq.s32.totalorder %s23, 0
      %p148 = por %p146, %p147
      %p149 = scmp.ne.s32.totalorder %s141, %s143
      %p150 = scmp.eq.s32.totalorder %s28, 1
      %p151 = por %p149, %p150
      %p152 = scmp.ne.s32.totalorder %s143, %s144
      %p153 = scmp.eq.s32.totalorder %s28, 0
      %p154 = por %p152, %p153
      %p155 = scmp.ne.s32.totalorder %s143, %s144
      %p156 = scmp.eq.s32.totalorder %s29, 1
      %p157 = por %p155, %p156
      %p159 = scmp.ne.s32.totalorder %s144, %s158
      %p160 = scmp.eq.s32.totalorder %s29, 0
      %p161 = por %p159, %p160
      %s163 = sadd.s32 %s162, 1
      %p166 = scmp.eq.s32.totalorder %s23, 1
      %p167 = scmp.ne.s32.totalorder %s162, %s164
      %p168 = scmp.eq.s32.totalorder %s23, 0
      %p169 = por %p167, %p168
      %p170 = scmp.ne.s32.totalorder %s162, %s164
      %p171 = scmp.eq.s32.totalorder %s28, 1
      %p172 = por %p170, %p171
      %p173 = scmp.ne.s32.totalorder %s164, %s165
      %p174 = scmp.eq.s32.totalorder %s28, 0
      %p175 = por %p173, %p174
      %p176 = scmp.ne.s32.totalorder %s164, %s165
      %p177 = scmp.eq.s32.totalorder %s29, 1
      %p178 = por %p176, %p177
      %p180 = scmp.ne.s32.totalorder %s165, %s179
      %p181 = scmp.eq.s32.totalorder %s29, 0
      %p182 = por %p180, %p181
      %s184 = sadd.s32 %s183, 1
      %p187 = scmp.eq.s32.totalorder %s23, 1
      %p188 = scmp.ne.s32.totalorder %s183, %s185
      %p189 = scmp.eq.s32.totalorder %s23, 0
      %p190 = por %p188, %p189
      %p191 = scmp.ne.s32.totalorder %s183, %s185
      %p192 = scmp.eq.s32.totalorder %s28, 1
      %p193 = por %p191, %p192
      %p194 = scmp.ne.s32.totalorder %s185, %s186
      %p195 = scmp.eq.s32.totalorder %s28, 0
      %p196 = por %p194, %p195
      %p197 = scmp.ne.s32.totalorder %s185, %s186
      %p198 = scmp.eq.s32.totalorder %s29, 1
      %p199 = por %p197, %p198
      %p201 = scmp.ne.s32.totalorder %s186, %s200
      %p202 = scmp.eq.s32.totalorder %s29, 0
      %p203 = por %p201, %p202
      %s204 = ssub.s32 %s23, %s30
      %p205 = scmp.eq.s32.totalorder %s204, 0
      %s207 = sadd.s32 %s206, 1
      %s208 = scalar_select %p205, %s206, %s207
      %p211 = pneg %p205
      %p212 = scmp.eq.s32.totalorder %s23, 1
      %p213 = por %p211, %p212
      %p214 = scmp.ne.s32.totalorder %s206, %s209
      %p215 = scmp.eq.s32.totalorder %s23, 0
      %p216 = por %p214, %p215
      %p217 = scmp.ne.s32.totalorder %s206, %s209
      %p218 = scmp.eq.s32.totalorder %s28, 1
      %p219 = por %p217, %p218
      %p220 = scmp.ne.s32.totalorder %s209, %s210
      %p221 = scmp.eq.s32.totalorder %s28, 0
      %p222 = por %p220, %p221
      %p223 = scmp.ne.s32.totalorder %s209, %s210
      %p224 = scmp.eq.s32.totalorder %s29, 1
      %p225 = por %p223, %p224
      %p227 = scmp.ne.s32.totalorder %s210, %s226
      %p228 = scmp.eq.s32.totalorder %s29, 0
      %p229 = por %p227, %p228
      %p230 = scmp.le.s32.totalorder 1, %s23
      %p231 = scmp.lt.s32.totalorder %s23, 3
      %p232 = pnand %p230, %p231
      %p233 = pneg %p232
      // Predicated region
      $region9: #{tpu_custom_call.1} parent=5 // pred_check
        _
      $region10: #{tpu_custom_call.1} parent=5 // pred_check_branch
        %235 = sbr.rel (%p232) target = $region12
      $region11: #{tpu_custom_call.1} parent=5 // pred_region
        %s236 = ssub.s32 %s23, 1
        // Predicated region
        $region13: #{tpu_custom_call.1} parent=11 // pred_check
          %p237 = pneg %p70
        $region14: #{tpu_custom_call.1} parent=11 // pred_check_branch
          %239 = sbr.rel (%p237) target = $region16
        $region15: #{tpu_custom_call.1} parent=11 // pred_region
          %s241 = ssub.s32 128, 128
          %242 = vsyncadd [#allocation6], %s241
          %s243 = sshll.u32 [#allocation5], 4
          %s244 = int_to_ptr.vmem [resolvable:$true] %s243
          %249 = dma.hbm_to_vmem [thread:$0]  %s1, 128, %s244, [#allocation6], 64, 64, 4
        $region16: #{tpu_custom_call.1} parent=11 // pred_fallthru
          _
        // Predicated region
        $region17: #{tpu_custom_call.1} parent=11 // pred_check
          %p250 = pneg %p91
        $region18: #{tpu_custom_call.1} parent=11 // pred_check_branch
          %252 = sbr.rel (%p250) target = $region20
        $region19: #{tpu_custom_call.1} parent=11 // pred_region
          %s254 = ssub.s32 128, 128
          %255 = vsyncadd [#allocation6], %s254
          %s256 = sshll.u32 [#allocation7], 4
          %s257 = int_to_ptr.vmem [resolvable:$true] %s256
          %262 = dma.hbm_to_vmem [thread:$0]  %s2, 128, %s257, [#allocation6], 64, 64, 4
        $region20: #{tpu_custom_call.1} parent=11 // pred_fallthru
          _
        // Predicated region
        $region21: #{tpu_custom_call.1} parent=11 // pred_check
          %p263 = pneg %p112
        $region22: #{tpu_custom_call.1} parent=11 // pred_check_branch
          %265 = sbr.rel (%p263) target = $region24
        $region23: #{tpu_custom_call.1} parent=11 // pred_region
          %s267 = ssub.s32 128, 128
          %268 = vsyncadd [#allocation9], %s267
          %s269 = sshll.u32 [#allocation8], 4
          %s270 = int_to_ptr.vmem [resolvable:$true] %s269
          %275 = dma.hbm_to_vmem [thread:$0]  %s3, 128, %s270, [#allocation9], 64, 64, 4
        $region24: #{tpu_custom_call.1} parent=11 // pred_fallthru
          _
        // Predicated region
        $region25: #{tpu_custom_call.1} parent=11 // pred_check
          %p276 = pneg %p133
        $region26: #{tpu_custom_call.1} parent=11 // pred_check_branch
          %278 = sbr.rel (%p276) target = $region28
        $region27: #{tpu_custom_call.1} parent=11 // pred_region
          %s280 = ssub.s32 128, 128
          %281 = vsyncadd [#allocation9], %s280
          %s282 = sshll.u32 [#allocation10], 4
          %s283 = int_to_ptr.vmem [resolvable:$true] %s282
          %288 = dma.hbm_to_vmem [thread:$0]  %s4, 128, %s283, [#allocation9], 64, 64, 4
        $region28: #{tpu_custom_call.1} parent=11 // pred_fallthru
          _
        // Predicated region
        $region29: #{tpu_custom_call.1} parent=11 // pred_check
          %p289 = pneg %p154
        $region30: #{tpu_custom_call.1} parent=11 // pred_check_branch
          %291 = sbr.rel (%p289) target = $region32
        $region31: #{tpu_custom_call.1} parent=11 // pred_region
          _
        $region32: #{tpu_custom_call.1} parent=11 // pred_fallthru
          _
        // Predicated region
        $region33: #{tpu_custom_call.1} parent=11 // pred_check
          %p292 = pneg %p175
        $region34: #{tpu_custom_call.1} parent=11 // pred_check_branch
          %294 = sbr.rel (%p292) target = $region36
        $region35: #{tpu_custom_call.1} parent=11 // pred_region
          %s296 = ssub.s32 256, 256
          %297 = vsyncadd [#allocation12], %s296
          %s298 = sshll.u32 [#allocation11], 4
          %s299 = int_to_ptr.vmem [resolvable:$true] %s298
          %304 = dma.hbm_to_vmem [thread:$0]  %s6, 256, %s299, [#allocation12], 128, 128, 8
        $region36: #{tpu_custom_call.1} parent=11 // pred_fallthru
          _
        // Predicated region
        $region37: #{tpu_custom_call.1} parent=11 // pred_check
          %p305 = pneg %p196
        $region38: #{tpu_custom_call.1} parent=11 // pred_check_branch
          %307 = sbr.rel (%p305) target = $region40
        $region39: #{tpu_custom_call.1} parent=11 // pred_region
          %s309 = ssub.s32 256, 256
          %310 = vsyncadd [#allocation12], %s309
          %s311 = sshll.u32 [#allocation13], 4
          %s312 = int_to_ptr.vmem [resolvable:$true] %s311
          %317 = dma.hbm_to_vmem [thread:$0]  %s7, 256, %s312, [#allocation12], 128, 128, 8
        $region40: #{tpu_custom_call.1} parent=11 // pred_fallthru
          _
      $region12: #{tpu_custom_call.1} parent=5 // pred_fallthru
        _
      %p318 = scmp.lt.s32.totalorder %s23, 2
      // Predicated region
      $region41: #{tpu_custom_call.1} parent=5 // pred_check
        %p319 = pneg %p318
      $region42: #{tpu_custom_call.1} parent=5 // pred_check_branch
        %321 = sbr.rel (%p319) target = $region44
      $region43: #{tpu_custom_call.1} parent=5 // pred_region
        // Predicated region
        $region45: #{tpu_custom_call.1} parent=43 // pred_check
          %p322 = pneg %p43
        $region46: #{tpu_custom_call.1} parent=43 // pred_check_branch
          %324 = sbr.rel (%p322) target = $region48
        $region47: #{tpu_custom_call.1} parent=43 // pred_region
          %s325 = sand.u32 %s33, 1
          %s326 = scalar_lea.sflag [#allocation3], %s325
          %s327 = sand.u32 %s33, 1
          %s328 = smul.addr %s327, 8
          %s329 = scalar_lea.vmem [#allocation2], %s328
          %s331 = ssub.s32 128, 128
          %332 = vsyncadd %s326, %s331
          %s333 = smul.addr %s23, 2
          %s334 = smul.addr %s333, 64
          %s335 = scalar_lea.hbm %s0, %s334
          %s336 = sshll.u32 %s329, 4
          %s337 = int_to_ptr.vmem [resolvable:$true] %s336
          %342 = dma.hbm_to_vmem [thread:$0]  %s335, 128, %s337, %s326, 64, 64, 4
        $region48: #{tpu_custom_call.1} parent=43 // pred_fallthru
          _
      $region44: #{tpu_custom_call.1} parent=5 // pred_fallthru
        _
      %p343 = scmp.le.s32.totalorder 1, %s23
      %p344 = scmp.lt.s32.totalorder %s23, 3
      %p345 = pnand %p343, %p344
      %p346 = pneg %p345
      // Predicated region
      $region49: #{tpu_custom_call.1} parent=5 // pred_check
        _
      $region50: #{tpu_custom_call.1} parent=5 // pred_check_branch
        %348 = sbr.rel (%p345) target = $region52
      $region51: #{tpu_custom_call.1} parent=5 // pred_region
        %s349 = ssub.s32 %s23, 1
        %s350 = sand.u32 %s36, 1
        %s351 = scalar_lea.sflag [#allocation3], %s350
        %s352 = sand.u32 %s36, 1
        %s353 = smul.addr %s352, 8
        %s354 = scalar_lea.vmem [#allocation2], %s353
        // Predicated region
        $region53: #{tpu_custom_call.1} parent=51 // pred_check
          %p355 = pneg %p49
        $region54: #{tpu_custom_call.1} parent=51 // pred_check_branch
          %357 = sbr.rel (%p355) target = $region56
        $region55: #{tpu_custom_call.1} parent=51 // pred_region
          %358 = dma.done %s351, 128
        $region56: #{tpu_custom_call.1} parent=51 // pred_fallthru
          _
        // Predicated region
        $region57: #{tpu_custom_call.1} parent=51 // pred_check
          %p359 = pneg %p70
        $region58: #{tpu_custom_call.1} parent=51 // pred_check_branch
          %361 = sbr.rel (%p359) target = $region60
        $region59: #{tpu_custom_call.1} parent=51 // pred_region
          %362 = dma.done [#allocation6], 128
        $region60: #{tpu_custom_call.1} parent=51 // pred_fallthru
          _
        // Predicated region
        $region61: #{tpu_custom_call.1} parent=51 // pred_check
          %p363 = pneg %p91
        $region62: #{tpu_custom_call.1} parent=51 // pred_check_branch
          %365 = sbr.rel (%p363) target = $region64
        $region63: #{tpu_custom_call.1} parent=51 // pred_region
          %366 = dma.done [#allocation6], 128
        $region64: #{tpu_custom_call.1} parent=51 // pred_fallthru
          _
        // Predicated region
        $region65: #{tpu_custom_call.1} parent=51 // pred_check
          %p367 = pneg %p112
        $region66: #{tpu_custom_call.1} parent=51 // pred_check_branch
          %369 = sbr.rel (%p367) target = $region68
        $region67: #{tpu_custom_call.1} parent=51 // pred_region
          %370 = dma.done [#allocation9], 128
        $region68: #{tpu_custom_call.1} parent=51 // pred_fallthru
          _
        // Predicated region
        $region69: #{tpu_custom_call.1} parent=51 // pred_check
          %p371 = pneg %p133
        $region70: #{tpu_custom_call.1} parent=51 // pred_check_branch
          %373 = sbr.rel (%p371) target = $region72
        $region71: #{tpu_custom_call.1} parent=51 // pred_region
          %374 = dma.done [#allocation9], 128
        $region72: #{tpu_custom_call.1} parent=51 // pred_fallthru
          _
        // Predicated region
        $region73: #{tpu_custom_call.1} parent=51 // pred_check
          %p375 = pneg %p175
        $region74: #{tpu_custom_call.1} parent=51 // pred_check_branch
          %377 = sbr.rel (%p375) target = $region76
        $region75: #{tpu_custom_call.1} parent=51 // pred_region
          %378 = dma.done [#allocation12], 256
        $region76: #{tpu_custom_call.1} parent=51 // pred_fallthru
          _
        // Predicated region
        $region77: #{tpu_custom_call.1} parent=51 // pred_check
          %p379 = pneg %p196
        $region78: #{tpu_custom_call.1} parent=51 // pred_check_branch
          %381 = sbr.rel (%p379) target = $region80
        $region79: #{tpu_custom_call.1} parent=51 // pred_region
          %382 = dma.done [#allocation12], 256
        $region80: #{tpu_custom_call.1} parent=51 // pred_fallthru
          _
        %s383 = sand.u32 %s36, 1
        %s384 = scalar_lea.sflag [#allocation3], %s383
        %s385 = sand.u32 %s36, 1
        %s386 = smul.addr %s385, 8
        %s387 = scalar_lea.vmem [#allocation2], %s386
        %p388 = pneg %p49
        %p389 = pneg %p46
        %p390 = pneg %p70
        %p391 = pneg %p67
        %p392 = pneg %p91
        %p393 = pneg %p88
        %p394 = pneg %p112
        %p395 = pneg %p109
        %p396 = pneg %p133
        %p397 = pneg %p130
        %p398 = pneg %p154
        %p399 = pneg %p151
        %p400 = pneg %p175
        %p401 = pneg %p172
        %p402 = pneg %p196
        %p403 = pneg %p193
        %p404 = pneg %p222
        %p405 = pneg %p219
        %s406 = sand.u32 %s209, 1
        %s407 = scalar_lea.sflag [#allocation4], %s406
        %s408 = sand.u32 %s209, 1
        %s409 = smul.addr %s408, 16
        %s410 = scalar_lea.vmem [#allocation14], %s409
        %v412 = vld [vmem:[#allocation5] sm:$0xf]
        %v413 = vld [vmem:[#allocation5 + $0x4] sm:$0xf]
        %v414 = vld [vmem:[#allocation7] sm:$0xf]
        %v415 = vld [vmem:[#allocation7 + $0x4] sm:$0xf]
        %v416 = vld [vmem:[#allocation8] sm:$0xf]
        %v417 = vld [vmem:[#allocation8 + $0x4] sm:$0xf]
        %v418 = vld [vmem:[#allocation10] sm:$0xf]
        %v419 = vld [vmem:[#allocation10 + $0x4] sm:$0xf]
        %v420 = vld [vmem:[%s5] sm:$0xff]
        %v421 = vld [vmem:[%s5 + $0x8] sm:$0xff]
        %v422 = vld [vmem:[#allocation11] sm:$0xff]
        %v423 = vld [vmem:[#allocation11 + $0x8] sm:$0xff]
        %v424 = vld [vmem:[#allocation13] sm:$0xff]
        %v425 = vld [vmem:[#allocation13 + $0x8] sm:$0xff]
        %v426 = vld [vmem:[%s354] sm:$0xf]
        %v427 = vld [vmem:[%s354 + $0x4] sm:$0xf]
        %v430 = vunpack.c.l.b16 %v412
        %v431 = vunpack.c.l.b16 %v413
        %v432 = vpack.c.b16 %v431, %v430
        %v435 = vunpack.c.l.b16 %v426
        %v436 = vunpack.c.l.b16 %v427
        %v437 = vpack.c.b16 %v436, %v435
        %vm439 = vcmask 130048
        %v441 = vsel %vm439, %v432, 0
        %443 = vmatprep.subr.bf16.mxu0 0
        %444 = vmatpush1.bf16.msra.mxu0 %v437
        %445 = vmatprep.subr.bf16.mxu0 0
        %446 = vmatpush1.bf16.msra.mxu0 0
        %447 = vmatprep.subr.bf16.mxu0 0
        %448 = vmatpush1.bf16.msra.mxu0 0
        %449 = vmatprep.subr.bf16.mxu0 0
        %450 = vmatpush1.bf16.msra.mxu0 0
        %451 = vmatprep.subr.bf16.mxu0 0
        %452 = vmatpush1.bf16.msra.mxu0 0
        %453 = vmatprep.subr.bf16.mxu0 0
        %454 = vmatpush1.bf16.msra.mxu0 0
        %455 = vmatprep.subr.bf16.mxu0 0
        %456 = vmatpush1.bf16.msra.mxu0 0
        %457 = vmatprep.subr.bf16.mxu0 0
        %458 = vmatpush1.bf16.msra.mxu0 0
        %459 = vmatprep.subr.bf16.mxu0 0
        %460 = vmatpush1.bf16.msra.mxu0 0
        %461 = vmatprep.subr.bf16.mxu0 0
        %462 = vmatpush1.bf16.msra.mxu0 0
        %463 = vmatprep.subr.bf16.mxu0 0
        %464 = vmatpush1.bf16.msra.mxu0 0
        %465 = vmatprep.subr.bf16.mxu0 0
        %466 = vmatpush1.bf16.msra.mxu0 0
        %467 = vmatprep.subr.bf16.mxu0 0
        %468 = vmatpush1.bf16.msra.mxu0 0
        %469 = vmatprep.subr.bf16.mxu0 0
        %470 = vmatpush1.bf16.msra.mxu0 0
        %471 = vmatprep.subr.bf16.mxu0 0
        %472 = vmatpush1.bf16.msra.mxu0 0
        %473 = vmatprep.subr.bf16.mxu0 0
        %474 = vmatpush1.bf16.msra.mxu0 0
        %475 = vmatprep.mubr.bf16.mxu0 0
        %476 = vmatmul.mubr.bf16.gmra.mrb[0].mxu0 %v441
        %v477 = vpop.f32.mrb[0].mxu0
        %v478 = vadd.f32 0.0, %v477
        %v479 = vpop.f32.mrb[0].mxu0
        %v480 = vpop.f32.mrb[0].mxu0
        %v481 = vadd.f32 0.0, %v480
        %v482 = vpop.f32.mrb[0].mxu0
        %483 = vdwg.mxu0
        %v486 = vunpack.c.l.b16 %v414
        %v487 = vunpack.c.l.b16 %v415
        %v488 = vpack.c.b16 %v487, %v486
        %v490 = vsel %vm439, %v488, 0
        %492 = vmatprep.subr.bf16.mxu0 0
        %493 = vmatpush1.bf16.msra.mxu0 %v437
        %494 = vmatprep.subr.bf16.mxu0 0
        %495 = vmatpush1.bf16.msra.mxu0 0
        %496 = vmatprep.subr.bf16.mxu0 0
        %497 = vmatpush1.bf16.msra.mxu0 0
        %498 = vmatprep.subr.bf16.mxu0 0
        %499 = vmatpush1.bf16.msra.mxu0 0
        %500 = vmatprep.subr.bf16.mxu0 0
        %501 = vmatpush1.bf16.msra.mxu0 0
        %502 = vmatprep.subr.bf16.mxu0 0
        %503 = vmatpush1.bf16.msra.mxu0 0
        %504 = vmatprep.subr.bf16.mxu0 0
        %505 = vmatpush1.bf16.msra.mxu0 0
        %506 = vmatprep.subr.bf16.mxu0 0
        %507 = vmatpush1.bf16.msra.mxu0 0
        %508 = vmatprep.subr.bf16.mxu0 0
        %509 = vmatpush1.bf16.msra.mxu0 0
        %510 = vmatprep.subr.bf16.mxu0 0
        %511 = vmatpush1.bf16.msra.mxu0 0
        %512 = vmatprep.subr.bf16.mxu0 0
        %513 = vmatpush1.bf16.msra.mxu0 0
        %514 = vmatprep.subr.bf16.mxu0 0
        %515 = vmatpush1.bf16.msra.mxu0 0
        %516 = vmatprep.subr.bf16.mxu0 0
        %517 = vmatpush1.bf16.msra.mxu0 0
        %518 = vmatprep.subr.bf16.mxu0 0
        %519 = vmatpush1.bf16.msra.mxu0 0
        %520 = vmatprep.subr.bf16.mxu0 0
        %521 = vmatpush1.bf16.msra.mxu0 0
        %522 = vmatprep.subr.bf16.mxu0 0
        %523 = vmatpush1.bf16.msra.mxu0 0
        %524 = vmatprep.mubr.bf16.mxu0 0
        %525 = vmatmul.mubr.bf16.gmra.mrb[0].mxu0 %v490
        %v526 = vpop.f32.mrb[0].mxu0
        %v527 = vadd.f32 0.0, %v526
        %v528 = vpop.f32.mrb[0].mxu0
        %v529 = vpop.f32.mrb[0].mxu0
        %v530 = vadd.f32 0.0, %v529
        %v531 = vpop.f32.mrb[0].mxu0
        %532 = vdwg.mxu0
        %v533 = vpack.c.bf16 %v481, %v478
        %v536 = vunpack.c.l.b16 %v416
        %v537 = vunpack.c.l.b16 %v417
        %v538 = vpack.c.b16 %v537, %v536
        %v541 = vsel %vm439, %v533, 0
        %543 = vmatprep.subr.bf16.mxu0 0
        %544 = vmatpush1.bf16.msra.mxu0 %v538
        %545 = vmatprep.subr.bf16.mxu0 0
        %546 = vmatpush1.bf16.msra.mxu0 0
        %547 = vmatprep.subr.bf16.mxu0 0
        %548 = vmatpush1.bf16.msra.mxu0 0
        %549 = vmatprep.subr.bf16.mxu0 0
        %550 = vmatpush1.bf16.msra.mxu0 0
        %551 = vmatprep.subr.bf16.mxu0 0
        %552 = vmatpush1.bf16.msra.mxu0 0
        %553 = vmatprep.subr.bf16.mxu0 0
        %554 = vmatpush1.bf16.msra.mxu0 0
        %555 = vmatprep.subr.bf16.mxu0 0
        %556 = vmatpush1.bf16.msra.mxu0 0
        %557 = vmatprep.subr.bf16.mxu0 0
        %558 = vmatpush1.bf16.msra.mxu0 0
        %559 = vmatprep.subr.bf16.mxu0 0
        %560 = vmatpush1.bf16.msra.mxu0 0
        %561 = vmatprep.subr.bf16.mxu0 0
        %562 = vmatpush1.bf16.msra.mxu0 0
        %563 = vmatprep.subr.bf16.mxu0 0
        %564 = vmatpush1.bf16.msra.mxu0 0
        %565 = vmatprep.subr.bf16.mxu0 0
        %566 = vmatpush1.bf16.msra.mxu0 0
        %567 = vmatprep.subr.bf16.mxu0 0
        %568 = vmatpush1.bf16.msra.mxu0 0
        %569 = vmatprep.subr.bf16.mxu0 0
        %570 = vmatpush1.bf16.msra.mxu0 0
        %571 = vmatprep.subr.bf16.mxu0 0
        %572 = vmatpush1.bf16.msra.mxu0 0
        %573 = vmatprep.subr.bf16.mxu0 0
        %574 = vmatpush1.bf16.msra.mxu0 0
        %575 = vmatprep.mubr.bf16.mxu0 0
        %576 = vmatmul.mubr.bf16.gmra.mrb[0].mxu0 %v541
        %v577 = vpop.f32.mrb[0].mxu0
        %v578 = vadd.f32 0.0, %v577
        %v579 = vpop.f32.mrb[0].mxu0
        %v580 = vpop.f32.mrb[0].mxu0
        %v581 = vadd.f32 0.0, %v580
        %v582 = vpop.f32.mrb[0].mxu0
        %583 = vdwg.mxu0
        %v584 = vpack.c.bf16 %v530, %v527
        %v587 = vunpack.c.l.b16 %v418
        %v588 = vunpack.c.l.b16 %v419
        %v589 = vpack.c.b16 %v588, %v587
        %v592 = vsel %vm439, %v584, 0
        %594 = vmatprep.subr.bf16.mxu0 0
        %595 = vmatpush1.bf16.msra.mxu0 %v589
        %596 = vmatprep.subr.bf16.mxu0 0
        %597 = vmatpush1.bf16.msra.mxu0 0
        %598 = vmatprep.subr.bf16.mxu0 0
        %599 = vmatpush1.bf16.msra.mxu0 0
        %600 = vmatprep.subr.bf16.mxu0 0
        %601 = vmatpush1.bf16.msra.mxu0 0
        %602 = vmatprep.subr.bf16.mxu0 0
        %603 = vmatpush1.bf16.msra.mxu0 0
        %604 = vmatprep.subr.bf16.mxu0 0
        %605 = vmatpush1.bf16.msra.mxu0 0
        %606 = vmatprep.subr.bf16.mxu0 0
        %607 = vmatpush1.bf16.msra.mxu0 0
        %608 = vmatprep.subr.bf16.mxu0 0
        %609 = vmatpush1.bf16.msra.mxu0 0
        %610 = vmatprep.subr.bf16.mxu0 0
        %611 = vmatpush1.bf16.msra.mxu0 0
        %612 = vmatprep.subr.bf16.mxu0 0
        %613 = vmatpush1.bf16.msra.mxu0 0
        %614 = vmatprep.subr.bf16.mxu0 0
        %615 = vmatpush1.bf16.msra.mxu0 0
        %616 = vmatprep.subr.bf16.mxu0 0
        %617 = vmatpush1.bf16.msra.mxu0 0
        %618 = vmatprep.subr.bf16.mxu0 0
        %619 = vmatpush1.bf16.msra.mxu0 0
        %620 = vmatprep.subr.bf16.mxu0 0
        %621 = vmatpush1.bf16.msra.mxu0 0
        %622 = vmatprep.subr.bf16.mxu0 0
        %623 = vmatpush1.bf16.msra.mxu0 0
        %624 = vmatprep.subr.bf16.mxu0 0
        %625 = vmatpush1.bf16.msra.mxu0 0
        %626 = vmatprep.mubr.bf16.mxu0 0
        %627 = vmatmul.mubr.bf16.gmra.mrb[0].mxu0 %v592
        %v628 = vpop.f32.mrb[0].mxu0
        %v629 = vadd.f32 0.0, %v628
        %v630 = vpop.f32.mrb[0].mxu0
        %v631 = vpop.f32.mrb[0].mxu0
        %v632 = vadd.f32 0.0, %v631
        %v633 = vpop.f32.mrb[0].mxu0
        %634 = vdwg.mxu0
        %v635 = vsub.f32 %v578, %v629
        %v636 = vsub.f32 %v581, %v632
        %637 = vmatprep.subr.bf16.mxu0 0
        %638 = vmatpush1.bf16.msra.mxu0 %v538
        %639 = vmatprep.subr.bf16.mxu0 0
        %640 = vmatpush1.bf16.msra.mxu0 0
        %641 = vmatprep.subr.bf16.mxu0 0
        %642 = vmatpush1.bf16.msra.mxu0 0
        %643 = vmatprep.subr.bf16.mxu0 0
        %644 = vmatpush1.bf16.msra.mxu0 0
        %645 = vmatprep.subr.bf16.mxu0 0
        %646 = vmatpush1.bf16.msra.mxu0 0
        %647 = vmatprep.subr.bf16.mxu0 0
        %648 = vmatpush1.bf16.msra.mxu0 0
        %649 = vmatprep.subr.bf16.mxu0 0
        %650 = vmatpush1.bf16.msra.mxu0 0
        %651 = vmatprep.subr.bf16.mxu0 0
        %652 = vmatpush1.bf16.msra.mxu0 0
        %653 = vmatprep.subr.bf16.mxu0 0
        %654 = vmatpush1.bf16.msra.mxu0 0
        %655 = vmatprep.subr.bf16.mxu0 0
        %656 = vmatpush1.bf16.msra.mxu0 0
        %657 = vmatprep.subr.bf16.mxu0 0
        %658 = vmatpush1.bf16.msra.mxu0 0
        %659 = vmatprep.subr.bf16.mxu0 0
        %660 = vmatpush1.bf16.msra.mxu0 0
        %661 = vmatprep.subr.bf16.mxu0 0
        %662 = vmatpush1.bf16.msra.mxu0 0
        %663 = vmatprep.subr.bf16.mxu0 0
        %664 = vmatpush1.bf16.msra.mxu0 0
        %665 = vmatprep.subr.bf16.mxu0 0
        %666 = vmatpush1.bf16.msra.mxu0 0
        %667 = vmatprep.subr.bf16.mxu0 0
        %668 = vmatpush1.bf16.msra.mxu0 0
        %669 = vmatprep.mubr.bf16.mxu0 0
        %670 = vmatmul.mubr.bf16.gmra.mrb[0].mxu0 %v592
        %v671 = vpop.f32.mrb[0].mxu0
        %v672 = vadd.f32 0.0, %v671
        %v673 = vpop.f32.mrb[0].mxu0
        %v674 = vpop.f32.mrb[0].mxu0
        %v675 = vadd.f32 0.0, %v674
        %v676 = vpop.f32.mrb[0].mxu0
        %677 = vdwg.mxu0
        %678 = vmatprep.subr.bf16.mxu0 0
        %679 = vmatpush1.bf16.msra.mxu0 %v589
        %680 = vmatprep.subr.bf16.mxu0 0
        %681 = vmatpush1.bf16.msra.mxu0 0
        %682 = vmatprep.subr.bf16.mxu0 0
        %683 = vmatpush1.bf16.msra.mxu0 0
        %684 = vmatprep.subr.bf16.mxu0 0
        %685 = vmatpush1.bf16.msra.mxu0 0
        %686 = vmatprep.subr.bf16.mxu0 0
        %687 = vmatpush1.bf16.msra.mxu0 0
        %688 = vmatprep.subr.bf16.mxu0 0
        %689 = vmatpush1.bf16.msra.mxu0 0
        %690 = vmatprep.subr.bf16.mxu0 0
        %691 = vmatpush1.bf16.msra.mxu0 0
        %692 = vmatprep.subr.bf16.mxu0 0
        %693 = vmatpush1.bf16.msra.mxu0 0
        %694 = vmatprep.subr.bf16.mxu0 0
        %695 = vmatpush1.bf16.msra.mxu0 0
        %696 = vmatprep.subr.bf16.mxu0 0
        %697 = vmatpush1.bf16.msra.mxu0 0
        %698 = vmatprep.subr.bf16.mxu0 0
        %699 = vmatpush1.bf16.msra.mxu0 0
        %700 = vmatprep.subr.bf16.mxu0 0
        %701 = vmatpush1.bf16.msra.mxu0 0
        %702 = vmatprep.subr.bf16.mxu0 0
        %703 = vmatpush1.bf16.msra.mxu0 0
        %704 = vmatprep.subr.bf16.mxu0 0
        %705 = vmatpush1.bf16.msra.mxu0 0
        %706 = vmatprep.subr.bf16.mxu0 0
        %707 = vmatpush1.bf16.msra.mxu0 0
        %708 = vmatprep.subr.bf16.mxu0 0
        %709 = vmatpush1.bf16.msra.mxu0 0
        %710 = vmatprep.mubr.bf16.mxu0 0
        %711 = vmatmul.mubr.bf16.gmra.mrb[0].mxu0 %v541
        %v712 = vpop.f32.mrb[0].mxu0
        %v713 = vadd.f32 %v672, %v712
        %v714 = vpop.f32.mrb[0].mxu0
        %v715 = vpop.f32.mrb[0].mxu0
        %v716 = vadd.f32 %v675, %v715
        %v717 = vpop.f32.mrb[0].mxu0
        %718 = vdwg.mxu0
        %721 = vrot.lane.b32.xlu0 %v635, 16
        %v722 = vpop.permute.xlu0 %721
        %723 = vrot.lane.b32.xlu0 %v636, 16
        %v724 = vpop.permute.xlu0 %723
        %727 = vrot.lane.b32.xlu0 %v635, 32
        %v728 = vpop.permute.xlu0 %727
        %729 = vrot.lane.b32.xlu0 %v636, 32
        %v730 = vpop.permute.xlu0 %729
        %v733 = vsel %vm439, %v635, %v722
        %v734 = vsel %vm439, %v636, %v724
        %vm735 = vcmask 261120
        %v736 = vsel %vm735, %v733, %v728
        %v737 = vsel %vm735, %v734, %v730
        %740 = vrot.lane.b32.xlu0 %v713, 16
        %v741 = vpop.permute.xlu0 %740
        %742 = vrot.lane.b32.xlu0 %v716, 16
        %v743 = vpop.permute.xlu0 %742
        %746 = vrot.lane.b32.xlu0 %v713, 32
        %v747 = vpop.permute.xlu0 %746
        %748 = vrot.lane.b32.xlu0 %v716, 32
        %v749 = vpop.permute.xlu0 %748
        %v752 = vsel %vm439, %v713, %v741
        %v753 = vsel %vm439, %v716, %v743
        %v754 = vsel %vm735, %v752, %v747
        %v755 = vsel %vm735, %v753, %v749
        %v756 = vmul.f32 %v736, %v420
        %v757 = vmul.f32 %v737, %v421
        %v758 = vpack.c.bf16 %v757, %v756
        %v759 = vmul.f32 %v754, %v420
        %v760 = vmul.f32 %v755, %v421
        %v761 = vpack.c.bf16 %v760, %v759
        %v762 = vmul.f32 %v736, %v422
        %v763 = vmul.f32 %v737, %v423
        %v764 = vmul.f32 %v754, %v424
        %v765 = vmul.f32 %v755, %v425
        %v766 = vsub.f32 %v762, %v764
        %v767 = vsub.f32 %v763, %v765
        %v768 = vpack.c.bf16 %v767, %v766
        %v769 = vmul.f32 %v736, %v424
        %v770 = vmul.f32 %v737, %v425
        %v771 = vmul.f32 %v754, %v422
        %v772 = vmul.f32 %v755, %v423
        %v773 = vadd.f32 %v769, %v771
        %v774 = vadd.f32 %v770, %v772
        %v775 = vpack.c.bf16 %v774, %v773
        %777 = vrot.lane.b32.xlu0 %v768, 48
        %v778 = vpop.permute.xlu0 %777
        %vm779 = vcmask 392192
        %v782 = vsel %vm779, %v758, %v778
        %785 = vrot.lane.b32.xlu0 %v775, 48
        %v786 = vpop.permute.xlu0 %785
        %v789 = vsel %vm779, %v761, %v786
        %791 = vmatprep.subr.bf16.mxu0 0
        %792 = vmatpush1.bf16.msra.mxu0 %v789
        %793 = vmatprep.subr.bf16.mxu0 0
        %794 = vmatpush1.bf16.msra.mxu0 0
        %795 = vmatprep.subr.bf16.mxu0 0
        %796 = vmatpush1.bf16.msra.mxu0 0
        %797 = vmatprep.subr.bf16.mxu0 0
        %798 = vmatpush1.bf16.msra.mxu0 0
        %799 = vmatprep.subr.bf16.mxu0 0
        %800 = vmatpush1.bf16.msra.mxu0 0
        %801 = vmatprep.subr.bf16.mxu0 0
        %802 = vmatpush1.bf16.msra.mxu0 0
        %803 = vmatprep.subr.bf16.mxu0 0
        %804 = vmatpush1.bf16.msra.mxu0 0
        %805 = vmatprep.subr.bf16.mxu0 0
        %806 = vmatpush1.bf16.msra.mxu0 0
        %807 = vmatprep.subr.bf16.mxu0 0
        %808 = vmatpush1.bf16.msra.mxu0 0
        %809 = vmatprep.subr.bf16.mxu0 0
        %810 = vmatpush1.bf16.msra.mxu0 0
        %811 = vmatprep.subr.bf16.mxu0 0
        %812 = vmatpush1.bf16.msra.mxu0 0
        %813 = vmatprep.subr.bf16.mxu0 0
        %814 = vmatpush1.bf16.msra.mxu0 0
        %815 = vmatprep.subr.bf16.mxu0 0
        %816 = vmatpush1.bf16.msra.mxu0 0
        %817 = vmatprep.subr.bf16.mxu0 0
        %818 = vmatpush1.bf16.msra.mxu0 0
        %819 = vmatprep.subr.bf16.mxu0 0
        %820 = vmatpush1.bf16.msra.mxu0 0
        %821 = vmatprep.subr.bf16.mxu0 0
        %822 = vmatpush1.bf16.msra.mxu0 0
        %823 = vmatprep.mubr.bf16.mxu0 0
        %824 = vmatmul.mubr.bf16.gmra.mrb[0].mxu0 %v490
        %v825 = vpop.f32.mrb[0].mxu0
        %v826 = vadd.f32 0.0, %v825
        %v827 = vpop.f32.mrb[0].mxu0
        %v828 = vpop.f32.mrb[0].mxu0
        %v829 = vadd.f32 0.0, %v828
        %v830 = vpop.f32.mrb[0].mxu0
        %831 = vdwg.mxu0
        %832 = vmatprep.subr.bf16.mxu0 0
        %833 = vmatpush1.bf16.msra.mxu0 %v782
        %834 = vmatprep.subr.bf16.mxu0 0
        %835 = vmatpush1.bf16.msra.mxu0 0
        %836 = vmatprep.subr.bf16.mxu0 0
        %837 = vmatpush1.bf16.msra.mxu0 0
        %838 = vmatprep.subr.bf16.mxu0 0
        %839 = vmatpush1.bf16.msra.mxu0 0
        %840 = vmatprep.subr.bf16.mxu0 0
        %841 = vmatpush1.bf16.msra.mxu0 0
        %842 = vmatprep.subr.bf16.mxu0 0
        %843 = vmatpush1.bf16.msra.mxu0 0
        %844 = vmatprep.subr.bf16.mxu0 0
        %845 = vmatpush1.bf16.msra.mxu0 0
        %846 = vmatprep.subr.bf16.mxu0 0
        %847 = vmatpush1.bf16.msra.mxu0 0
        %848 = vmatprep.subr.bf16.mxu0 0
        %849 = vmatpush1.bf16.msra.mxu0 0
        %850 = vmatprep.subr.bf16.mxu0 0
        %851 = vmatpush1.bf16.msra.mxu0 0
        %852 = vmatprep.subr.bf16.mxu0 0
        %853 = vmatpush1.bf16.msra.mxu0 0
        %854 = vmatprep.subr.bf16.mxu0 0
        %855 = vmatpush1.bf16.msra.mxu0 0
        %856 = vmatprep.subr.bf16.mxu0 0
        %857 = vmatpush1.bf16.msra.mxu0 0
        %858 = vmatprep.subr.bf16.mxu0 0
        %859 = vmatpush1.bf16.msra.mxu0 0
        %860 = vmatprep.subr.bf16.mxu0 0
        %861 = vmatpush1.bf16.msra.mxu0 0
        %862 = vmatprep.subr.bf16.mxu0 0
        %863 = vmatpush1.bf16.msra.mxu0 0
        %864 = vmatprep.mubr.bf16.mxu0 0
        %865 = vmatmul.mubr.bf16.gmra.mrb[0].mxu0 %v441
        %v866 = vpop.f32.mrb[0].mxu0
        %v867 = vadd.f32 %v826, %v866
        %v868 = vpop.f32.mrb[0].mxu0
        %v869 = vpop.f32.mrb[0].mxu0
        %v870 = vadd.f32 %v829, %v869
        %v871 = vpop.f32.mrb[0].mxu0
        %872 = vdwg.mxu0
        %v873 = vpack.c.bf16 %v870, %v867
        %874 = vmatprep.subr.bf16.mxu0 0
        %875 = vmatpush1.bf16.msra.mxu0 %v789
        %876 = vmatprep.subr.bf16.mxu0 0
        %877 = vmatpush1.bf16.msra.mxu0 0
        %878 = vmatprep.subr.bf16.mxu0 0
        %879 = vmatpush1.bf16.msra.mxu0 0
        %880 = vmatprep.subr.bf16.mxu0 0
        %881 = vmatpush1.bf16.msra.mxu0 0
        %882 = vmatprep.subr.bf16.mxu0 0
        %883 = vmatpush1.bf16.msra.mxu0 0
        %884 = vmatprep.subr.bf16.mxu0 0
        %885 = vmatpush1.bf16.msra.mxu0 0
        %886 = vmatprep.subr.bf16.mxu0 0
        %887 = vmatpush1.bf16.msra.mxu0 0
        %888 = vmatprep.subr.bf16.mxu0 0
        %889 = vmatpush1.bf16.msra.mxu0 0
        %890 = vmatprep.subr.bf16.mxu0 0
        %891 = vmatpush1.bf16.msra.mxu0 0
        %892 = vmatprep.subr.bf16.mxu0 0
        %893 = vmatpush1.bf16.msra.mxu0 0
        %894 = vmatprep.subr.bf16.mxu0 0
        %895 = vmatpush1.bf16.msra.mxu0 0
        %896 = vmatprep.subr.bf16.mxu0 0
        %897 = vmatpush1.bf16.msra.mxu0 0
        %898 = vmatprep.subr.bf16.mxu0 0
        %899 = vmatpush1.bf16.msra.mxu0 0
        %900 = vmatprep.subr.bf16.mxu0 0
        %901 = vmatpush1.bf16.msra.mxu0 0
        %902 = vmatprep.subr.bf16.mxu0 0
        %903 = vmatpush1.bf16.msra.mxu0 0
        %904 = vmatprep.subr.bf16.mxu0 0
        %905 = vmatpush1.bf16.msra.mxu0 0
        %906 = vmatprep.mubr.bf16.mxu0 0
        %907 = vmatmul.mubr.bf16.gmra.mrb[0].mxu0 %v441
        %v908 = vpop.f32.mrb[0].mxu0
        %v909 = vadd.f32 0.0, %v908
        %v910 = vpop.f32.mrb[0].mxu0
        %v911 = vpop.f32.mrb[0].mxu0
        %v912 = vadd.f32 0.0, %v911
        %v913 = vpop.f32.mrb[0].mxu0
        %914 = vdwg.mxu0
        %915 = vmatprep.subr.bf16.mxu0 0
        %916 = vmatpush1.bf16.msra.mxu0 %v782
        %917 = vmatprep.subr.bf16.mxu0 0
        %918 = vmatpush1.bf16.msra.mxu0 0
        %919 = vmatprep.subr.bf16.mxu0 0
        %920 = vmatpush1.bf16.msra.mxu0 0
        %921 = vmatprep.subr.bf16.mxu0 0
        %922 = vmatpush1.bf16.msra.mxu0 0
        %923 = vmatprep.subr.bf16.mxu0 0
        %924 = vmatpush1.bf16.msra.mxu0 0
        %925 = vmatprep.subr.bf16.mxu0 0
        %926 = vmatpush1.bf16.msra.mxu0 0
        %927 = vmatprep.subr.bf16.mxu0 0
        %928 = vmatpush1.bf16.msra.mxu0 0
        %929 = vmatprep.subr.bf16.mxu0 0
        %930 = vmatpush1.bf16.msra.mxu0 0
        %931 = vmatprep.subr.bf16.mxu0 0
        %932 = vmatpush1.bf16.msra.mxu0 0
        %933 = vmatprep.subr.bf16.mxu0 0
        %934 = vmatpush1.bf16.msra.mxu0 0
        %935 = vmatprep.subr.bf16.mxu0 0
        %936 = vmatpush1.bf16.msra.mxu0 0
        %937 = vmatprep.subr.bf16.mxu0 0
        %938 = vmatpush1.bf16.msra.mxu0 0
        %939 = vmatprep.subr.bf16.mxu0 0
        %940 = vmatpush1.bf16.msra.mxu0 0
        %941 = vmatprep.subr.bf16.mxu0 0
        %942 = vmatpush1.bf16.msra.mxu0 0
        %943 = vmatprep.subr.bf16.mxu0 0
        %944 = vmatpush1.bf16.msra.mxu0 0
        %945 = vmatprep.subr.bf16.mxu0 0
        %946 = vmatpush1.bf16.msra.mxu0 0
        %947 = vmatprep.mubr.bf16.mxu0 0
        %948 = vmatmul.mubr.bf16.gmra.mrb[0].mxu0 %v490
        %v949 = vpop.f32.mrb[0].mxu0
        %v950 = vadd.f32 0.0, %v949
        %v951 = vpop.f32.mrb[0].mxu0
        %v952 = vpop.f32.mrb[0].mxu0
        %v953 = vadd.f32 0.0, %v952
        %v954 = vpop.f32.mrb[0].mxu0
        %955 = vdwg.mxu0
        %v956 = vsub.f32 %v909, %v950
        %v957 = vsub.f32 %v912, %v953
        %v958 = vpack.c.bf16 %v957, %v956
        %960 = vrot.lane.b32.xlu0 %v873, 112
        %v961 = vpop.permute.xlu0 %960
        %962 = vrot.lane.b32.xlu0 %v873, 96
        %v963 = vpop.permute.xlu0 %962
        %965 = vrot.lane.b32.xlu0 %v958, 112
        %v966 = vpop.permute.xlu0 %965
        %967 = vrot.lane.b32.xlu0 %v958, 96
        %v968 = vpop.permute.xlu0 %967
        %v970 = vsel %vm439, %v958, 0
        %v973 = vsel %vm439, %v966, 0
        %v976 = vsel %vm439, %v968, 0
        %978 = vmatprep.subr.bf16.mxu0 0
        %979 = vmatpush1.bf16.msra.mxu0 %v589
        %980 = vmatprep.subr.bf16.mxu0 0
        %981 = vmatpush1.bf16.msra.mxu0 0
        %982 = vmatprep.subr.bf16.mxu0 0
        %983 = vmatpush1.bf16.msra.mxu0 0
        %984 = vmatprep.subr.bf16.mxu0 0
        %985 = vmatpush1.bf16.msra.mxu0 0
        %986 = vmatprep.subr.bf16.mxu0 0
        %987 = vmatpush1.bf16.msra.mxu0 0
        %988 = vmatprep.subr.bf16.mxu0 0
        %989 = vmatpush1.bf16.msra.mxu0 0
        %990 = vmatprep.subr.bf16.mxu0 0
        %991 = vmatpush1.bf16.msra.mxu0 0
        %992 = vmatprep.subr.bf16.mxu0 0
        %993 = vmatpush1.bf16.msra.mxu0 0
        %994 = vmatprep.subr.bf16.mxu0 0
        %995 = vmatpush1.bf16.msra.mxu0 0
        %996 = vmatprep.subr.bf16.mxu0 0
        %997 = vmatpush1.bf16.msra.mxu0 0
        %998 = vmatprep.subr.bf16.mxu0 0
        %999 = vmatpush1.bf16.msra.mxu0 0
        %1000 = vmatprep.subr.bf16.mxu0 0
        %1001 = vmatpush1.bf16.msra.mxu0 0
        %1002 = vmatprep.subr.bf16.mxu0 0
        %1003 = vmatpush1.bf16.msra.mxu0 0
        %1004 = vmatprep.subr.bf16.mxu0 0
        %1005 = vmatpush1.bf16.msra.mxu0 0
        %1006 = vmatprep.subr.bf16.mxu0 0
        %1007 = vmatpush1.bf16.msra.mxu0 0
        %1008 = vmatprep.subr.bf16.mxu0 0
        %1009 = vmatpush1.bf16.msra.mxu0 0
        %1010 = vmatprep.mubr.bf16.mxu0 0
        %1011 = vmatmul.mubr.bf16.gmra.mrb[0].mxu0 %v970
        %v1012 = vpop.f32.mrb[0].mxu0
        %v1013 = vadd.f32 0.0, %v1012
        %v1014 = vpop.f32.mrb[0].mxu0
        %v1015 = vpop.f32.mrb[0].mxu0
        %v1016 = vadd.f32 0.0, %v1015
        %v1017 = vpop.f32.mrb[0].mxu0
        %1018 = vmatprep.mubr.bf16.mxu0 0
        %1019 = vmatmul.mubr.bf16.gmra.mrb[0].mxu0 %v973
        %v1020 = vpop.f32.mrb[0].mxu0
        %v1021 = vadd.f32 0.0, %v1020
        %v1022 = vpop.f32.mrb[0].mxu0
        %v1023 = vpop.f32.mrb[0].mxu0
        %v1024 = vadd.f32 0.0, %v1023
        %v1025 = vpop.f32.mrb[0].mxu0
        %1026 = vmatprep.mubr.bf16.mxu0 0
        %1027 = vmatmul.mubr.bf16.gmra.mrb[0].mxu0 %v976
        %v1028 = vpop.f32.mrb[0].mxu0
        %v1029 = vadd.f32 0.0, %v1028
        %v1030 = vpop.f32.mrb[0].mxu0
        %v1031 = vpop.f32.mrb[0].mxu0
        %v1032 = vadd.f32 0.0, %v1031
        %v1033 = vpop.f32.mrb[0].mxu0
        %1034 = vdwg.mxu0
        %v1036 = vsel %vm439, %v873, 0
        %v1039 = vsel %vm439, %v961, 0
        %v1042 = vsel %vm439, %v963, 0
        %1044 = vmatprep.subr.bf16.mxu0 0
        %1045 = vmatpush1.bf16.msra.mxu0 %v538
        %1046 = vmatprep.subr.bf16.mxu0 0
        %1047 = vmatpush1.bf16.msra.mxu0 0
        %1048 = vmatprep.subr.bf16.mxu0 0
        %1049 = vmatpush1.bf16.msra.mxu0 0
        %1050 = vmatprep.subr.bf16.mxu0 0
        %1051 = vmatpush1.bf16.msra.mxu0 0
        %1052 = vmatprep.subr.bf16.mxu0 0
        %1053 = vmatpush1.bf16.msra.mxu0 0
        %1054 = vmatprep.subr.bf16.mxu0 0
        %1055 = vmatpush1.bf16.msra.mxu0 0
        %1056 = vmatprep.subr.bf16.mxu0 0
        %1057 = vmatpush1.bf16.msra.mxu0 0
        %1058 = vmatprep.subr.bf16.mxu0 0
        %1059 = vmatpush1.bf16.msra.mxu0 0
        %1060 = vmatprep.subr.bf16.mxu0 0
        %1061 = vmatpush1.bf16.msra.mxu0 0
        %1062 = vmatprep.subr.bf16.mxu0 0
        %1063 = vmatpush1.bf16.msra.mxu0 0
        %1064 = vmatprep.subr.bf16.mxu0 0
        %1065 = vmatpush1.bf16.msra.mxu0 0
        %1066 = vmatprep.subr.bf16.mxu0 0
        %1067 = vmatpush1.bf16.msra.mxu0 0
        %1068 = vmatprep.subr.bf16.mxu0 0
        %1069 = vmatpush1.bf16.msra.mxu0 0
        %1070 = vmatprep.subr.bf16.mxu0 0
        %1071 = vmatpush1.bf16.msra.mxu0 0
        %1072 = vmatprep.subr.bf16.mxu0 0
        %1073 = vmatpush1.bf16.msra.mxu0 0
        %1074 = vmatprep.subr.bf16.mxu0 0
        %1075 = vmatpush1.bf16.msra.mxu0 0
        %1076 = vmatprep.mubr.bf16.mxu0 0
        %1077 = vmatmul.mubr.bf16.gmra.mrb[0].mxu0 %v1036
        %v1078 = vpop.f32.mrb[0].mxu0
        %v1079 = vadd.f32 %v1013, %v1078
        %v1080 = vpop.f32.mrb[0].mxu0
        %v1081 = vpop.f32.mrb[0].mxu0
        %v1082 = vadd.f32 %v1016, %v1081
        %v1083 = vpop.f32.mrb[0].mxu0
        %1084 = vmatprep.mubr.bf16.mxu0 0
        %1085 = vmatmul.mubr.bf16.gmra.mrb[0].mxu0 %v1039
        %v1086 = vpop.f32.mrb[0].mxu0
        %v1087 = vadd.f32 %v1021, %v1086
        %v1088 = vpop.f32.mrb[0].mxu0
        %v1089 = vpop.f32.mrb[0].mxu0
        %v1090 = vadd.f32 %v1024, %v1089
        %v1091 = vpop.f32.mrb[0].mxu0
        %1092 = vmatprep.mubr.bf16.mxu0 0
        %1093 = vmatmul.mubr.bf16.gmra.mrb[0].mxu0 %v1042
        %v1094 = vpop.f32.mrb[0].mxu0
        %v1095 = vadd.f32 %v1029, %v1094
        %v1096 = vpop.f32.mrb[0].mxu0
        %v1097 = vpop.f32.mrb[0].mxu0
        %v1098 = vadd.f32 %v1032, %v1097
        %v1099 = vpop.f32.mrb[0].mxu0
        %1100 = vdwg.mxu0
        %1101 = vrot.lane.b32.xlu0 %v958, 80
        %v1102 = vpop.permute.xlu0 %1101
        %1103 = vrot.lane.b32.xlu0 %v966, 80
        %v1104 = vpop.permute.xlu0 %1103
        %1105 = vrot.lane.b32.xlu0 %v968, 80
        %v1106 = vpop.permute.xlu0 %1105
        %v1108 = vsel %vm439, %v1102, 0
        %v1111 = vsel %vm439, %v1104, 0
        %v1114 = vsel %vm439, %v1106, 0
        %1116 = vmatprep.subr.bf16.mxu0 0
        %1117 = vmatpush1.bf16.msra.mxu0 %v589
        %1118 = vmatprep.subr.bf16.mxu0 0
        %1119 = vmatpush1.bf16.msra.mxu0 0
        %1120 = vmatprep.subr.bf16.mxu0 0
        %1121 = vmatpush1.bf16.msra.mxu0 0
        %1122 = vmatprep.subr.bf16.mxu0 0
        %1123 = vmatpush1.bf16.msra.mxu0 0
        %1124 = vmatprep.subr.bf16.mxu0 0
        %1125 = vmatpush1.bf16.msra.mxu0 0
        %1126 = vmatprep.subr.bf16.mxu0 0
        %1127 = vmatpush1.bf16.msra.mxu0 0
        %1128 = vmatprep.subr.bf16.mxu0 0
        %1129 = vmatpush1.bf16.msra.mxu0 0
        %1130 = vmatprep.subr.bf16.mxu0 0
        %1131 = vmatpush1.bf16.msra.mxu0 0
        %1132 = vmatprep.subr.bf16.mxu0 0
        %1133 = vmatpush1.bf16.msra.mxu0 0
        %1134 = vmatprep.subr.bf16.mxu0 0
        %1135 = vmatpush1.bf16.msra.mxu0 0
        %1136 = vmatprep.subr.bf16.mxu0 0
        %1137 = vmatpush1.bf16.msra.mxu0 0
        %1138 = vmatprep.subr.bf16.mxu0 0
        %1139 = vmatpush1.bf16.msra.mxu0 0
        %1140 = vmatprep.subr.bf16.mxu0 0
        %1141 = vmatpush1.bf16.msra.mxu0 0
        %1142 = vmatprep.subr.bf16.mxu0 0
        %1143 = vmatpush1.bf16.msra.mxu0 0
        %1144 = vmatprep.subr.bf16.mxu0 0
        %1145 = vmatpush1.bf16.msra.mxu0 0
        %1146 = vmatprep.subr.bf16.mxu0 0
        %1147 = vmatpush1.bf16.msra.mxu0 0
        %1148 = vmatprep.mubr.bf16.mxu0 0
        %1149 = vmatmul.mubr.bf16.gmra.mrb[0].mxu0 %v1108
        %v1150 = vpop.f32.mrb[0].mxu0
        %v1151 = vadd.f32 0.0, %v1150
        %v1152 = vpop.f32.mrb[0].mxu0
        %v1153 = vpop.f32.mrb[0].mxu0
        %v1154 = vadd.f32 0.0, %v1153
        %v1155 = vpop.f32.mrb[0].mxu0
        %1156 = vmatprep.mubr.bf16.mxu0 0
        %1157 = vmatmul.mubr.bf16.gmra.mrb[0].mxu0 %v1111
        %v1158 = vpop.f32.mrb[0].mxu0
        %v1159 = vadd.f32 0.0, %v1158
        %v1160 = vpop.f32.mrb[0].mxu0
        %v1161 = vpop.f32.mrb[0].mxu0
        %v1162 = vadd.f32 0.0, %v1161
        %v1163 = vpop.f32.mrb[0].mxu0
        %1164 = vmatprep.mubr.bf16.mxu0 0
        %1165 = vmatmul.mubr.bf16.gmra.mrb[0].mxu0 %v1114
        %v1166 = vpop.f32.mrb[0].mxu0
        %v1167 = vadd.f32 0.0, %v1166
        %v1168 = vpop.f32.mrb[0].mxu0
        %v1169 = vpop.f32.mrb[0].mxu0
        %v1170 = vadd.f32 0.0, %v1169
        %v1171 = vpop.f32.mrb[0].mxu0
        %1172 = vdwg.mxu0
        %1173 = vrot.lane.b32.xlu0 %v873, 80
        %v1174 = vpop.permute.xlu0 %1173
        %1175 = vrot.lane.b32.xlu0 %v961, 80
        %v1176 = vpop.permute.xlu0 %1175
        %1177 = vrot.lane.b32.xlu0 %v963, 80
        %v1178 = vpop.permute.xlu0 %1177
        %v1180 = vsel %vm439, %v1174, 0
        %v1183 = vsel %vm439, %v1176, 0
        %v1186 = vsel %vm439, %v1178, 0
        %1188 = vmatprep.subr.bf16.mxu0 0
        %1189 = vmatpush1.bf16.msra.mxu0 %v538
        %1190 = vmatprep.subr.bf16.mxu0 0
        %1191 = vmatpush1.bf16.msra.mxu0 0
        %1192 = vmatprep.subr.bf16.mxu0 0
        %1193 = vmatpush1.bf16.msra.mxu0 0
        %1194 = vmatprep.subr.bf16.mxu0 0
        %1195 = vmatpush1.bf16.msra.mxu0 0
        %1196 = vmatprep.subr.bf16.mxu0 0
        %1197 = vmatpush1.bf16.msra.mxu0 0
        %1198 = vmatprep.subr.bf16.mxu0 0
        %1199 = vmatpush1.bf16.msra.mxu0 0
        %1200 = vmatprep.subr.bf16.mxu0 0
        %1201 = vmatpush1.bf16.msra.mxu0 0
        %1202 = vmatprep.subr.bf16.mxu0 0
        %1203 = vmatpush1.bf16.msra.mxu0 0
        %1204 = vmatprep.subr.bf16.mxu0 0
        %1205 = vmatpush1.bf16.msra.mxu0 0
        %1206 = vmatprep.subr.bf16.mxu0 0
        %1207 = vmatpush1.bf16.msra.mxu0 0
        %1208 = vmatprep.subr.bf16.mxu0 0
        %1209 = vmatpush1.bf16.msra.mxu0 0
        %1210 = vmatprep.subr.bf16.mxu0 0
        %1211 = vmatpush1.bf16.msra.mxu0 0
        %1212 = vmatprep.subr.bf16.mxu0 0
        %1213 = vmatpush1.bf16.msra.mxu0 0
        %1214 = vmatprep.subr.bf16.mxu0 0
        %1215 = vmatpush1.bf16.msra.mxu0 0
        %1216 = vmatprep.subr.bf16.mxu0 0
        %1217 = vmatpush1.bf16.msra.mxu0 0
        %1218 = vmatprep.subr.bf16.mxu0 0
        %1219 = vmatpush1.bf16.msra.mxu0 0
        %1220 = vmatprep.mubr.bf16.mxu0 0
        %1221 = vmatmul.mubr.bf16.gmra.mrb[0].mxu0 %v1180
        %v1222 = vpop.f32.mrb[0].mxu0
        %v1223 = vadd.f32 %v1151, %v1222
        %v1224 = vpop.f32.mrb[0].mxu0
        %v1225 = vpop.f32.mrb[0].mxu0
        %v1226 = vadd.f32 %v1154, %v1225
        %v1227 = vpop.f32.mrb[0].mxu0
        %1228 = vmatprep.mubr.bf16.mxu0 0
        %1229 = vmatmul.mubr.bf16.gmra.mrb[0].mxu0 %v1183
        %v1230 = vpop.f32.mrb[0].mxu0
        %v1231 = vadd.f32 %v1159, %v1230
        %v1232 = vpop.f32.mrb[0].mxu0
        %v1233 = vpop.f32.mrb[0].mxu0
        %v1234 = vadd.f32 %v1162, %v1233
        %v1235 = vpop.f32.mrb[0].mxu0
        %1236 = vmatprep.mubr.bf16.mxu0 0
        %1237 = vmatmul.mubr.bf16.gmra.mrb[0].mxu0 %v1186
        %v1238 = vpop.f32.mrb[0].mxu0
        %v1239 = vadd.f32 %v1167, %v1238
        %v1240 = vpop.f32.mrb[0].mxu0
        %v1241 = vpop.f32.mrb[0].mxu0
        %v1242 = vadd.f32 %v1170, %v1241
        %v1243 = vpop.f32.mrb[0].mxu0
        %1244 = vdwg.mxu0
        %1245 = vmatprep.subr.bf16.mxu0 0
        %1246 = vmatpush1.bf16.msra.mxu0 %v538
        %1247 = vmatprep.subr.bf16.mxu0 0
        %1248 = vmatpush1.bf16.msra.mxu0 0
        %1249 = vmatprep.subr.bf16.mxu0 0
        %1250 = vmatpush1.bf16.msra.mxu0 0
        %1251 = vmatprep.subr.bf16.mxu0 0
        %1252 = vmatpush1.bf16.msra.mxu0 0
        %1253 = vmatprep.subr.bf16.mxu0 0
        %1254 = vmatpush1.bf16.msra.mxu0 0
        %1255 = vmatprep.subr.bf16.mxu0 0
        %1256 = vmatpush1.bf16.msra.mxu0 0
        %1257 = vmatprep.subr.bf16.mxu0 0
        %1258 = vmatpush1.bf16.msra.mxu0 0
        %1259 = vmatprep.subr.bf16.mxu0 0
        %1260 = vmatpush1.bf16.msra.mxu0 0
        %1261 = vmatprep.subr.bf16.mxu0 0
        %1262 = vmatpush1.bf16.msra.mxu0 0
        %1263 = vmatprep.subr.bf16.mxu0 0
        %1264 = vmatpush1.bf16.msra.mxu0 0
        %1265 = vmatprep.subr.bf16.mxu0 0
        %1266 = vmatpush1.bf16.msra.mxu0 0
        %1267 = vmatprep.subr.bf16.mxu0 0
        %1268 = vmatpush1.bf16.msra.mxu0 0
        %1269 = vmatprep.subr.bf16.mxu0 0
        %1270 = vmatpush1.bf16.msra.mxu0 0
        %1271 = vmatprep.subr.bf16.mxu0 0
        %1272 = vmatpush1.bf16.msra.mxu0 0
        %1273 = vmatprep.subr.bf16.mxu0 0
        %1274 = vmatpush1.bf16.msra.mxu0 0
        %1275 = vmatprep.subr.bf16.mxu0 0
        %1276 = vmatpush1.bf16.msra.mxu0 0
        %1277 = vmatprep.mubr.bf16.mxu0 0
        %1278 = vmatmul.mubr.bf16.gmra.mrb[0].mxu0 %v1108
        %v1279 = vpop.f32.mrb[0].mxu0
        %v1280 = vadd.f32 0.0, %v1279
        %v1281 = vpop.f32.mrb[0].mxu0
        %v1282 = vpop.f32.mrb[0].mxu0
        %v1283 = vadd.f32 0.0, %v1282
        %v1284 = vpop.f32.mrb[0].mxu0
        %1285 = vmatprep.mubr.bf16.mxu0 0
        %1286 = vmatmul.mubr.bf16.gmra.mrb[0].mxu0 %v1111
        %v1287 = vpop.f32.mrb[0].mxu0
        %v1288 = vadd.f32 0.0, %v1287
        %v1289 = vpop.f32.mrb[0].mxu0
        %v1290 = vpop.f32.mrb[0].mxu0
        %v1291 = vadd.f32 0.0, %v1290
        %v1292 = vpop.f32.mrb[0].mxu0
        %1293 = vmatprep.mubr.bf16.mxu0 0
        %1294 = vmatmul.mubr.bf16.gmra.mrb[0].mxu0 %v1114
        %v1295 = vpop.f32.mrb[0].mxu0
        %v1296 = vadd.f32 0.0, %v1295
        %v1297 = vpop.f32.mrb[0].mxu0
        %v1298 = vpop.f32.mrb[0].mxu0
        %v1299 = vadd.f32 0.0, %v1298
        %v1300 = vpop.f32.mrb[0].mxu0
        %1301 = vdwg.mxu0
        %1302 = vmatprep.subr.bf16.mxu0 0
        %1303 = vmatpush1.bf16.msra.mxu0 %v589
        %1304 = vmatprep.subr.bf16.mxu0 0
        %1305 = vmatpush1.bf16.msra.mxu0 0
        %1306 = vmatprep.subr.bf16.mxu0 0
        %1307 = vmatpush1.bf16.msra.mxu0 0
        %1308 = vmatprep.subr.bf16.mxu0 0
        %1309 = vmatpush1.bf16.msra.mxu0 0
        %1310 = vmatprep.subr.bf16.mxu0 0
        %1311 = vmatpush1.bf16.msra.mxu0 0
        %1312 = vmatprep.subr.bf16.mxu0 0
        %1313 = vmatpush1.bf16.msra.mxu0 0
        %1314 = vmatprep.subr.bf16.mxu0 0
        %1315 = vmatpush1.bf16.msra.mxu0 0
        %1316 = vmatprep.subr.bf16.mxu0 0
        %1317 = vmatpush1.bf16.msra.mxu0 0
        %1318 = vmatprep.subr.bf16.mxu0 0
        %1319 = vmatpush1.bf16.msra.mxu0 0
        %1320 = vmatprep.subr.bf16.mxu0 0
        %1321 = vmatpush1.bf16.msra.mxu0 0
        %1322 = vmatprep.subr.bf16.mxu0 0
        %1323 = vmatpush1.bf16.msra.mxu0 0
        %1324 = vmatprep.subr.bf16.mxu0 0
        %1325 = vmatpush1.bf16.msra.mxu0 0
        %1326 = vmatprep.subr.bf16.mxu0 0
        %1327 = vmatpush1.bf16.msra.mxu0 0
        %1328 = vmatprep.subr.bf16.mxu0 0
        %1329 = vmatpush1.bf16.msra.mxu0 0
        %1330 = vmatprep.subr.bf16.mxu0 0
        %1331 = vmatpush1.bf16.msra.mxu0 0
        %1332 = vmatprep.subr.bf16.mxu0 0
        %1333 = vmatpush1.bf16.msra.mxu0 0
        %1334 = vmatprep.mubr.bf16.mxu0 0
        %1335 = vmatmul.mubr.bf16.gmra.mrb[0].mxu0 %v1180
        %v1336 = vpop.f32.mrb[0].mxu0
        %v1337 = vadd.f32 0.0, %v1336
        %v1338 = vpop.f32.mrb[0].mxu0
        %v1339 = vpop.f32.mrb[0].mxu0
        %v1340 = vadd.f32 0.0, %v1339
        %v1341 = vpop.f32.mrb[0].mxu0
        %1342 = vmatprep.mubr.bf16.mxu0 0
        %1343 = vmatmul.mubr.bf16.gmra.mrb[0].mxu0 %v1183
        %v1344 = vpop.f32.mrb[0].mxu0
        %v1345 = vadd.f32 0.0, %v1344
        %v1346 = vpop.f32.mrb[0].mxu0
        %v1347 = vpop.f32.mrb[0].mxu0
        %v1348 = vadd.f32 0.0, %v1347
        %v1349 = vpop.f32.mrb[0].mxu0
        %1350 = vmatprep.mubr.bf16.mxu0 0
        %1351 = vmatmul.mubr.bf16.gmra.mrb[0].mxu0 %v1186
        %v1352 = vpop.f32.mrb[0].mxu0
        %v1353 = vadd.f32 0.0, %v1352
        %v1354 = vpop.f32.mrb[0].mxu0
        %v1355 = vpop.f32.mrb[0].mxu0
        %v1356 = vadd.f32 0.0, %v1355
        %v1357 = vpop.f32.mrb[0].mxu0
        %1358 = vdwg.mxu0
        %v1359 = vsub.f32 %v1280, %v1337
        %v1360 = vsub.f32 %v1283, %v1340
        %v1361 = vsub.f32 %v1288, %v1345
        %v1362 = vsub.f32 %v1291, %v1348
        %v1363 = vsub.f32 %v1296, %v1353
        %v1364 = vsub.f32 %v1299, %v1356
        %v1365 = vmul.f32 %v1223, %v1223
        %v1366 = vmul.f32 %v1226, %v1226
        %v1367 = vmul.f32 %v1231, %v1231
        %v1368 = vmul.f32 %v1234, %v1234
        %v1369 = vmul.f32 %v1239, %v1239
        %v1370 = vmul.f32 %v1242, %v1242
        %v1371 = vmul.f32 %v1359, %v1359
        %v1372 = vmul.f32 %v1360, %v1360
        %v1373 = vmul.f32 %v1361, %v1361
        %v1374 = vmul.f32 %v1362, %v1362
        %v1375 = vmul.f32 %v1363, %v1363
        %v1376 = vmul.f32 %v1364, %v1364
        %v1377 = vadd.f32 %v1365, %v1371
        %v1378 = vadd.f32 %v1366, %v1372
        %v1379 = vadd.f32 %v1367, %v1373
        %v1380 = vadd.f32 %v1368, %v1374
        %v1381 = vadd.f32 %v1369, %v1375
        %v1382 = vadd.f32 %v1370, %v1376
        %v1383 = vrsqrt.pop %v1377
        %v1384 = vmul.f32 %v1377, %v1383
        %vm1385 = vcmp.eq.f32.partialorder %v1377, inf
        %v1386 = vsel %vm1385, %v1377, %v1384
        %vm1387 = vcmp.eq.f32.partialorder %v1377, 0.0
        %v1388 = vand.u32 %v1377, 2147483648
        %v1389 = vsel %vm1387, %v1388, %v1386
        %v1390 = vrsqrt.pop %v1378
        %v1391 = vmul.f32 %v1378, %v1390
        %vm1392 = vcmp.eq.f32.partialorder %v1378, inf
        %v1393 = vsel %vm1392, %v1378, %v1391
        %vm1394 = vcmp.eq.f32.partialorder %v1378, 0.0
        %v1395 = vand.u32 %v1378, 2147483648
        %v1396 = vsel %vm1394, %v1395, %v1393
        %v1397 = vrsqrt.pop %v1379
        %v1398 = vmul.f32 %v1379, %v1397
        %vm1399 = vcmp.eq.f32.partialorder %v1379, inf
        %v1400 = vsel %vm1399, %v1379, %v1398
        %vm1401 = vcmp.eq.f32.partialorder %v1379, 0.0
        %v1402 = vand.u32 %v1379, 2147483648
        %v1403 = vsel %vm1401, %v1402, %v1400
        %v1404 = vrsqrt.pop %v1380
        %v1405 = vmul.f32 %v1380, %v1404
        %vm1406 = vcmp.eq.f32.partialorder %v1380, inf
        %v1407 = vsel %vm1406, %v1380, %v1405
        %vm1408 = vcmp.eq.f32.partialorder %v1380, 0.0
        %v1409 = vand.u32 %v1380, 2147483648
        %v1410 = vsel %vm1408, %v1409, %v1407
        %v1411 = vrsqrt.pop %v1381
        %v1412 = vmul.f32 %v1381, %v1411
        %vm1413 = vcmp.eq.f32.partialorder %v1381, inf
        %v1414 = vsel %vm1413, %v1381, %v1412
        %vm1415 = vcmp.eq.f32.partialorder %v1381, 0.0
        %v1416 = vand.u32 %v1381, 2147483648
        %v1417 = vsel %vm1415, %v1416, %v1414
        %v1418 = vrsqrt.pop %v1382
        %v1419 = vmul.f32 %v1382, %v1418
        %vm1420 = vcmp.eq.f32.partialorder %v1382, inf
        %v1421 = vsel %vm1420, %v1382, %v1419
        %vm1422 = vcmp.eq.f32.partialorder %v1382, 0.0
        %v1423 = vand.u32 %v1382, 2147483648
        %v1424 = vsel %vm1422, %v1423, %v1421
        %v1425 = vand.u32 2147483647, %v1079
        %v1426 = vand.u32 2147483647, %v1389
        %v1427 = vmin.f32 %v1425, %v1426
        %v1428 = vmax.f32 %v1425, %v1426
        %v1429 = vrcp.pop %v1428
        %v1430 = vmul.f32 %v1427, %v1429
        %v1431 = vmul.f32 %v1430, %v1430
        %v1432 = vmul.f32 0.002785687, %v1431
        %v1433 = vadd.f32 %v1432, -0.015866
        %v1434 = vmul.f32 %v1433, %v1431
        %v1435 = vadd.f32 %v1434, 0.04247222
        %v1436 = vmul.f32 %v1435, %v1431
        %v1437 = vadd.f32 %v1436, -0.074975304
        %v1438 = vmul.f32 %v1437, %v1431
        %v1439 = vadd.f32 %v1438, 0.1064488
        %v1440 = vmul.f32 %v1439, %v1431
        %v1441 = vadd.f32 %v1440, -0.14207031
        %v1442 = vmul.f32 %v1441, %v1431
        %v1443 = vadd.f32 %v1442, 0.19993454
        %v1444 = vmul.f32 %v1443, %v1431
        %v1445 = vadd.f32 %v1444, -0.33333147
        %v1446 = vmul.f32 %v1445, %v1431
        %v1447 = vmul.f32 %v1446, %v1430
        %v1448 = vadd.f32 %v1447, %v1430
        %vm1449 = vcmp.gt.f32.partialorder %v1426, %v1425
        %v1450 = vsub.f32 1.5707964, %v1448
        %v1451 = vsel %vm1449, %v1450, %v1448
        %vm1452 = vcmp.lt.f32.partialorder %v1079, 0.0
        %v1453 = vsub.f32 3.1415927, %v1451
        %v1454 = vsel %vm1452, %v1453, %v1451
        %vm1455 = vcmp.lt.s32.totalorder %v1079, 0
        %v1456 = vsel %vm1455, 3.1415927, 0.0
        %vm1457 = vcmp.eq.f32.partialorder %v1389, 0.0
        %v1458 = vsel %vm1457, %v1456, %v1454
        %vm1459 = vcmp.ne.f32.partialorder %v1079, %v1079
        %vm1460 = vcmp.ne.f32.partialorder %v1389, %v1389
        %vm1461 = vmor %vm1459, %vm1460
        %v1462 = vsel %vm1461, nan, %v1458
        %vm1463 = vcmp.lt.f32.partialorder %v1079, 0.0
        %v1464 = vsel %vm1463, 2.3561945, 0.7853982
        %vm1465 = vcmp.eq.s32.totalorder %v1425, inf
        %vm1466 = vcmp.eq.s32.totalorder %v1426, inf
        %vm1467 = vmand %vm1465, %vm1466
        %v1468 = vsel %vm1467, %v1464, %v1462
        %v1469 = vand.u32 2147483647, %v1468
        %v1470 = vand.u32 %v1389, 2147483648
        %v1471 = vor.u32 %v1469, %v1470
        %v1472 = vand.u32 2147483647, %v1082
        %v1473 = vand.u32 2147483647, %v1396
        %v1474 = vmin.f32 %v1472, %v1473
        %v1475 = vmax.f32 %v1472, %v1473
        %v1476 = vrcp.pop %v1475
        %v1477 = vmul.f32 %v1474, %v1476
        %v1478 = vmul.f32 %v1477, %v1477
        %v1479 = vmul.f32 0.002785687, %v1478
        %v1480 = vadd.f32 %v1479, -0.015866
        %v1481 = vmul.f32 %v1480, %v1478
        %v1482 = vadd.f32 %v1481, 0.04247222
        %v1483 = vmul.f32 %v1482, %v1478
        %v1484 = vadd.f32 %v1483, -0.074975304
        %v1485 = vmul.f32 %v1484, %v1478
        %v1486 = vadd.f32 %v1485, 0.1064488
        %v1487 = vmul.f32 %v1486, %v1478
        %v1488 = vadd.f32 %v1487, -0.14207031
        %v1489 = vmul.f32 %v1488, %v1478
        %v1490 = vadd.f32 %v1489, 0.19993454
        %v1491 = vmul.f32 %v1490, %v1478
        %v1492 = vadd.f32 %v1491, -0.33333147
        %v1493 = vmul.f32 %v1492, %v1478
        %v1494 = vmul.f32 %v1493, %v1477
        %v1495 = vadd.f32 %v1494, %v1477
        %vm1496 = vcmp.gt.f32.partialorder %v1473, %v1472
        %v1497 = vsub.f32 1.5707964, %v1495
        %v1498 = vsel %vm1496, %v1497, %v1495
        %vm1499 = vcmp.lt.f32.partialorder %v1082, 0.0
        %v1500 = vsub.f32 3.1415927, %v1498
        %v1501 = vsel %vm1499, %v1500, %v1498
        %vm1502 = vcmp.lt.s32.totalorder %v1082, 0
        %v1503 = vsel %vm1502, 3.1415927, 0.0
        %vm1504 = vcmp.eq.f32.partialorder %v1396, 0.0
        %v1505 = vsel %vm1504, %v1503, %v1501
        %vm1506 = vcmp.ne.f32.partialorder %v1082, %v1082
        %vm1507 = vcmp.ne.f32.partialorder %v1396, %v1396
        %vm1508 = vmor %vm1506, %vm1507
        %v1509 = vsel %vm1508, nan, %v1505
        %vm1510 = vcmp.lt.f32.partialorder %v1082, 0.0
        %v1511 = vsel %vm1510, 2.3561945, 0.7853982
        %vm1512 = vcmp.eq.s32.totalorder %v1472, inf
        %vm1513 = vcmp.eq.s32.totalorder %v1473, inf
        %vm1514 = vmand %vm1512, %vm1513
        %v1515 = vsel %vm1514, %v1511, %v1509
        %v1516 = vand.u32 2147483647, %v1515
        %v1517 = vand.u32 %v1396, 2147483648
        %v1518 = vor.u32 %v1516, %v1517
        %v1519 = vand.u32 2147483647, %v1087
        %v1520 = vand.u32 2147483647, %v1403
        %v1521 = vmin.f32 %v1519, %v1520
        %v1522 = vmax.f32 %v1519, %v1520
        %v1523 = vrcp.pop %v1522
        %v1524 = vmul.f32 %v1521, %v1523
        %v1525 = vmul.f32 %v1524, %v1524
        %v1526 = vmul.f32 0.002785687, %v1525
        %v1527 = vadd.f32 %v1526, -0.015866
        %v1528 = vmul.f32 %v1527, %v1525
        %v1529 = vadd.f32 %v1528, 0.04247222
        %v1530 = vmul.f32 %v1529, %v1525
        %v1531 = vadd.f32 %v1530, -0.074975304
        %v1532 = vmul.f32 %v1531, %v1525
        %v1533 = vadd.f32 %v1532, 0.1064488
        %v1534 = vmul.f32 %v1533, %v1525
        %v1535 = vadd.f32 %v1534, -0.14207031
        %v1536 = vmul.f32 %v1535, %v1525
        %v1537 = vadd.f32 %v1536, 0.19993454
        %v1538 = vmul.f32 %v1537, %v1525
        %v1539 = vadd.f32 %v1538, -0.33333147
        %v1540 = vmul.f32 %v1539, %v1525
        %v1541 = vmul.f32 %v1540, %v1524
        %v1542 = vadd.f32 %v1541, %v1524
        %vm1543 = vcmp.gt.f32.partialorder %v1520, %v1519
        %v1544 = vsub.f32 1.5707964, %v1542
        %v1545 = vsel %vm1543, %v1544, %v1542
        %vm1546 = vcmp.lt.f32.partialorder %v1087, 0.0
        %v1547 = vsub.f32 3.1415927, %v1545
        %v1548 = vsel %vm1546, %v1547, %v1545
        %vm1549 = vcmp.lt.s32.totalorder %v1087, 0
        %v1550 = vsel %vm1549, 3.1415927, 0.0
        %vm1551 = vcmp.eq.f32.partialorder %v1403, 0.0
        %v1552 = vsel %vm1551, %v1550, %v1548
        %vm1553 = vcmp.ne.f32.partialorder %v1087, %v1087
        %vm1554 = vcmp.ne.f32.partialorder %v1403, %v1403
        %vm1555 = vmor %vm1553, %vm1554
        %v1556 = vsel %vm1555, nan, %v1552
        %vm1557 = vcmp.lt.f32.partialorder %v1087, 0.0
        %v1558 = vsel %vm1557, 2.3561945, 0.7853982
        %vm1559 = vcmp.eq.s32.totalorder %v1519, inf
        %vm1560 = vcmp.eq.s32.totalorder %v1520, inf
        %vm1561 = vmand %vm1559, %vm1560
        %v1562 = vsel %vm1561, %v1558, %v1556
        %v1563 = vand.u32 2147483647, %v1562
        %v1564 = vand.u32 %v1403, 2147483648
        %v1565 = vor.u32 %v1563, %v1564
        %v1566 = vand.u32 2147483647, %v1090
        %v1567 = vand.u32 2147483647, %v1410
        %v1568 = vmin.f32 %v1566, %v1567
        %v1569 = vmax.f32 %v1566, %v1567
        %v1570 = vrcp.pop %v1569
        %v1571 = vmul.f32 %v1568, %v1570
        %v1572 = vmul.f32 %v1571, %v1571
        %v1573 = vmul.f32 0.002785687, %v1572
        %v1574 = vadd.f32 %v1573, -0.015866
        %v1575 = vmul.f32 %v1574, %v1572
        %v1576 = vadd.f32 %v1575, 0.04247222
        %v1577 = vmul.f32 %v1576, %v1572
        %v1578 = vadd.f32 %v1577, -0.074975304
        %v1579 = vmul.f32 %v1578, %v1572
        %v1580 = vadd.f32 %v1579, 0.1064488
        %v1581 = vmul.f32 %v1580, %v1572
        %v1582 = vadd.f32 %v1581, -0.14207031
        %v1583 = vmul.f32 %v1582, %v1572
        %v1584 = vadd.f32 %v1583, 0.19993454
        %v1585 = vmul.f32 %v1584, %v1572
        %v1586 = vadd.f32 %v1585, -0.33333147
        %v1587 = vmul.f32 %v1586, %v1572
        %v1588 = vmul.f32 %v1587, %v1571
        %v1589 = vadd.f32 %v1588, %v1571
        %vm1590 = vcmp.gt.f32.partialorder %v1567, %v1566
        %v1591 = vsub.f32 1.5707964, %v1589
        %v1592 = vsel %vm1590, %v1591, %v1589
        %vm1593 = vcmp.lt.f32.partialorder %v1090, 0.0
        %v1594 = vsub.f32 3.1415927, %v1592
        %v1595 = vsel %vm1593, %v1594, %v1592
        %vm1596 = vcmp.lt.s32.totalorder %v1090, 0
        %v1597 = vsel %vm1596, 3.1415927, 0.0
        %vm1598 = vcmp.eq.f32.partialorder %v1410, 0.0
        %v1599 = vsel %vm1598, %v1597, %v1595
        %vm1600 = vcmp.ne.f32.partialorder %v1090, %v1090
        %vm1601 = vcmp.ne.f32.partialorder %v1410, %v1410
        %vm1602 = vmor %vm1600, %vm1601
        %v1603 = vsel %vm1602, nan, %v1599
        %vm1604 = vcmp.lt.f32.partialorder %v1090, 0.0
        %v1605 = vsel %vm1604, 2.3561945, 0.7853982
        %vm1606 = vcmp.eq.s32.totalorder %v1566, inf
        %vm1607 = vcmp.eq.s32.totalorder %v1567, inf
        %vm1608 = vmand %vm1606, %vm1607
        %v1609 = vsel %vm1608, %v1605, %v1603
        %v1610 = vand.u32 2147483647, %v1609
        %v1611 = vand.u32 %v1410, 2147483648
        %v1612 = vor.u32 %v1610, %v1611
        %v1613 = vand.u32 2147483647, %v1095
        %v1614 = vand.u32 2147483647, %v1417
        %v1615 = vmin.f32 %v1613, %v1614
        %v1616 = vmax.f32 %v1613, %v1614
        %v1617 = vrcp.pop %v1616
        %v1618 = vmul.f32 %v1615, %v1617
        %v1619 = vmul.f32 %v1618, %v1618
        %v1620 = vmul.f32 0.002785687, %v1619
        %v1621 = vadd.f32 %v1620, -0.015866
        %v1622 = vmul.f32 %v1621, %v1619
        %v1623 = vadd.f32 %v1622, 0.04247222
        %v1624 = vmul.f32 %v1623, %v1619
        %v1625 = vadd.f32 %v1624, -0.074975304
        %v1626 = vmul.f32 %v1625, %v1619
        %v1627 = vadd.f32 %v1626, 0.1064488
        %v1628 = vmul.f32 %v1627, %v1619
        %v1629 = vadd.f32 %v1628, -0.14207031
        %v1630 = vmul.f32 %v1629, %v1619
        %v1631 = vadd.f32 %v1630, 0.19993454
        %v1632 = vmul.f32 %v1631, %v1619
        %v1633 = vadd.f32 %v1632, -0.33333147
        %v1634 = vmul.f32 %v1633, %v1619
        %v1635 = vmul.f32 %v1634, %v1618
        %v1636 = vadd.f32 %v1635, %v1618
        %vm1637 = vcmp.gt.f32.partialorder %v1614, %v1613
        %v1638 = vsub.f32 1.5707964, %v1636
        %v1639 = vsel %vm1637, %v1638, %v1636
        %vm1640 = vcmp.lt.f32.partialorder %v1095, 0.0
        %v1641 = vsub.f32 3.1415927, %v1639
        %v1642 = vsel %vm1640, %v1641, %v1639
        %vm1643 = vcmp.lt.s32.totalorder %v1095, 0
        %v1644 = vsel %vm1643, 3.1415927, 0.0
        %vm1645 = vcmp.eq.f32.partialorder %v1417, 0.0
        %v1646 = vsel %vm1645, %v1644, %v1642
        %vm1647 = vcmp.ne.f32.partialorder %v1095, %v1095
        %vm1648 = vcmp.ne.f32.partialorder %v1417, %v1417
        %vm1649 = vmor %vm1647, %vm1648
        %v1650 = vsel %vm1649, nan, %v1646
        %vm1651 = vcmp.lt.f32.partialorder %v1095, 0.0
        %v1652 = vsel %vm1651, 2.3561945, 0.7853982
        %vm1653 = vcmp.eq.s32.totalorder %v1613, inf
        %vm1654 = vcmp.eq.s32.totalorder %v1614, inf
        %vm1655 = vmand %vm1653, %vm1654
        %v1656 = vsel %vm1655, %v1652, %v1650
        %v1657 = vand.u32 2147483647, %v1656
        %v1658 = vand.u32 %v1417, 2147483648
        %v1659 = vor.u32 %v1657, %v1658
        %v1660 = vand.u32 2147483647, %v1098
        %v1661 = vand.u32 2147483647, %v1424
        %v1662 = vmin.f32 %v1660, %v1661
        %v1663 = vmax.f32 %v1660, %v1661
        %v1664 = vrcp.pop %v1663
        %v1665 = vmul.f32 %v1662, %v1664
        %v1666 = vmul.f32 %v1665, %v1665
        %v1667 = vmul.f32 0.002785687, %v1666
        %v1668 = vadd.f32 %v1667, -0.015866
        %v1669 = vmul.f32 %v1668, %v1666
        %v1670 = vadd.f32 %v1669, 0.04247222
        %v1671 = vmul.f32 %v1670, %v1666
        %v1672 = vadd.f32 %v1671, -0.074975304
        %v1673 = vmul.f32 %v1672, %v1666
        %v1674 = vadd.f32 %v1673, 0.1064488
        %v1675 = vmul.f32 %v1674, %v1666
        %v1676 = vadd.f32 %v1675, -0.14207031
        %v1677 = vmul.f32 %v1676, %v1666
        %v1678 = vadd.f32 %v1677, 0.19993454
        %v1679 = vmul.f32 %v1678, %v1666
        %v1680 = vadd.f32 %v1679, -0.33333147
        %v1681 = vmul.f32 %v1680, %v1666
        %v1682 = vmul.f32 %v1681, %v1665
        %v1683 = vadd.f32 %v1682, %v1665
        %vm1684 = vcmp.gt.f32.partialorder %v1661, %v1660
        %v1685 = vsub.f32 1.5707964, %v1683
        %v1686 = vsel %vm1684, %v1685, %v1683
        %vm1687 = vcmp.lt.f32.partialorder %v1098, 0.0
        %v1688 = vsub.f32 3.1415927, %v1686
        %v1689 = vsel %vm1687, %v1688, %v1686
        %vm1690 = vcmp.lt.s32.totalorder %v1098, 0
        %v1691 = vsel %vm1690, 3.1415927, 0.0
        %vm1692 = vcmp.eq.f32.partialorder %v1424, 0.0
        %v1693 = vsel %vm1692, %v1691, %v1689
        %vm1694 = vcmp.ne.f32.partialorder %v1098, %v1098
        %vm1695 = vcmp.ne.f32.partialorder %v1424, %v1424
        %vm1696 = vmor %vm1694, %vm1695
        %v1697 = vsel %vm1696, nan, %v1693
        %vm1698 = vcmp.lt.f32.partialorder %v1098, 0.0
        %v1699 = vsel %vm1698, 2.3561945, 0.7853982
        %vm1700 = vcmp.eq.s32.totalorder %v1660, inf
        %vm1701 = vcmp.eq.s32.totalorder %v1661, inf
        %vm1702 = vmand %vm1700, %vm1701
        %v1703 = vsel %vm1702, %v1699, %v1697
        %v1704 = vand.u32 2147483647, %v1703
        %v1705 = vand.u32 %v1424, 2147483648
        %v1706 = vor.u32 %v1704, %v1705
        %v1707 = vsub.f32 0.0, %v1223
        %v1708 = vsub.f32 0.0, %v1226
        %v1709 = vsub.f32 0.0, %v1231
        %v1710 = vsub.f32 0.0, %v1234
        %v1711 = vsub.f32 0.0, %v1239
        %v1712 = vsub.f32 0.0, %v1242
        %v1713 = vand.u32 2147483647, %v1359
        %v1714 = vand.u32 2147483647, %v1707
        %v1715 = vmin.f32 %v1713, %v1714
        %v1716 = vmax.f32 %v1713, %v1714
        %v1717 = vrcp.pop %v1716
        %v1718 = vmul.f32 %v1715, %v1717
        %v1719 = vmul.f32 %v1718, %v1718
        %v1720 = vmul.f32 0.002785687, %v1719
        %v1721 = vadd.f32 %v1720, -0.015866
        %v1722 = vmul.f32 %v1721, %v1719
        %v1723 = vadd.f32 %v1722, 0.04247222
        %v1724 = vmul.f32 %v1723, %v1719
        %v1725 = vadd.f32 %v1724, -0.074975304
        %v1726 = vmul.f32 %v1725, %v1719
        %v1727 = vadd.f32 %v1726, 0.1064488
        %v1728 = vmul.f32 %v1727, %v1719
        %v1729 = vadd.f32 %v1728, -0.14207031
        %v1730 = vmul.f32 %v1729, %v1719
        %v1731 = vadd.f32 %v1730, 0.19993454
        %v1732 = vmul.f32 %v1731, %v1719
        %v1733 = vadd.f32 %v1732, -0.33333147
        %v1734 = vmul.f32 %v1733, %v1719
        %v1735 = vmul.f32 %v1734, %v1718
        %v1736 = vadd.f32 %v1735, %v1718
        %vm1737 = vcmp.gt.f32.partialorder %v1714, %v1713
        %v1738 = vsub.f32 1.5707964, %v1736
        %v1739 = vsel %vm1737, %v1738, %v1736
        %vm1740 = vcmp.lt.f32.partialorder %v1359, 0.0
        %v1741 = vsub.f32 3.1415927, %v1739
        %v1742 = vsel %vm1740, %v1741, %v1739
        %vm1743 = vcmp.lt.s32.totalorder %v1359, 0
        %v1744 = vsel %vm1743, 3.1415927, 0.0
        %vm1745 = vcmp.eq.f32.partialorder %v1707, 0.0
        %v1746 = vsel %vm1745, %v1744, %v1742
        %vm1747 = vcmp.ne.f32.partialorder %v1359, %v1359
        %vm1748 = vcmp.ne.f32.partialorder %v1707, %v1707
        %vm1749 = vmor %vm1747, %vm1748
        %v1750 = vsel %vm1749, nan, %v1746
        %vm1751 = vcmp.lt.f32.partialorder %v1359, 0.0
        %v1752 = vsel %vm1751, 2.3561945, 0.7853982
        %vm1753 = vcmp.eq.s32.totalorder %v1713, inf
        %vm1754 = vcmp.eq.s32.totalorder %v1714, inf
        %vm1755 = vmand %vm1753, %vm1754
        %v1756 = vsel %vm1755, %v1752, %v1750
        %v1757 = vand.u32 2147483647, %v1756
        %v1758 = vand.u32 %v1707, 2147483648
        %v1759 = vor.u32 %v1757, %v1758
        %v1760 = vand.u32 2147483647, %v1360
        %v1761 = vand.u32 2147483647, %v1708
        %v1762 = vmin.f32 %v1760, %v1761
        %v1763 = vmax.f32 %v1760, %v1761
        %v1764 = vrcp.pop %v1763
        %v1765 = vmul.f32 %v1762, %v1764
        %v1766 = vmul.f32 %v1765, %v1765
        %v1767 = vmul.f32 0.002785687, %v1766
        %v1768 = vadd.f32 %v1767, -0.015866
        %v1769 = vmul.f32 %v1768, %v1766
        %v1770 = vadd.f32 %v1769, 0.04247222
        %v1771 = vmul.f32 %v1770, %v1766
        %v1772 = vadd.f32 %v1771, -0.074975304
        %v1773 = vmul.f32 %v1772, %v1766
        %v1774 = vadd.f32 %v1773, 0.1064488
        %v1775 = vmul.f32 %v1774, %v1766
        %v1776 = vadd.f32 %v1775, -0.14207031
        %v1777 = vmul.f32 %v1776, %v1766
        %v1778 = vadd.f32 %v1777, 0.19993454
        %v1779 = vmul.f32 %v1778, %v1766
        %v1780 = vadd.f32 %v1779, -0.33333147
        %v1781 = vmul.f32 %v1780, %v1766
        %v1782 = vmul.f32 %v1781, %v1765
        %v1783 = vadd.f32 %v1782, %v1765
        %vm1784 = vcmp.gt.f32.partialorder %v1761, %v1760
        %v1785 = vsub.f32 1.5707964, %v1783
        %v1786 = vsel %vm1784, %v1785, %v1783
        %vm1787 = vcmp.lt.f32.partialorder %v1360, 0.0
        %v1788 = vsub.f32 3.1415927, %v1786
        %v1789 = vsel %vm1787, %v1788, %v1786
        %vm1790 = vcmp.lt.s32.totalorder %v1360, 0
        %v1791 = vsel %vm1790, 3.1415927, 0.0
        %vm1792 = vcmp.eq.f32.partialorder %v1708, 0.0
        %v1793 = vsel %vm1792, %v1791, %v1789
        %vm1794 = vcmp.ne.f32.partialorder %v1360, %v1360
        %vm1795 = vcmp.ne.f32.partialorder %v1708, %v1708
        %vm1796 = vmor %vm1794, %vm1795
        %v1797 = vsel %vm1796, nan, %v1793
        %vm1798 = vcmp.lt.f32.partialorder %v1360, 0.0
        %v1799 = vsel %vm1798, 2.3561945, 0.7853982
        %vm1800 = vcmp.eq.s32.totalorder %v1760, inf
        %vm1801 = vcmp.eq.s32.totalorder %v1761, inf
        %vm1802 = vmand %vm1800, %vm1801
        %v1803 = vsel %vm1802, %v1799, %v1797
        %v1804 = vand.u32 2147483647, %v1803
        %v1805 = vand.u32 %v1708, 2147483648
        %v1806 = vor.u32 %v1804, %v1805
        %v1807 = vand.u32 2147483647, %v1361
        %v1808 = vand.u32 2147483647, %v1709
        %v1809 = vmin.f32 %v1807, %v1808
        %v1810 = vmax.f32 %v1807, %v1808
        %v1811 = vrcp.pop %v1810
        %v1812 = vmul.f32 %v1809, %v1811
        %v1813 = vmul.f32 %v1812, %v1812
        %v1814 = vmul.f32 0.002785687, %v1813
        %v1815 = vadd.f32 %v1814, -0.015866
        %v1816 = vmul.f32 %v1815, %v1813
        %v1817 = vadd.f32 %v1816, 0.04247222
        %v1818 = vmul.f32 %v1817, %v1813
        %v1819 = vadd.f32 %v1818, -0.074975304
        %v1820 = vmul.f32 %v1819, %v1813
        %v1821 = vadd.f32 %v1820, 0.1064488
        %v1822 = vmul.f32 %v1821, %v1813
        %v1823 = vadd.f32 %v1822, -0.14207031
        %v1824 = vmul.f32 %v1823, %v1813
        %v1825 = vadd.f32 %v1824, 0.19993454
        %v1826 = vmul.f32 %v1825, %v1813
        %v1827 = vadd.f32 %v1826, -0.33333147
        %v1828 = vmul.f32 %v1827, %v1813
        %v1829 = vmul.f32 %v1828, %v1812
        %v1830 = vadd.f32 %v1829, %v1812
        %vm1831 = vcmp.gt.f32.partialorder %v1808, %v1807
        %v1832 = vsub.f32 1.5707964, %v1830
        %v1833 = vsel %vm1831, %v1832, %v1830
        %vm1834 = vcmp.lt.f32.partialorder %v1361, 0.0
        %v1835 = vsub.f32 3.1415927, %v1833
        %v1836 = vsel %vm1834, %v1835, %v1833
        %vm1837 = vcmp.lt.s32.totalorder %v1361, 0
        %v1838 = vsel %vm1837, 3.1415927, 0.0
        %vm1839 = vcmp.eq.f32.partialorder %v1709, 0.0
        %v1840 = vsel %vm1839, %v1838, %v1836
        %vm1841 = vcmp.ne.f32.partialorder %v1361, %v1361
        %vm1842 = vcmp.ne.f32.partialorder %v1709, %v1709
        %vm1843 = vmor %vm1841, %vm1842
        %v1844 = vsel %vm1843, nan, %v1840
        %vm1845 = vcmp.lt.f32.partialorder %v1361, 0.0
        %v1846 = vsel %vm1845, 2.3561945, 0.7853982
        %vm1847 = vcmp.eq.s32.totalorder %v1807, inf
        %vm1848 = vcmp.eq.s32.totalorder %v1808, inf
        %vm1849 = vmand %vm1847, %vm1848
        %v1850 = vsel %vm1849, %v1846, %v1844
        %v1851 = vand.u32 2147483647, %v1850
        %v1852 = vand.u32 %v1709, 2147483648
        %v1853 = vor.u32 %v1851, %v1852
        %v1854 = vand.u32 2147483647, %v1362
        %v1855 = vand.u32 2147483647, %v1710
        %v1856 = vmin.f32 %v1854, %v1855
        %v1857 = vmax.f32 %v1854, %v1855
        %v1858 = vrcp.pop %v1857
        %v1859 = vmul.f32 %v1856, %v1858
        %v1860 = vmul.f32 %v1859, %v1859
        %v1861 = vmul.f32 0.002785687, %v1860
        %v1862 = vadd.f32 %v1861, -0.015866
        %v1863 = vmul.f32 %v1862, %v1860
        %v1864 = vadd.f32 %v1863, 0.04247222
        %v1865 = vmul.f32 %v1864, %v1860
        %v1866 = vadd.f32 %v1865, -0.074975304
        %v1867 = vmul.f32 %v1866, %v1860
        %v1868 = vadd.f32 %v1867, 0.1064488
        %v1869 = vmul.f32 %v1868, %v1860
        %v1870 = vadd.f32 %v1869, -0.14207031
        %v1871 = vmul.f32 %v1870, %v1860
        %v1872 = vadd.f32 %v1871, 0.19993454
        %v1873 = vmul.f32 %v1872, %v1860
        %v1874 = vadd.f32 %v1873, -0.33333147
        %v1875 = vmul.f32 %v1874, %v1860
        %v1876 = vmul.f32 %v1875, %v1859
        %v1877 = vadd.f32 %v1876, %v1859
        %vm1878 = vcmp.gt.f32.partialorder %v1855, %v1854
        %v1879 = vsub.f32 1.5707964, %v1877
        %v1880 = vsel %vm1878, %v1879, %v1877
        %vm1881 = vcmp.lt.f32.partialorder %v1362, 0.0
        %v1882 = vsub.f32 3.1415927, %v1880
        %v1883 = vsel %vm1881, %v1882, %v1880
        %vm1884 = vcmp.lt.s32.totalorder %v1362, 0
        %v1885 = vsel %vm1884, 3.1415927, 0.0
        %vm1886 = vcmp.eq.f32.partialorder %v1710, 0.0
        %v1887 = vsel %vm1886, %v1885, %v1883
        %vm1888 = vcmp.ne.f32.partialorder %v1362, %v1362
        %vm1889 = vcmp.ne.f32.partialorder %v1710, %v1710
        %vm1890 = vmor %vm1888, %vm1889
        %v1891 = vsel %vm1890, nan, %v1887
        %vm1892 = vcmp.lt.f32.partialorder %v1362, 0.0
        %v1893 = vsel %vm1892, 2.3561945, 0.7853982
        %vm1894 = vcmp.eq.s32.totalorder %v1854, inf
        %vm1895 = vcmp.eq.s32.totalorder %v1855, inf
        %vm1896 = vmand %vm1894, %vm1895
        %v1897 = vsel %vm1896, %v1893, %v1891
        %v1898 = vand.u32 2147483647, %v1897
        %v1899 = vand.u32 %v1710, 2147483648
        %v1900 = vor.u32 %v1898, %v1899
        %v1901 = vand.u32 2147483647, %v1363
        %v1902 = vand.u32 2147483647, %v1711
        %v1903 = vmin.f32 %v1901, %v1902
        %v1904 = vmax.f32 %v1901, %v1902
        %v1905 = vrcp.pop %v1904
        %v1906 = vmul.f32 %v1903, %v1905
        %v1907 = vmul.f32 %v1906, %v1906
        %v1908 = vmul.f32 0.002785687, %v1907
        %v1909 = vadd.f32 %v1908, -0.015866
        %v1910 = vmul.f32 %v1909, %v1907
        %v1911 = vadd.f32 %v1910, 0.04247222
        %v1912 = vmul.f32 %v1911, %v1907
        %v1913 = vadd.f32 %v1912, -0.074975304
        %v1914 = vmul.f32 %v1913, %v1907
        %v1915 = vadd.f32 %v1914, 0.1064488
        %v1916 = vmul.f32 %v1915, %v1907
        %v1917 = vadd.f32 %v1916, -0.14207031
        %v1918 = vmul.f32 %v1917, %v1907
        %v1919 = vadd.f32 %v1918, 0.19993454
        %v1920 = vmul.f32 %v1919, %v1907
        %v1921 = vadd.f32 %v1920, -0.33333147
        %v1922 = vmul.f32 %v1921, %v1907
        %v1923 = vmul.f32 %v1922, %v1906
        %v1924 = vadd.f32 %v1923, %v1906
        %vm1925 = vcmp.gt.f32.partialorder %v1902, %v1901
        %v1926 = vsub.f32 1.5707964, %v1924
        %v1927 = vsel %vm1925, %v1926, %v1924
        %vm1928 = vcmp.lt.f32.partialorder %v1363, 0.0
        %v1929 = vsub.f32 3.1415927, %v1927
        %v1930 = vsel %vm1928, %v1929, %v1927
        %vm1931 = vcmp.lt.s32.totalorder %v1363, 0
        %v1932 = vsel %vm1931, 3.1415927, 0.0
        %vm1933 = vcmp.eq.f32.partialorder %v1711, 0.0
        %v1934 = vsel %vm1933, %v1932, %v1930
        %vm1935 = vcmp.ne.f32.partialorder %v1363, %v1363
        %vm1936 = vcmp.ne.f32.partialorder %v1711, %v1711
        %vm1937 = vmor %vm1935, %vm1936
        %v1938 = vsel %vm1937, nan, %v1934
        %vm1939 = vcmp.lt.f32.partialorder %v1363, 0.0
        %v1940 = vsel %vm1939, 2.3561945, 0.7853982
        %vm1941 = vcmp.eq.s32.totalorder %v1901, inf
        %vm1942 = vcmp.eq.s32.totalorder %v1902, inf
        %vm1943 = vmand %vm1941, %vm1942
        %v1944 = vsel %vm1943, %v1940, %v1938
        %v1945 = vand.u32 2147483647, %v1944
        %v1946 = vand.u32 %v1711, 2147483648
        %v1947 = vor.u32 %v1945, %v1946
        %v1948 = vand.u32 2147483647, %v1364
        %v1949 = vand.u32 2147483647, %v1712
        %v1950 = vmin.f32 %v1948, %v1949
        %v1951 = vmax.f32 %v1948, %v1949
        %v1952 = vrcp.pop %v1951
        %v1953 = vmul.f32 %v1950, %v1952
        %v1954 = vmul.f32 %v1953, %v1953
        %v1955 = vmul.f32 0.002785687, %v1954
        %v1956 = vadd.f32 %v1955, -0.015866
        %v1957 = vmul.f32 %v1956, %v1954
        %v1958 = vadd.f32 %v1957, 0.04247222
        %v1959 = vmul.f32 %v1958, %v1954
        %v1960 = vadd.f32 %v1959, -0.074975304
        %v1961 = vmul.f32 %v1960, %v1954
        %v1962 = vadd.f32 %v1961, 0.1064488
        %v1963 = vmul.f32 %v1962, %v1954
        %v1964 = vadd.f32 %v1963, -0.14207031
        %v1965 = vmul.f32 %v1964, %v1954
        %v1966 = vadd.f32 %v1965, 0.19993454
        %v1967 = vmul.f32 %v1966, %v1954
        %v1968 = vadd.f32 %v1967, -0.33333147
        %v1969 = vmul.f32 %v1968, %v1954
        %v1970 = vmul.f32 %v1969, %v1953
        %v1971 = vadd.f32 %v1970, %v1953
        %vm1972 = vcmp.gt.f32.partialorder %v1949, %v1948
        %v1973 = vsub.f32 1.5707964, %v1971
        %v1974 = vsel %vm1972, %v1973, %v1971
        %vm1975 = vcmp.lt.f32.partialorder %v1364, 0.0
        %v1976 = vsub.f32 3.1415927, %v1974
        %v1977 = vsel %vm1975, %v1976, %v1974
        %vm1978 = vcmp.lt.s32.totalorder %v1364, 0
        %v1979 = vsel %vm1978, 3.1415927, 0.0
        %vm1980 = vcmp.eq.f32.partialorder %v1712, 0.0
        %v1981 = vsel %vm1980, %v1979, %v1977
        %vm1982 = vcmp.ne.f32.partialorder %v1364, %v1364
        %vm1983 = vcmp.ne.f32.partialorder %v1712, %v1712
        %vm1984 = vmor %vm1982, %vm1983
        %v1985 = vsel %vm1984, nan, %v1981
        %vm1986 = vcmp.lt.f32.partialorder %v1364, 0.0
        %v1987 = vsel %vm1986, 2.3561945, 0.7853982
        %vm1988 = vcmp.eq.s32.totalorder %v1948, inf
        %vm1989 = vcmp.eq.s32.totalorder %v1949, inf
        %vm1990 = vmand %vm1988, %vm1989
        %v1991 = vsel %vm1990, %v1987, %v1985
        %v1992 = vand.u32 2147483647, %v1991
        %v1993 = vand.u32 %v1712, 2147483648
        %v1994 = vor.u32 %v1992, %v1993
        %1997 = vrot.lane.b32.xlu0 %v1565, 16
        %v1998 = vpop.permute.xlu0 %1997
        %1999 = vrot.lane.b32.xlu0 %v1612, 16
        %v2000 = vpop.permute.xlu0 %1999
        %2005 = vrot.lane.b32.xlu0 %v1659, 32
        %v2006 = vpop.permute.xlu0 %2005
        %2007 = vrot.lane.b32.xlu0 %v1706, 32
        %v2008 = vpop.permute.xlu0 %2007
        %v2011 = vsel %vm439, %v1471, %v1998
        %v2012 = vsel %vm439, %v1518, %v2000
        %v2013 = vsel %vm735, %v2011, %v2006
        %v2014 = vsel %vm735, %v2012, %v2008
        %2015 = vst.msk [vmem:[%s410] sm:$0xff] %vm779, %v2013
        %2016 = vst.msk [vmem:[%s410 + $0x8] sm:$0xff] %vm779, %v2014
        %2019 = vrot.lane.b32.xlu0 %v1853, 16
        %v2020 = vpop.permute.xlu0 %2019
        %2021 = vrot.lane.b32.xlu0 %v1900, 16
        %v2022 = vpop.permute.xlu0 %2021
        %2027 = vrot.lane.b32.xlu0 %v1947, 32
        %v2028 = vpop.permute.xlu0 %2027
        %2029 = vrot.lane.b32.xlu0 %v1994, 32
        %v2030 = vpop.permute.xlu0 %2029
        %v2033 = vsel %vm439, %v1759, %v2020
        %v2034 = vsel %vm439, %v1806, %v2022
        %v2035 = vsel %vm735, %v2033, %v2028
        %v2036 = vsel %vm735, %v2034, %v2030
        %2039 = vrot.lane.b32.xlu0 %v2035, 48
        %v2040 = vpop.permute.xlu0 %2039
        %2041 = vrot.lane.b32.xlu0 %v2036, 48
        %v2042 = vpop.permute.xlu0 %2041
        %vm2045 = vcmask 785792
        %2046 = vst.msk [vmem:[%s410] sm:$0xff] %vm2045, %v2040
        %2047 = vst.msk [vmem:[%s410 + $0x8] sm:$0xff] %vm2045, %v2042
        %s2048 = sand.u32 %s209, 1
        %s2049 = scalar_lea.sflag [#allocation4], %s2048
        %s2050 = sand.u32 %s209, 1
        %s2051 = smul.addr %s2050, 16
        %s2052 = scalar_lea.vmem [#allocation14], %s2051
        // Predicated region
        $region81: #{tpu_custom_call.1} parent=51 // pred_check
          %p2053 = pneg %p219
        $region82: #{tpu_custom_call.1} parent=51 // pred_check_branch
          %2055 = sbr.rel (%p2053) target = $region84
        $region83: #{tpu_custom_call.1} parent=51 // pred_region
          %s2057 = ssub.s32 256, 256
          %2058 = vsyncadd %s2049, %s2057
          %s2059 = smul.addr %s28, 2
          %s2060 = smul.addr %s2059, 128
          %s2061 = scalar_lea.hbm %s8, %s2060
          %s2062 = sshll.u32 %s2052, 4
          %s2063 = int_to_ptr.vmem [resolvable:$true] %s2062
          %2068 = dma.vmem_to_hbm [thread:$0]  %s2063, 256, %s2061, %s2049, 128, 128, 8
        $region84: #{tpu_custom_call.1} parent=51 // pred_fallthru
          _
      $region52: #{tpu_custom_call.1} parent=5 // pred_fallthru
        _
      %p2069 = scmp.le.s32.totalorder 2, %s23
      // Predicated region
      $region85: #{tpu_custom_call.1} parent=5 // pred_check
        %p2070 = pneg %p2069
      $region86: #{tpu_custom_call.1} parent=5 // pred_check_branch
        %2072 = sbr.rel (%p2070) target = $region88
      $region87: #{tpu_custom_call.1} parent=5 // pred_region
        %s2073 = ssub.s32 %s23, 2
        // Predicated region
        $region89: #{tpu_custom_call.1} parent=87 // pred_check
          %p2074 = pneg %p225
        $region90: #{tpu_custom_call.1} parent=87 // pred_check_branch
          %2076 = sbr.rel (%p2074) target = $region92
        $region91: #{tpu_custom_call.1} parent=87 // pred_region
          %s2077 = sand.u32 %s210, 1
          %s2078 = scalar_lea.sflag [#allocation4], %s2077
          %s2079 = sand.u32 %s210, 1
          %s2080 = smul.addr %s2079, 16
          %s2081 = scalar_lea.vmem [#allocation14], %s2080
          %2082 = dma.done %s2078, 256
        $region92: #{tpu_custom_call.1} parent=87 // pred_fallthru
          _
      $region88: #{tpu_custom_call.1} parent=5 // pred_fallthru
        _
    $region6: #{tpu_custom_call.1} parent=1 // loop_footer
      %s27 = sadd.s32 1, %s23
    $region7: #{tpu_custom_call.1} parent=1 // loop_footer_branch
      %22 = sbr.rel target = $region3
    $region8: #{tpu_custom_call.1} parent=1 // loop_exit
      _
    %2083 = vsyncpa [#allocation3], 1
    %s2084 = scalar_lea.sflag [#allocation3], 1
    %2085 = vsyncpa %s2084, 1
    %2086 = vsyncpa [#allocation6], 1
    %2087 = vsyncpa [#allocation9], 1
    %2088 = vsyncpa [#allocation12], 1
    %2089 = vsyncpa [#allocation4], 1
    %s2090 = scalar_lea.sflag [#allocation4], 1
    %2091 = vsyncpa %s2090, 1

// kernel: tpu_custom_call.1
$region0: #{tpu_custom_call.1}
  #allocation0 [shape = 'u32[]', space=smem, size = 0x4, offset = 0x4, fixed_abs, tag = 'smem constant byte address 0x4 - core index']
  #allocation1 [shape = 'u32[144,128]{1,0:T(1,128)}', space=vmem, size = 0x12000, scoped, tag = 'internal scratch']
  %s0 = inlined_call_operand.hbm [shape: bf16[2,16,16], index: 0, kind: input, shape index: {}]
  %s1 = inlined_call_operand.hbm [shape: bf16[16,16], index: 1, kind: input, shape index: {}]
  %s2 = inlined_call_operand.hbm [shape: bf16[16,16], index: 2, kind: input, shape index: {}]
  %s3 = inlined_call_operand.hbm [shape: bf16[16,16], index: 3, kind: input, shape index: {}]
  %s4 = inlined_call_operand.hbm [shape: bf16[16,16], index: 4, kind: input, shape index: {}]
  %s5 = inlined_call_operand.vmem [shape: f32[16,48], index: 5, kind: input, shape index: {}]
  %s6 = inlined_call_operand.hbm [shape: f32[16,48], index: 6, kind: input, shape index: {}]
  %s7 = inlined_call_operand.hbm [shape: f32[16,48], index: 7, kind: input, shape index: {}]
  %s8 = inlined_call_operand.hbm [shape: f32[2,16,96], index: 8, kind: output, shape index: {}]
  %s9 = sld [smem:[#allocation0]]
  $region93: #{tpu_custom_call.1} parent=0
    _
  %s11 = ssub.s32 1, %s9
  %s12 = scalar_select 0, %s11, %s9
  $region1: #{tpu_custom_call.1} parent=0
    #allocation2 [shape = 'u8[8192]{0}', space=vmem, size = 0x2000, scoped, tag = 'input window, operand 0']
    #allocation3 [shape = 's32[2]{0}', space=sflag, size = 0x8, scoped, tag = 'scoped memory for tpu_custom_call.1']
    #allocation4 [shape = 's32[2]{0}', space=sflag, size = 0x8, scoped, tag = 'scoped memory for tpu_custom_call.1']
    #allocation5 [shape = 'u8[4096]{0}', space=vmem, size = 0x1000, scoped, tag = 'input window, operand 1, single buffered']
    #allocation6 [shape = 's32[1]{0}', space=sflag, size = 0x4, scoped, tag = 'scoped memory for tpu_custom_call.1']
    #allocation7 [shape = 'u8[4096]{0}', space=vmem, size = 0x1000, scoped, tag = 'input window, operand 2, single buffered']
    #allocation8 [shape = 'u8[4096]{0}', space=vmem, size = 0x1000, scoped, tag = 'input window, operand 3, single buffered']
    #allocation9 [shape = 's32[1]{0}', space=sflag, size = 0x4, scoped, tag = 'scoped memory for tpu_custom_call.1']
    #allocation10 [shape = 'u8[4096]{0}', space=vmem, size = 0x1000, scoped, tag = 'input window, operand 4, single buffered']
    #allocation11 [shape = 'u8[8192]{0}', space=vmem, size = 0x2000, scoped, tag = 'input window, operand 6, single buffered']
    #allocation12 [shape = 's32[1]{0}', space=sflag, size = 0x4, scoped, tag = 'scoped memory for tpu_custom_call.1']
    #allocation13 [shape = 'u8[8192]{0}', space=vmem, size = 0x2000, scoped, tag = 'input window, operand 7, single buffered']
    #allocation14 [shape = 'u8[16384]{0}', space=vmem, size = 0x4000, scoped, tag = 'output window, operand 0']
    %13 = vsyncpa [#allocation3], 0
    %s14 = scalar_lea.sflag [#allocation3], 1
    %15 = vsyncpa %s14, 0
    %16 = vsyncpa [#allocation6], 0
    %17 = vsyncpa [#allocation9], 0
    %18 = vsyncpa [#allocation12], 0
    %19 = vsyncpa [#allocation4], 0
    %s20 = scalar_lea.sflag [#allocation4], 1
    %21 = vsyncpa %s20, 0
    loop: start=0, step=1, limit=4
    $region2: #{tpu_custom_call.1} parent=1 // loop_pre_header
      _
    $region3: #{tpu_custom_call.1} parent=1 // loop_header
      %s23 = sphi 0, %s27
      %p24 = scmp.ge.s32.totalorder %s23, 4
      %s33 = sphi 0, %s35
      %s36 = sphi 0, %s33
      %s37 = sphi 0, %s36
      %s53 = sphi 0, %s37
      %s57 = sphi 0, %s57
      %s59 = sphi 0, %s57
      %s60 = sphi 0, %s59
      %s74 = sphi 0, %s60
      %s78 = sphi 0, %s78
      %s80 = sphi 0, %s78
      %s81 = sphi 0, %s80
      %s95 = sphi 0, %s81
      %s99 = sphi 0, %s99
      %s101 = sphi 0, %s99
      %s102 = sphi 0, %s101
      %s116 = sphi 0, %s102
      %s120 = sphi 0, %s120
      %s122 = sphi 0, %s120
      %s123 = sphi 0, %s122
      %s137 = sphi 0, %s123
      %s141 = sphi 0, %s141
      %s143 = sphi 0, %s141
      %s144 = sphi 0, %s143
      %s158 = sphi 0, %s144
      %s162 = sphi 0, %s162
      %s164 = sphi 0, %s162
      %s165 = sphi 0, %s164
      %s179 = sphi 0, %s165
      %s183 = sphi 0, %s183
      %s185 = sphi 0, %s183
      %s186 = sphi 0, %s185
      %s200 = sphi 0, %s186
      %s206 = sphi 0, %s208
      %s209 = sphi 0, %s206
      %s210 = sphi 0, %s209
      %s226 = sphi 0, %s210
    $region4: #{tpu_custom_call.1} parent=1 // loop_header_branch
      %26 = sbr.rel (%p24) target = $region8
    $region5: #{tpu_custom_call.1} parent=1 // loop_body
      %s28 = ssub.s32 %s23, 1
      %s29 = ssub.s32 %s23, 2
      %s30 = sadd.s32 %s23, 1
      %s31 = ssub.s32 %s23, %s30
      %p32 = scmp.eq.s32.totalorder %s31, 0
      %s34 = sadd.s32 %s33, 1
      %s35 = scalar_select %p32, %s33, %s34
      %p38 = pneg %p32
      %p39 = scmp.eq.s32.totalorder %s23, 1
      %p40 = por %p38, %p39
      %p41 = scmp.ne.s32.totalorder %s33, %s36
      %p42 = scmp.eq.s32.totalorder %s23, 0
      %p43 = por %p41, %p42
      %p44 = scmp.ne.s32.totalorder %s33, %s36
      %p45 = scmp.eq.s32.totalorder %s28, 1
      %p46 = por %p44, %p45
      %p47 = scmp.ne.s32.totalorder %s36, %s37
      %p48 = scmp.eq.s32.totalorder %s28, 0
      %p49 = por %p47, %p48
      %p50 = scmp.ne.s32.totalorder %s36, %s37
      %p51 = scmp.eq.s32.totalorder %s29, 1
      %p52 = por %p50, %p51
      %p54 = scmp.ne.s32.totalorder %s37, %s53
      %p55 = scmp.eq.s32.totalorder %s29, 0
      %p56 = por %p54, %p55
      %s58 = sadd.s32 %s57, 1
      %p61 = scmp.eq.s32.totalorder %s23, 1
      %p62 = scmp.ne.s32.totalorder %s57, %s59
      %p63 = scmp.eq.s32.totalorder %s23, 0
      %p64 = por %p62, %p63
      %p65 = scmp.ne.s32.totalorder %s57, %s59
      %p66 = scmp.eq.s32.totalorder %s28, 1
      %p67 = por %p65, %p66
      %p68 = scmp.ne.s32.totalorder %s59, %s60
      %p69 = scmp.eq.s32.totalorder %s28, 0
      %p70 = por %p68, %p69
      %p71 = scmp.ne.s32.totalorder %s59, %s60
      %p72 = scmp.eq.s32.totalorder %s29, 1
      %p73 = por %p71, %p72
      %p75 = scmp.ne.s32.totalorder %s60, %s74
      %p76 = scmp.eq.s32.totalorder %s29, 0
      %p77 = por %p75, %p76
      %s79 = sadd.s32 %s78, 1
      %p82 = scmp.eq.s32.totalorder %s23, 1
      %p83 = scmp.ne.s32.totalorder %s78, %s80
      %p84 = scmp.eq.s32.totalorder %s23, 0
      %p85 = por %p83, %p84
      %p86 = scmp.ne.s32.totalorder %s78, %s80
      %p87 = scmp.eq.s32.totalorder %s28, 1
      %p88 = por %p86, %p87
      %p89 = scmp.ne.s32.totalorder %s80, %s81
      %p90 = scmp.eq.s32.totalorder %s28, 0
      %p91 = por %p89, %p90
      %p92 = scmp.ne.s32.totalorder %s80, %s81
      %p93 = scmp.eq.s32.totalorder %s29, 1
      %p94 = por %p92, %p93
      %p96 = scmp.ne.s32.totalorder %s81, %s95
      %p97 = scmp.eq.s32.totalorder %s29, 0
      %p98 = por %p96, %p97
      %s100 = sadd.s32 %s99, 1
      %p103 = scmp.eq.s32.totalorder %s23, 1
      %p104 = scmp.ne.s32.totalorder %s99, %s101
      %p105 = scmp.eq.s32.totalorder %s23, 0
      %p106 = por %p104, %p105
      %p107 = scmp.ne.s32.totalorder %s99, %s101
      %p108 = scmp.eq.s32.totalorder %s28, 1
      %p109 = por %p107, %p108
      %p110 = scmp.ne.s32.totalorder %s101, %s102
      %p111 = scmp.eq.s32.totalorder %s28, 0
      %p112 = por %p110, %p111
      %p113 = scmp.ne.s32.totalorder %s101, %s102
      %p114 = scmp.eq.s32.totalorder %s29, 1
      %p115 = por %p113, %p114
      %p117 = scmp.ne.s32.totalorder %s102, %s116
      %p118 = scmp.eq.s32.totalorder %s29, 0
      %p119 = por %p117, %p118
      %s121 = sadd.s32 %s120, 1
      %p124 = scmp.eq.s32.totalorder %s23, 1
      %p125 = scmp.ne.s32.totalorder %s120, %s122
      %p126 = scmp.eq.s32.totalorder %s23, 0
      %p127 = por %p125, %p126
      %p128 = scmp.ne.s32.totalorder %s120, %s122
      %p129 = scmp.eq.s32.totalorder %s28, 1
      %p130 = por %p128, %p129
      %p131 = scmp.ne.s32.totalorder %s122, %s123
      %p132 = scmp.eq.s32.totalorder %s28, 0
      %p133 = por %p131, %p132
      %p134 = scmp.ne.s32.totalorder %s122, %s123
      %p135 = scmp.eq.s32.totalorder %s29, 1
      %p136 = por %p134, %p135
      %p138 = scmp.ne.s32.totalorder %s123, %s137
      %p139 = scmp.eq.s32.totalorder %s29, 0
      %p140 = por %p138, %p139
      %s142 = sadd.s32 %s141, 1
      %p145 = scmp.eq.s32.totalorder %s23, 1
      %p146 = scmp.ne.s32.totalorder %s141, %s143
      %p147 = scmp.eq.s32.totalorder %s23, 0
      %p148 = por %p146, %p147
      %p149 = scmp.ne.s32.totalorder %s141, %s143
      %p150 = scmp.eq.s32.totalorder %s28, 1
      %p151 = por %p149, %p150
      %p152 = scmp.ne.s32.totalorder %s143, %s144
      %p153 = scmp.eq.s32.totalorder %s28, 0
      %p154 = por %p152, %p153
      %p155 = scmp.ne.s32.totalorder %s143, %s144
      %p156 = scmp.eq.s32.totalorder %s29, 1
      %p157 = por %p155, %p156
      %p159 = scmp.ne.s32.totalorder %s144, %s158
      %p160 = scmp.eq.s32.totalorder %s29, 0
      %p161 = por %p159, %p160
      %s163 = sadd.s32 %s162, 1
      %p166 = scmp.eq.s32.totalorder %s23, 1
      %p167 = scmp.ne.s32.totalorder %s162, %s164
      %p168 = scmp.eq.s32.totalorder %s23, 0
      %p169 = por %p167, %p168
      %p170 = scmp.ne.s32.totalorder %s162, %s164
      %p171 = scmp.eq.s32.totalorder %s28, 1
      %p172 = por %p170, %p171
      %p173 = scmp.ne.s32.totalorder %s164, %s165
      %p174 = scmp.eq.s32.totalorder %s28, 0
      %p175 = por %p173, %p174
      %p176 = scmp.ne.s32.totalorder %s164, %s165
      %p177 = scmp.eq.s32.totalorder %s29, 1
      %p178 = por %p176, %p177
      %p180 = scmp.ne.s32.totalorder %s165, %s179
      %p181 = scmp.eq.s32.totalorder %s29, 0
      %p182 = por %p180, %p181
      %s184 = sadd.s32 %s183, 1
      %p187 = scmp.eq.s32.totalorder %s23, 1
      %p188 = scmp.ne.s32.totalorder %s183, %s185
      %p189 = scmp.eq.s32.totalorder %s23, 0
      %p190 = por %p188, %p189
      %p191 = scmp.ne.s32.totalorder %s183, %s185
      %p192 = scmp.eq.s32.totalorder %s28, 1
      %p193 = por %p191, %p192
      %p194 = scmp.ne.s32.totalorder %s185, %s186
      %p195 = scmp.eq.s32.totalorder %s28, 0
      %p196 = por %p194, %p195
      %p197 = scmp.ne.s32.totalorder %s185, %s186
      %p198 = scmp.eq.s32.totalorder %s29, 1
      %p199 = por %p197, %p198
      %p201 = scmp.ne.s32.totalorder %s186, %s200
      %p202 = scmp.eq.s32.totalorder %s29, 0
      %p203 = por %p201, %p202
      %s204 = ssub.s32 %s23, %s30
      %p205 = scmp.eq.s32.totalorder %s204, 0
      %s207 = sadd.s32 %s206, 1
      %s208 = scalar_select %p205, %s206, %s207
      %p211 = pneg %p205
      %p212 = scmp.eq.s32.totalorder %s23, 1
      %p213 = por %p211, %p212
      %p214 = scmp.ne.s32.totalorder %s206, %s209
      %p215 = scmp.eq.s32.totalorder %s23, 0
      %p216 = por %p214, %p215
      %p217 = scmp.ne.s32.totalorder %s206, %s209
      %p218 = scmp.eq.s32.totalorder %s28, 1
      %p219 = por %p217, %p218
      %p220 = scmp.ne.s32.totalorder %s209, %s210
      %p221 = scmp.eq.s32.totalorder %s28, 0
      %p222 = por %p220, %p221
      %p223 = scmp.ne.s32.totalorder %s209, %s210
      %p224 = scmp.eq.s32.totalorder %s29, 1
      %p225 = por %p223, %p224
      %p227 = scmp.ne.s32.totalorder %s210, %s226
      %p228 = scmp.eq.s32.totalorder %s29, 0
      %p229 = por %p227, %p228
      %p230 = scmp.le.s32.totalorder 1, %s23
      %p231 = scmp.lt.s32.totalorder %s23, 3
      %p232 = pnand %p230, %p231
      %p233 = pneg %p232
      // Predicated region
      $region9: #{tpu_custom_call.1} parent=5 // pred_check
        _
      $region10: #{tpu_custom_call.1} parent=5 // pred_check_branch
        %235 = sbr.rel (%p232) target = $region12
      $region11: #{tpu_custom_call.1} parent=5 // pred_region
        %s236 = ssub.s32 %s23, 1
        // Predicated region
        $region13: #{tpu_custom_call.1} parent=11 // pred_check
          %p237 = pneg %p70
        $region14: #{tpu_custom_call.1} parent=11 // pred_check_branch
          %239 = sbr.rel (%p237) target = $region16
        $region15: #{tpu_custom_call.1} parent=11 // pred_region
          %s241 = ssub.s32 128, 128
          %242 = vsyncadd [#allocation6], %s241
          %s243 = sshll.u32 [#allocation5], 4
          %s244 = int_to_ptr.vmem [resolvable:$true] %s243
          %249 = dma.hbm_to_vmem [thread:$0]  %s1, 128, %s244, [#allocation6], 64, 64, 4
        $region16: #{tpu_custom_call.1} parent=11 // pred_fallthru
          _
        // Predicated region
        $region17: #{tpu_custom_call.1} parent=11 // pred_check
          %p250 = pneg %p91
        $region18: #{tpu_custom_call.1} parent=11 // pred_check_branch
          %252 = sbr.rel (%p250) target = $region20
        $region19: #{tpu_custom_call.1} parent=11 // pred_region
          %s254 = ssub.s32 128, 128
          %255 = vsyncadd [#allocation6], %s254
          %s256 = sshll.u32 [#allocation7], 4
          %s257 = int_to_ptr.vmem [resolvable:$true] %s256
          %262 = dma.hbm_to_vmem [thread:$0]  %s2, 128, %s257, [#allocation6], 64, 64, 4
        $region20: #{tpu_custom_call.1} parent=11 // pred_fallthru
          _
        // Predicated region
        $region21: #{tpu_custom_call.1} parent=11 // pred_check
          %p263 = pneg %p112
        $region22: #{tpu_custom_call.1} parent=11 // pred_check_branch
          %265 = sbr.rel (%p263) target = $region24
        $region23: #{tpu_custom_call.1} parent=11 // pred_region
          %s267 = ssub.s32 128, 128
          %268 = vsyncadd [#allocation9], %s267
          %s269 = sshll.u32 [#allocation8], 4
          %s270 = int_to_ptr.vmem [resolvable:$true] %s269
          %275 = dma.hbm_to_vmem [thread:$0]  %s3, 128, %s270, [#allocation9], 64, 64, 4
        $region24: #{tpu_custom_call.1} parent=11 // pred_fallthru
          _
        // Predicated region
        $region25: #{tpu_custom_call.1} parent=11 // pred_check
          %p276 = pneg %p133
        $region26: #{tpu_custom_call.1} parent=11 // pred_check_branch
          %278 = sbr.rel (%p276) target = $region28
        $region27: #{tpu_custom_call.1} parent=11 // pred_region
          %s280 = ssub.s32 128, 128
          %281 = vsyncadd [#allocation9], %s280
          %s282 = sshll.u32 [#allocation10], 4
          %s283 = int_to_ptr.vmem [resolvable:$true] %s282
          %288 = dma.hbm_to_vmem [thread:$0]  %s4, 128, %s283, [#allocation9], 64, 64, 4
        $region28: #{tpu_custom_call.1} parent=11 // pred_fallthru
          _
        // Predicated region
        $region29: #{tpu_custom_call.1} parent=11 // pred_check
          %p289 = pneg %p154
        $region30: #{tpu_custom_call.1} parent=11 // pred_check_branch
          %291 = sbr.rel (%p289) target = $region32
        $region31: #{tpu_custom_call.1} parent=11 // pred_region
          _
        $region32: #{tpu_custom_call.1} parent=11 // pred_fallthru
          _
        // Predicated region
        $region33: #{tpu_custom_call.1} parent=11 // pred_check
          %p292 = pneg %p175
        $region34: #{tpu_custom_call.1} parent=11 // pred_check_branch
          %294 = sbr.rel (%p292) target = $region36
        $region35: #{tpu_custom_call.1} parent=11 // pred_region
          %s296 = ssub.s32 256, 256
          %297 = vsyncadd [#allocation12], %s296
          %s298 = sshll.u32 [#allocation11], 4
          %s299 = int_to_ptr.vmem [resolvable:$true] %s298
          %304 = dma.hbm_to_vmem [thread:$0]  %s6, 256, %s299, [#allocation12], 128, 128, 8
        $region36: #{tpu_custom_call.1} parent=11 // pred_fallthru
          _
        // Predicated region
        $region37: #{tpu_custom_call.1} parent=11 // pred_check
          %p305 = pneg %p196
        $region38: #{tpu_custom_call.1} parent=11 // pred_check_branch
          %307 = sbr.rel (%p305) target = $region40
        $region39: #{tpu_custom_call.1} parent=11 // pred_region
          %s309 = ssub.s32 256, 256
          %310 = vsyncadd [#allocation12], %s309
          %s311 = sshll.u32 [#allocation13], 4
          %s312 = int_to_ptr.vmem [resolvable:$true] %s311
          %317 = dma.hbm_to_vmem [thread:$0]  %s7, 256, %s312, [#allocation12], 128, 128, 8
        $region40: #{tpu_custom_call.1} parent=11 // pred_fallthru
          _
      $region12: #{tpu_custom_call.1} parent=5 // pred_fallthru
        _
      %p318 = scmp.lt.s32.totalorder %s23, 2
      // Predicated region
      $region41: #{tpu_custom_call.1} parent=5 // pred_check
        %p319 = pneg %p318
      $region42: #{tpu_custom_call.1} parent=5 // pred_check_branch
        %321 = sbr.rel (%p319) target = $region44
      $region43: #{tpu_custom_call.1} parent=5 // pred_region
        // Predicated region
        $region45: #{tpu_custom_call.1} parent=43 // pred_check
          %p322 = pneg %p43
        $region46: #{tpu_custom_call.1} parent=43 // pred_check_branch
          %324 = sbr.rel (%p322) target = $region48
        $region47: #{tpu_custom_call.1} parent=43 // pred_region
          %s325 = sand.u32 %s33, 1
          %s326 = scalar_lea.sflag [#allocation3], %s325
          %s327 = sand.u32 %s33, 1
          %s328 = smul.addr %s327, 8
          %s329 = scalar_lea.vmem [#allocation2], %s328
          %s331 = ssub.s32 128, 128
          %332 = vsyncadd %s326, %s331
          %s333 = smul.addr %s23, 2
          %s334 = smul.addr %s333, 64
          %s335 = scalar_lea.hbm %s0, %s334
          %s336 = sshll.u32 %s329, 4
          %s337 = int_to_ptr.vmem [resolvable:$true] %s336
          %342 = dma.hbm_to_vmem [thread:$0]  %s335, 128, %s337, %s326, 64, 64, 4
        $region48: #{tpu_custom_call.1} parent=43 // pred_fallthru
          _
      $region44: #{tpu_custom_call.1} parent=5 // pred_fallthru
        _
      %p343 = scmp.le.s32.totalorder 1, %s23
      %p344 = scmp.lt.s32.totalorder %s23, 3
      %p345 = pnand %p343, %p344
      %p346 = pneg %p345
      // Predicated region
      $region49: #{tpu_custom_call.1} parent=5 // pred_check
        _
      $region50: #{tpu_custom_call.1} parent=5 // pred_check_branch
        %348 = sbr.rel (%p345) target = $region52
      $region51: #{tpu_custom_call.1} parent=5 // pred_region
        %s349 = ssub.s32 %s23, 1
        %s350 = sand.u32 %s36, 1
        %s351 = scalar_lea.sflag [#allocation3], %s350
        %s352 = sand.u32 %s36, 1
        %s353 = smul.addr %s352, 8
        %s354 = scalar_lea.vmem [#allocation2], %s353
        // Predicated region
        $region53: #{tpu_custom_call.1} parent=51 // pred_check
          %p355 = pneg %p49
        $region54: #{tpu_custom_call.1} parent=51 // pred_check_branch
          %357 = sbr.rel (%p355) target = $region56
        $region55: #{tpu_custom_call.1} parent=51 // pred_region
          %358 = dma.done %s351, 128
        $region56: #{tpu_custom_call.1} parent=51 // pred_fallthru
          _
        // Predicated region
        $region57: #{tpu_custom_call.1} parent=51 // pred_check
          %p359 = pneg %p70
        $region58: #{tpu_custom_call.1} parent=51 // pred_check_branch
          %361 = sbr.rel (%p359) target = $region60
        $region59: #{tpu_custom_call.1} parent=51 // pred_region
          %362 = dma.done [#allocation6], 128
        $region60: #{tpu_custom_call.1} parent=51 // pred_fallthru
          _
        // Predicated region
        $region61: #{tpu_custom_call.1} parent=51 // pred_check
          %p363 = pneg %p91
        $region62: #{tpu_custom_call.1} parent=51 // pred_check_branch
          %365 = sbr.rel (%p363) target = $region64
        $region63: #{tpu_custom_call.1} parent=51 // pred_region
          %366 = dma.done [#allocation6], 128
        $region64: #{tpu_custom_call.1} parent=51 // pred_fallthru
          _
        // Predicated region
        $region65: #{tpu_custom_call.1} parent=51 // pred_check
          %p367 = pneg %p112
        $region66: #{tpu_custom_call.1} parent=51 // pred_check_branch
          %369 = sbr.rel (%p367) target = $region68
        $region67: #{tpu_custom_call.1} parent=51 // pred_region
          %370 = dma.done [#allocation9], 128
        $region68: #{tpu_custom_call.1} parent=51 // pred_fallthru
          _
        // Predicated region
        $region69: #{tpu_custom_call.1} parent=51 // pred_check
          %p371 = pneg %p133
        $region70: #{tpu_custom_call.1} parent=51 // pred_check_branch
          %373 = sbr.rel (%p371) target = $region72
        $region71: #{tpu_custom_call.1} parent=51 // pred_region
          %374 = dma.done [#allocation9], 128
        $region72: #{tpu_custom_call.1} parent=51 // pred_fallthru
          _
        // Predicated region
        $region73: #{tpu_custom_call.1} parent=51 // pred_check
          %p375 = pneg %p175
        $region74: #{tpu_custom_call.1} parent=51 // pred_check_branch
          %377 = sbr.rel (%p375) target = $region76
        $region75: #{tpu_custom_call.1} parent=51 // pred_region
          %378 = dma.done [#allocation12], 256
        $region76: #{tpu_custom_call.1} parent=51 // pred_fallthru
          _
        // Predicated region
        $region77: #{tpu_custom_call.1} parent=51 // pred_check
          %p379 = pneg %p196
        $region78: #{tpu_custom_call.1} parent=51 // pred_check_branch
          %381 = sbr.rel (%p379) target = $region80
        $region79: #{tpu_custom_call.1} parent=51 // pred_region
          %382 = dma.done [#allocation12], 256
        $region80: #{tpu_custom_call.1} parent=51 // pred_fallthru
          _
        %s383 = sand.u32 %s36, 1
        %s384 = scalar_lea.sflag [#allocation3], %s383
        %s385 = sand.u32 %s36, 1
        %s386 = smul.addr %s385, 8
        %s387 = scalar_lea.vmem [#allocation2], %s386
        %p388 = pneg %p49
        %p389 = pneg %p46
        %p390 = pneg %p70
        %p391 = pneg %p67
        %p392 = pneg %p91
        %p393 = pneg %p88
        %p394 = pneg %p112
        %p395 = pneg %p109
        %p396 = pneg %p133
        %p397 = pneg %p130
        %p398 = pneg %p154
        %p399 = pneg %p151
        %p400 = pneg %p175
        %p401 = pneg %p172
        %p402 = pneg %p196
        %p403 = pneg %p193
        %p404 = pneg %p222
        %p405 = pneg %p219
        %s406 = sand.u32 %s209, 1
        %s407 = scalar_lea.sflag [#allocation4], %s406
        %s408 = sand.u32 %s209, 1
        %s409 = smul.addr %s408, 16
        %s410 = scalar_lea.vmem [#allocation14], %s409
        %v412 = vld [vmem:[#allocation5] sm:$0xf]
        %v413 = vld [vmem:[#allocation5 + $0x4] sm:$0xf]
        %v414 = vld [vmem:[#allocation7] sm:$0xf]
        %v415 = vld [vmem:[#allocation7 + $0x4] sm:$0xf]
        %v416 = vld [vmem:[#allocation8] sm:$0xf]
        %v417 = vld [vmem:[#allocation8 + $0x4] sm:$0xf]
        %v418 = vld [vmem:[#allocation10] sm:$0xf]
        %v419 = vld [vmem:[#allocation10 + $0x4] sm:$0xf]
        %v420 = vld [vmem:[%s5] sm:$0xff]
        %v421 = vld [vmem:[%s5 + $0x8] sm:$0xff]
        %v422 = vld [vmem:[#allocation11] sm:$0xff]
        %v423 = vld [vmem:[#allocation11 + $0x8] sm:$0xff]
        %v424 = vld [vmem:[#allocation13] sm:$0xff]
        %v425 = vld [vmem:[#allocation13 + $0x8] sm:$0xff]
        %v426 = vld [vmem:[%s354] sm:$0xf]
        %v427 = vld [vmem:[%s354 + $0x4] sm:$0xf]
        %v430 = vunpack.c.l.b16 %v412
        %v431 = vunpack.c.l.b16 %v413
        %v432 = vpack.c.b16 %v431, %v430
        %v435 = vunpack.c.l.b16 %v426
        %v436 = vunpack.c.l.b16 %v427
        %v437 = vpack.c.b16 %v436, %v435
        %vm439 = vcmask 130048
        %v441 = vsel %vm439, %v432, 0
        %443 = vmatprep.subr.bf16.mxu0 0
        %444 = vmatpush1.bf16.msra.mxu0 %v437
        %445 = vmatprep.subr.bf16.mxu0 0
        %446 = vmatpush1.bf16.msra.mxu0 0
        %447 = vmatprep.subr.bf16.mxu0 0
        %448 = vmatpush1.bf16.msra.mxu0 0
        %449 = vmatprep.subr.bf16.mxu0 0
        %450 = vmatpush1.bf16.msra.mxu0 0
        %451 = vmatprep.subr.bf16.mxu0 0
        %452 = vmatpush1.bf16.msra.mxu0 0
        %453 = vmatprep.subr.bf16.mxu0 0
        %454 = vmatpush1.bf16.msra.mxu0 0
        %455 = vmatprep.subr.bf16.mxu0 0
        %456 = vmatpush1.bf16.msra.mxu0 0
        %457 = vmatprep.subr.bf16.mxu0 0
        %458 = vmatpush1.bf16.msra.mxu0 0
        %459 = vmatprep.subr.bf16.mxu0 0
        %460 = vmatpush1.bf16.msra.mxu0 0
        %461 = vmatprep.subr.bf16.mxu0 0
        %462 = vmatpush1.bf16.msra.mxu0 0
        %463 = vmatprep.subr.bf16.mxu0 0
        %464 = vmatpush1.bf16.msra.mxu0 0
        %465 = vmatprep.subr.bf16.mxu0 0
        %466 = vmatpush1.bf16.msra.mxu0 0
        %467 = vmatprep.subr.bf16.mxu0 0
        %468 = vmatpush1.bf16.msra.mxu0 0
        %469 = vmatprep.subr.bf16.mxu0 0
        %470 = vmatpush1.bf16.msra.mxu0 0
        %471 = vmatprep.subr.bf16.mxu0 0
        %472 = vmatpush1.bf16.msra.mxu0 0
        %473 = vmatprep.subr.bf16.mxu0 0
        %474 = vmatpush1.bf16.msra.mxu0 0
        %475 = vmatprep.mubr.bf16.mxu0 0
        %476 = vmatmul.mubr.bf16.gmra.mrb[0].mxu0 %v441
        %v477 = vpop.f32.mrb[0].mxu0
        %v478 = vadd.f32 0.0, %v477
        %v479 = vpop.f32.mrb[0].mxu0
        %v480 = vpop.f32.mrb[0].mxu0
        %v481 = vadd.f32 0.0, %v480
        %v482 = vpop.f32.mrb[0].mxu0
        %483 = vdwg.mxu0
        %v486 = vunpack.c.l.b16 %v414
        %v487 = vunpack.c.l.b16 %v415
        %v488 = vpack.c.b16 %v487, %v486
        %v490 = vsel %vm439, %v488, 0
        %492 = vmatprep.subr.bf16.mxu0 0
        %493 = vmatpush1.bf16.msra.mxu0 %v437
        %494 = vmatprep.subr.bf16.mxu0 0
        %495 = vmatpush1.bf16.msra.mxu0 0
        %496 = vmatprep.subr.bf16.mxu0 0
        %497 = vmatpush1.bf16.msra.mxu0 0
        %498 = vmatprep.subr.bf16.mxu0 0
        %499 = vmatpush1.bf16.msra.mxu0 0
        %500 = vmatprep.subr.bf16.mxu0 0
        %501 = vmatpush1.bf16.msra.mxu0 0
        %502 = vmatprep.subr.bf16.mxu0 0
        %503 = vmatpush1.bf16.msra.mxu0 0
        %504 = vmatprep.subr.bf16.mxu0 0
        %505 = vmatpush1.bf16.msra.mxu0 0
        %506 = vmatprep.subr.bf16.mxu0 0
        %507 = vmatpush1.bf16.msra.mxu0 0
        %508 = vmatprep.subr.bf16.mxu0 0
        %509 = vmatpush1.bf16.msra.mxu0 0
        %510 = vmatprep.subr.bf16.mxu0 0
        %511 = vmatpush1.bf16.msra.mxu0 0
        %512 = vmatprep.subr.bf16.mxu0 0
        %513 = vmatpush1.bf16.msra.mxu0 0
        %514 = vmatprep.subr.bf16.mxu0 0
        %515 = vmatpush1.bf16.msra.mxu0 0
        %516 = vmatprep.subr.bf16.mxu0 0
        %517 = vmatpush1.bf16.msra.mxu0 0
        %518 = vmatprep.subr.bf16.mxu0 0
        %519 = vmatpush1.bf16.msra.mxu0 0
        %520 = vmatprep.subr.bf16.mxu0 0
        %521 = vmatpush1.bf16.msra.mxu0 0
        %522 = vmatprep.subr.bf16.mxu0 0
        %523 = vmatpush1.bf16.msra.mxu0 0
        %524 = vmatprep.mubr.bf16.mxu0 0
        %525 = vmatmul.mubr.bf16.gmra.mrb[0].mxu0 %v490
        %v526 = vpop.f32.mrb[0].mxu0
        %v527 = vadd.f32 0.0, %v526
        %v528 = vpop.f32.mrb[0].mxu0
        %v529 = vpop.f32.mrb[0].mxu0
        %v530 = vadd.f32 0.0, %v529
        %v531 = vpop.f32.mrb[0].mxu0
        %532 = vdwg.mxu0
        %v533 = vpack.c.bf16 %v481, %v478
        %v536 = vunpack.c.l.b16 %v416
        %v537 = vunpack.c.l.b16 %v417
        %v538 = vpack.c.b16 %v537, %v536
        %v541 = vsel %vm439, %v533, 0
        %543 = vmatprep.subr.bf16.mxu0 0
        %544 = vmatpush1.bf16.msra.mxu0 %v538
        %545 = vmatprep.subr.bf16.mxu0 0
        %546 = vmatpush1.bf16.msra.mxu0 0
        %547 = vmatprep.subr.bf16.mxu0 0
        %548 = vmatpush1.bf16.msra.mxu0 0
        %549 = vmatprep.subr.bf16.mxu0 0
        %550 = vmatpush1.bf16.msra.mxu0 0
        %551 = vmatprep.subr.bf16.mxu0 0
        %552 = vmatpush1.bf16.msra.mxu0 0
        %553 = vmatprep.subr.bf16.mxu0 0
        %554 = vmatpush1.bf16.msra.mxu0 0
        %555 = vmatprep.subr.bf16.mxu0 0
        %556 = vmatpush1.bf16.msra.mxu0 0
        %557 = vmatprep.subr.bf16.mxu0 0
        %558 = vmatpush1.bf16.msra.mxu0 0
        %559 = vmatprep.subr.bf16.mxu0 0
        %560 = vmatpush1.bf16.msra.mxu0 0
        %561 = vmatprep.subr.bf16.mxu0 0
        %562 = vmatpush1.bf16.msra.mxu0 0
        %563 = vmatprep.subr.bf16.mxu0 0
        %564 = vmatpush1.bf16.msra.mxu0 0
        %565 = vmatprep.subr.bf16.mxu0 0
        %566 = vmatpush1.bf16.msra.mxu0 0
        %567 = vmatprep.subr.bf16.mxu0 0
        %568 = vmatpush1.bf16.msra.mxu0 0
        %569 = vmatprep.subr.bf16.mxu0 0
        %570 = vmatpush1.bf16.msra.mxu0 0
        %571 = vmatprep.subr.bf16.mxu0 0
        %572 = vmatpush1.bf16.msra.mxu0 0
        %573 = vmatprep.subr.bf16.mxu0 0
        %574 = vmatpush1.bf16.msra.mxu0 0
        %575 = vmatprep.mubr.bf16.mxu0 0
        %576 = vmatmul.mubr.bf16.gmra.mrb[0].mxu0 %v541
        %v577 = vpop.f32.mrb[0].mxu0
        %v578 = vadd.f32 0.0, %v577
        %v579 = vpop.f32.mrb[0].mxu0
        %v580 = vpop.f32.mrb[0].mxu0
        %v581 = vadd.f32 0.0, %v580
        %v582 = vpop.f32.mrb[0].mxu0
        %583 = vdwg.mxu0
        %v584 = vpack.c.bf16 %v530, %v527
        %v587 = vunpack.c.l.b16 %v418
        %v588 = vunpack.c.l.b16 %v419
        %v589 = vpack.c.b16 %v588, %v587
        %v592 = vsel %vm439, %v584, 0
        %594 = vmatprep.subr.bf16.mxu0 0
        %595 = vmatpush1.bf16.msra.mxu0 %v589
        %596 = vmatprep.subr.bf16.mxu0 0
        %597 = vmatpush1.bf16.msra.mxu0 0
        %598 = vmatprep.subr.bf16.mxu0 0
        %599 = vmatpush1.bf16.msra.mxu0 0
        %600 = vmatprep.subr.bf16.mxu0 0
        %601 = vmatpush1.bf16.msra.mxu0 0
        %602 = vmatprep.subr.bf16.mxu0 0
        %603 = vmatpush1.bf16.msra.mxu0 0
        %604 = vmatprep.subr.bf16.mxu0 0
        %605 = vmatpush1.bf16.msra.mxu0 0
        %606 = vmatprep.subr.bf16.mxu0 0
        %607 = vmatpush1.bf16.msra.mxu0 0
        %608 = vmatprep.subr.bf16.mxu0 0
        %609 = vmatpush1.bf16.msra.mxu0 0
        %610 = vmatprep.subr.bf16.mxu0 0
        %611 = vmatpush1.bf16.msra.mxu0 0
        %612 = vmatprep.subr.bf16.mxu0 0
        %613 = vmatpush1.bf16.msra.mxu0 0
        %614 = vmatprep.subr.bf16.mxu0 0
        %615 = vmatpush1.bf16.msra.mxu0 0
        %616 = vmatprep.subr.bf16.mxu0 0
        %617 = vmatpush1.bf16.msra.mxu0 0
        %618 = vmatprep.subr.bf16.mxu0 0
        %619 = vmatpush1.bf16.msra.mxu0 0
        %620 = vmatprep.subr.bf16.mxu0 0
        %621 = vmatpush1.bf16.msra.mxu0 0
        %622 = vmatprep.subr.bf16.mxu0 0
        %623 = vmatpush1.bf16.msra.mxu0 0
        %624 = vmatprep.subr.bf16.mxu0 0
        %625 = vmatpush1.bf16.msra.mxu0 0
        %626 = vmatprep.mubr.bf16.mxu0 0
        %627 = vmatmul.mubr.bf16.gmra.mrb[0].mxu0 %v592
        %v628 = vpop.f32.mrb[0].mxu0
        %v629 = vadd.f32 0.0, %v628
        %v630 = vpop.f32.mrb[0].mxu0
        %v631 = vpop.f32.mrb[0].mxu0
        %v632 = vadd.f32 0.0, %v631
        %v633 = vpop.f32.mrb[0].mxu0
        %634 = vdwg.mxu0
        %v635 = vsub.f32 %v578, %v629
        %v636 = vsub.f32 %v581, %v632
        %637 = vmatprep.subr.bf16.mxu0 0
        %638 = vmatpush1.bf16.msra.mxu0 %v538
        %639 = vmatprep.subr.bf16.mxu0 0
        %640 = vmatpush1.bf16.msra.mxu0 0
        %641 = vmatprep.subr.bf16.mxu0 0
        %642 = vmatpush1.bf16.msra.mxu0 0
        %643 = vmatprep.subr.bf16.mxu0 0
        %644 = vmatpush1.bf16.msra.mxu0 0
        %645 = vmatprep.subr.bf16.mxu0 0
        %646 = vmatpush1.bf16.msra.mxu0 0
        %647 = vmatprep.subr.bf16.mxu0 0
        %648 = vmatpush1.bf16.msra.mxu0 0
        %649 = vmatprep.subr.bf16.mxu0 0
        %650 = vmatpush1.bf16.msra.mxu0 0
        %651 = vmatprep.subr.bf16.mxu0 0
        %652 = vmatpush1.bf16.msra.mxu0 0
        %653 = vmatprep.subr.bf16.mxu0 0
        %654 = vmatpush1.bf16.msra.mxu0 0
        %655 = vmatprep.subr.bf16.mxu0 0
        %656 = vmatpush1.bf16.msra.mxu0 0
        %657 = vmatprep.subr.bf16.mxu0 0
        %658 = vmatpush1.bf16.msra.mxu0 0
        %659 = vmatprep.subr.bf16.mxu0 0
        %660 = vmatpush1.bf16.msra.mxu0 0
        %661 = vmatprep.subr.bf16.mxu0 0
        %662 = vmatpush1.bf16.msra.mxu0 0
        %663 = vmatprep.subr.bf16.mxu0 0
        %664 = vmatpush1.bf16.msra.mxu0 0
        %665 = vmatprep.subr.bf16.mxu0 0
        %666 = vmatpush1.bf16.msra.mxu0 0
        %667 = vmatprep.subr.bf16.mxu0 0
        %668 = vmatpush1.bf16.msra.mxu0 0
        %669 = vmatprep.mubr.bf16.mxu0 0
        %670 = vmatmul.mubr.bf16.gmra.mrb[0].mxu0 %v592
        %v671 = vpop.f32.mrb[0].mxu0
        %v672 = vadd.f32 0.0, %v671
        %v673 = vpop.f32.mrb[0].mxu0
        %v674 = vpop.f32.mrb[0].mxu0
        %v675 = vadd.f32 0.0, %v674
        %v676 = vpop.f32.mrb[0].mxu0
        %677 = vdwg.mxu0
        %678 = vmatprep.subr.bf16.mxu0 0
        %679 = vmatpush1.bf16.msra.mxu0 %v589
        %680 = vmatprep.subr.bf16.mxu0 0
        %681 = vmatpush1.bf16.msra.mxu0 0
        %682 = vmatprep.subr.bf16.mxu0 0
        %683 = vmatpush1.bf16.msra.mxu0 0
        %684 = vmatprep.subr.bf16.mxu0 0
        %685 = vmatpush1.bf16.msra.mxu0 0
        %686 = vmatprep.subr.bf16.mxu0 0
        %687 = vmatpush1.bf16.msra.mxu0 0
        %688 = vmatprep.subr.bf16.mxu0 0
        %689 = vmatpush1.bf16.msra.mxu0 0
        %690 = vmatprep.subr.bf16.mxu0 0
        %691 = vmatpush1.bf16.msra.mxu0 0
        %692 = vmatprep.subr.bf16.mxu0 0
        %693 = vmatpush1.bf16.msra.mxu0 0
        %694 = vmatprep.subr.bf16.mxu0 0
        %695 = vmatpush1.bf16.msra.mxu0 0
        %696 = vmatprep.subr.bf16.mxu0 0
        %697 = vmatpush1.bf16.msra.mxu0 0
        %698 = vmatprep.subr.bf16.mxu0 0
        %699 = vmatpush1.bf16.msra.mxu0 0
        %700 = vmatprep.subr.bf16.mxu0 0
        %701 = vmatpush1.bf16.msra.mxu0 0
        %702 = vmatprep.subr.bf16.mxu0 0
        %703 = vmatpush1.bf16.msra.mxu0 0
        %704 = vmatprep.subr.bf16.mxu0 0
        %705 = vmatpush1.bf16.msra.mxu0 0
        %706 = vmatprep.subr.bf16.mxu0 0
        %707 = vmatpush1.bf16.msra.mxu0 0
        %708 = vmatprep.subr.bf16.mxu0 0
        %709 = vmatpush1.bf16.msra.mxu0 0
        %710 = vmatprep.mubr.bf16.mxu0 0
        %711 = vmatmul.mubr.bf16.gmra.mrb[0].mxu0 %v541
        %v712 = vpop.f32.mrb[0].mxu0
        %v713 = vadd.f32 %v672, %v712
        %v714 = vpop.f32.mrb[0].mxu0
        %v715 = vpop.f32.mrb[0].mxu0
        %v716 = vadd.f32 %v675, %v715
        %v717 = vpop.f32.mrb[0].mxu0
        %718 = vdwg.mxu0
        %721 = vrot.lane.b32.xlu0 %v635, 16
        %v722 = vpop.permute.xlu0 %721
        %723 = vrot.lane.b32.xlu0 %v636, 16
        %v724 = vpop.permute.xlu0 %723
        %727 = vrot.lane.b32.xlu0 %v635, 32
        %v728 = vpop.permute.xlu0 %727
        %729 = vrot.lane.b32.xlu0 %v636, 32
        %v730 = vpop.permute.xlu0 %729
        %v733 = vsel %vm439, %v635, %v722
        %v734 = vsel %vm439, %v636, %v724
        %vm735 = vcmask 261120
        %v736 = vsel %vm735, %v733, %v728
        %v737 = vsel %vm735, %v734, %v730
        %740 = vrot.lane.b32.xlu0 %v713, 16
        %v741 = vpop.permute.xlu0 %740
        %742 = vrot.lane.b32.xlu0 %v716, 16
        %v743 = vpop.permute.xlu0 %742
        %746 = vrot.lane.b32.xlu0 %v713, 32
        %v747 = vpop.permute.xlu0 %746
        %748 = vrot.lane.b32.xlu0 %v716, 32
        %v749 = vpop.permute.xlu0 %748
        %v752 = vsel %vm439, %v713, %v741
        %v753 = vsel %vm439, %v716, %v743
        %v754 = vsel %vm735, %v752, %v747
        %v755 = vsel %vm735, %v753, %v749
        %v756 = vmul.f32 %v736, %v420
        %v757 = vmul.f32 %v737, %v421
        %v758 = vpack.c.bf16 %v757, %v756
        %v759 = vmul.f32 %v754, %v420
        %v760 = vmul.f32 %v755, %v421
        %v761 = vpack.c.bf16 %v760, %v759
        %v762 = vmul.f32 %v736, %v422
        %v763 = vmul.f32 %v737, %v423
        %v764 = vmul.f32 %v754, %v424
        %v765 = vmul.f32 %v755, %v425
        %v766 = vsub.f32 %v762, %v764
        %v767 = vsub.f32 %v763, %v765
        %v768 = vpack.c.bf16 %v767, %v766
        %v769 = vmul.f32 %v736, %v424
        %v770 = vmul.f32 %v737, %v425
        %v771 = vmul.f32 %v754, %v422
        %v772 = vmul.f32 %v755, %v423
        %v773 = vadd.f32 %v769, %v771
        %v774 = vadd.f32 %v770, %v772
        %v775 = vpack.c.bf16 %v774, %v773
        %777 = vrot.lane.b32.xlu0 %v768, 48
        %v778 = vpop.permute.xlu0 %777
        %vm779 = vcmask 392192
        %v782 = vsel %vm779, %v758, %v778
        %785 = vrot.lane.b32.xlu0 %v775, 48
        %v786 = vpop.permute.xlu0 %785
        %v789 = vsel %vm779, %v761, %v786
        %791 = vmatprep.subr.bf16.mxu0 0
        %792 = vmatpush1.bf16.msra.mxu0 %v789
        %793 = vmatprep.subr.bf16.mxu0 0
        %794 = vmatpush1.bf16.msra.mxu0 0
        %795 = vmatprep.subr.bf16.mxu0 0
        %796 = vmatpush1.bf16.msra.mxu0 0
        %797 = vmatprep.subr.bf16.mxu0 0
        %798 = vmatpush1.bf16.msra.mxu0 0
        %799 = vmatprep.subr.bf16.mxu0 0
        %800 = vmatpush1.bf16.msra.mxu0 0
        %801 = vmatprep.subr.bf16.mxu0 0
        %802 = vmatpush1.bf16.msra.mxu0 0
        %803 = vmatprep.subr.bf16.mxu0 0
        %804 = vmatpush1.bf16.msra.mxu0 0
        %805 = vmatprep.subr.bf16.mxu0 0
        %806 = vmatpush1.bf16.msra.mxu0 0
        %807 = vmatprep.subr.bf16.mxu0 0
        %808 = vmatpush1.bf16.msra.mxu0 0
        %809 = vmatprep.subr.bf16.mxu0 0
        %810 = vmatpush1.bf16.msra.mxu0 0
        %811 = vmatprep.subr.bf16.mxu0 0
        %812 = vmatpush1.bf16.msra.mxu0 0
        %813 = vmatprep.subr.bf16.mxu0 0
        %814 = vmatpush1.bf16.msra.mxu0 0
        %815 = vmatprep.subr.bf16.mxu0 0
        %816 = vmatpush1.bf16.msra.mxu0 0
        %817 = vmatprep.subr.bf16.mxu0 0
        %818 = vmatpush1.bf16.msra.mxu0 0
        %819 = vmatprep.subr.bf16.mxu0 0
        %820 = vmatpush1.bf16.msra.mxu0 0
        %821 = vmatprep.subr.bf16.mxu0 0
        %822 = vmatpush1.bf16.msra.mxu0 0
        %823 = vmatprep.mubr.bf16.mxu0 0
        %824 = vmatmul.mubr.bf16.gmra.mrb[0].mxu0 %v490
        %v825 = vpop.f32.mrb[0].mxu0
        %v826 = vadd.f32 0.0, %v825
        %v827 = vpop.f32.mrb[0].mxu0
        %v828 = vpop.f32.mrb[0].mxu0
        %v829 = vadd.f32 0.0, %v828
        %v830 = vpop.f32.mrb[0].mxu0
        %831 = vdwg.mxu0
        %832 = vmatprep.subr.bf16.mxu0 0
        %833 = vmatpush1.bf16.msra.mxu0 %v782
        %834 = vmatprep.subr.bf16.mxu0 0
        %835 = vmatpush1.bf16.msra.mxu0 0
        %836 = vmatprep.subr.bf16.mxu0 0
        %837 = vmatpush1.bf16.msra.mxu0 0
        %838 = vmatprep.subr.bf16.mxu0 0
        %839 = vmatpush1.bf16.msra.mxu0 0
        %840 = vmatprep.subr.bf16.mxu0 0
        %841 = vmatpush1.bf16.msra.mxu0 0
        %842 = vmatprep.subr.bf16.mxu0 0
        %843 = vmatpush1.bf16.msra.mxu0 0
        %844 = vmatprep.subr.bf16.mxu0 0
        %845 = vmatpush1.bf16.msra.mxu0 0
        %846 = vmatprep.subr.bf16.mxu0 0
        %847 = vmatpush1.bf16.msra.mxu0 0
        %848 = vmatprep.subr.bf16.mxu0 0
        %849 = vmatpush1.bf16.msra.mxu0 0
        %850 = vmatprep.subr.bf16.mxu0 0
        %851 = vmatpush1.bf16.msra.mxu0 0
        %852 = vmatprep.subr.bf16.mxu0 0
        %853 = vmatpush1.bf16.msra.mxu0 0
        %854 = vmatprep.subr.bf16.mxu0 0
        %855 = vmatpush1.bf16.msra.mxu0 0
        %856 = vmatprep.subr.bf16.mxu0 0
        %857 = vmatpush1.bf16.msra.mxu0 0
        %858 = vmatprep.subr.bf16.mxu0 0
        %859 = vmatpush1.bf16.msra.mxu0 0
        %860 = vmatprep.subr.bf16.mxu0 0
        %861 = vmatpush1.bf16.msra.mxu0 0
        %862 = vmatprep.subr.bf16.mxu0 0
        %863 = vmatpush1.bf16.msra.mxu0 0
        %864 = vmatprep.mubr.bf16.mxu0 0
        %865 = vmatmul.mubr.bf16.gmra.mrb[0].mxu0 %v441
        %v866 = vpop.f32.mrb[0].mxu0
        %v867 = vadd.f32 %v826, %v866
        %v868 = vpop.f32.mrb[0].mxu0
        %v869 = vpop.f32.mrb[0].mxu0
        %v870 = vadd.f32 %v829, %v869
        %v871 = vpop.f32.mrb[0].mxu0
        %872 = vdwg.mxu0
        %v873 = vpack.c.bf16 %v870, %v867
        %874 = vmatprep.subr.bf16.mxu0 0
        %875 = vmatpush1.bf16.msra.mxu0 %v789
        %876 = vmatprep.subr.bf16.mxu0 0
        %877 = vmatpush1.bf16.msra.mxu0 0
        %878 = vmatprep.subr.bf16.mxu0 0
        %879 = vmatpush1.bf16.msra.mxu0 0
        %880 = vmatprep.subr.bf16.mxu0 0
        %881 = vmatpush1.bf16.msra.mxu0 0
        %882 = vmatprep.subr.bf16.mxu0 0
        %883 = vmatpush1.bf16.msra.mxu0 0
        %884 = vmatprep.subr.bf16.mxu0 0
        %885 = vmatpush1.bf16.msra.mxu0 0
        %886 = vmatprep.subr.bf16.mxu0 0
        %887 = vmatpush1.bf16.msra.mxu0 0
        %888 = vmatprep.subr.bf16.mxu0 0
        %889 = vmatpush1.bf16.msra.mxu0 0
        %890 = vmatprep.subr.bf16.mxu0 0
        %891 = vmatpush1.bf16.msra.mxu0 0
        %892 = vmatprep.subr.bf16.mxu0 0
        %893 = vmatpush1.bf16.msra.mxu0 0
        %894 = vmatprep.subr.bf16.mxu0 0
        %895 = vmatpush1.bf16.msra.mxu0 0
        %896 = vmatprep.subr.bf16.mxu0 0
        %897 = vmatpush1.bf16.msra.mxu0 0
        %898 = vmatprep.subr.bf16.mxu0 0
        %899 = vmatpush1.bf16.msra.mxu0 0
        %900 = vmatprep.subr.bf16.mxu0 0
        %901 = vmatpush1.bf16.msra.mxu0 0
        %902 = vmatprep.subr.bf16.mxu0 0
        %903 = vmatpush1.bf16.msra.mxu0 0
        %904 = vmatprep.subr.bf16.mxu0 0
        %905 = vmatpush1.bf16.msra.mxu0 0
        %906 = vmatprep.mubr.bf16.mxu0 0
        %907 = vmatmul.mubr.bf16.gmra.mrb[0].mxu0 %v441
        %v908 = vpop.f32.mrb[0].mxu0
        %v909 = vadd.f32 0.0, %v908
        %v910 = vpop.f32.mrb[0].mxu0
        %v911 = vpop.f32.mrb[0].mxu0
        %v912 = vadd.f32 0.0, %v911
        %v913 = vpop.f32.mrb[0].mxu0
        %914 = vdwg.mxu0
        %915 = vmatprep.subr.bf16.mxu0 0
        %916 = vmatpush1.bf16.msra.mxu0 %v782
        %917 = vmatprep.subr.bf16.mxu0 0
        %918 = vmatpush1.bf16.msra.mxu0 0
        %919 = vmatprep.subr.bf16.mxu0 0
        %920 = vmatpush1.bf16.msra.mxu0 0
        %921 = vmatprep.subr.bf16.mxu0 0
        %922 = vmatpush1.bf16.msra.mxu0 0
        %923 = vmatprep.subr.bf16.mxu0 0
        %924 = vmatpush1.bf16.msra.mxu0 0
        %925 = vmatprep.subr.bf16.mxu0 0
        %926 = vmatpush1.bf16.msra.mxu0 0
        %927 = vmatprep.subr.bf16.mxu0 0
        %928 = vmatpush1.bf16.msra.mxu0 0
        %929 = vmatprep.subr.bf16.mxu0 0
        %930 = vmatpush1.bf16.msra.mxu0 0
        %931 = vmatprep.subr.bf16.mxu0 0
        %932 = vmatpush1.bf16.msra.mxu0 0
        %933 = vmatprep.subr.bf16.mxu0 0
        %934 = vmatpush1.bf16.msra.mxu0 0
        %935 = vmatprep.subr.bf16.mxu0 0
        %936 = vmatpush1.bf16.msra.mxu0 0
        %937 = vmatprep.subr.bf16.mxu0 0
        %938 = vmatpush1.bf16.msra.mxu0 0
        %939 = vmatprep.subr.bf16.mxu0 0
        %940 = vmatpush1.bf16.msra.mxu0 0
        %941 = vmatprep.subr.bf16.mxu0 0
        %942 = vmatpush1.bf16.msra.mxu0 0
        %943 = vmatprep.subr.bf16.mxu0 0
        %944 = vmatpush1.bf16.msra.mxu0 0
        %945 = vmatprep.subr.bf16.mxu0 0
        %946 = vmatpush1.bf16.msra.mxu0 0
        %947 = vmatprep.mubr.bf16.mxu0 0
        %948 = vmatmul.mubr.bf16.gmra.mrb[0].mxu0 %v490
        %v949 = vpop.f32.mrb[0].mxu0
        %v950 = vadd.f32 0.0, %v949
        %v951 = vpop.f32.mrb[0].mxu0
        %v952 = vpop.f32.mrb[0].mxu0
        %v953 = vadd.f32 0.0, %v952
        %v954 = vpop.f32.mrb[0].mxu0
        %955 = vdwg.mxu0
        %v956 = vsub.f32 %v909, %v950
        %v957 = vsub.f32 %v912, %v953
        %v958 = vpack.c.bf16 %v957, %v956
        %960 = vrot.lane.b32.xlu0 %v873, 112
        %v961 = vpop.permute.xlu0 %960
        %962 = vrot.lane.b32.xlu0 %v873, 96
        %v963 = vpop.permute.xlu0 %962
        %965 = vrot.lane.b32.xlu0 %v958, 112
        %v966 = vpop.permute.xlu0 %965
        %967 = vrot.lane.b32.xlu0 %v958, 96
        %v968 = vpop.permute.xlu0 %967
        %v970 = vsel %vm439, %v958, 0
        %v973 = vsel %vm439, %v966, 0
        %v976 = vsel %vm439, %v968, 0
        %978 = vmatprep.subr.bf16.mxu0 0
        %979 = vmatpush1.bf16.msra.mxu0 %v589
        %980 = vmatprep.subr.bf16.mxu0 0
        %981 = vmatpush1.bf16.msra.mxu0 0
        %982 = vmatprep.subr.bf16.mxu0 0
        %983 = vmatpush1.bf16.msra.mxu0 0
        %984 = vmatprep.subr.bf16.mxu0 0
        %985 = vmatpush1.bf16.msra.mxu0 0
        %986 = vmatprep.subr.bf16.mxu0 0
        %987 = vmatpush1.bf16.msra.mxu0 0
        %988 = vmatprep.subr.bf16.mxu0 0
        %989 = vmatpush1.bf16.msra.mxu0 0
        %990 = vmatprep.subr.bf16.mxu0 0
        %991 = vmatpush1.bf16.msra.mxu0 0
        %992 = vmatprep.subr.bf16.mxu0 0
        %993 = vmatpush1.bf16.msra.mxu0 0
        %994 = vmatprep.subr.bf16.mxu0 0
        %995 = vmatpush1.bf16.msra.mxu0 0
        %996 = vmatprep.subr.bf16.mxu0 0
        %997 = vmatpush1.bf16.msra.mxu0 0
        %998 = vmatprep.subr.bf16.mxu0 0
        %999 = vmatpush1.bf16.msra.mxu0 0
        %1000 = vmatprep.subr.bf16.mxu0 0
        %1001 = vmatpush1.bf16.msra.mxu0 0
        %1002 = vmatprep.subr.bf16.mxu0 0
        %1003 = vmatpush1.bf16.msra.mxu0 0
        %1004 = vmatprep.subr.bf16.mxu0 0
        %1005 = vmatpush1.bf16.msra.mxu0 0
        %1006 = vmatprep.subr.bf16.mxu0 0
        %1007 = vmatpush1.bf16.msra.mxu0 0
        %1008 = vmatprep.subr.bf16.mxu0 0
        %1009 = vmatpush1.bf16.msra.mxu0 0
        %1010 = vmatprep.mubr.bf16.mxu0 0
        %1011 = vmatmul.mubr.bf16.gmra.mrb[0].mxu0 %v970
        %v1012 = vpop.f32.mrb[0].mxu0
        %v1013 = vadd.f32 0.0, %v1012
        %v1014 = vpop.f32.mrb[0].mxu0
        %v1015 = vpop.f32.mrb[0].mxu0
        %v1016 = vadd.f32 0.0, %v1015
        %v1017 = vpop.f32.mrb[0].mxu0
        %1018 = vmatprep.mubr.bf16.mxu0 0
        %1019 = vmatmul.mubr.bf16.gmra.mrb[0].mxu0 %v973
        %v1020 = vpop.f32.mrb[0].mxu0
        %v1021 = vadd.f32 0.0, %v1020
        %v1022 = vpop.f32.mrb[0].mxu0
        %v1023 = vpop.f32.mrb[0].mxu0
        %v1024 = vadd.f32 0.0, %v1023
        %v1025 = vpop.f32.mrb[0].mxu0
        %1026 = vmatprep.mubr.bf16.mxu0 0
        %1027 = vmatmul.mubr.bf16.gmra.mrb[0].mxu0 %v976
        %v1028 = vpop.f32.mrb[0].mxu0
        %v1029 = vadd.f32 0.0, %v1028
        %v1030 = vpop.f32.mrb[0].mxu0
        %v1031 = vpop.f32.mrb[0].mxu0
        %v1032 = vadd.f32 0.0, %v1031
        %v1033 = vpop.f32.mrb[0].mxu0
        %1034 = vdwg.mxu0
        %v1036 = vsel %vm439, %v873, 0
        %v1039 = vsel %vm439, %v961, 0
        %v1042 = vsel %vm439, %v963, 0
        %1044 = vmatprep.subr.bf16.mxu0 0
        %1045 = vmatpush1.bf16.msra.mxu0 %v538
        %1046 = vmatprep.subr.bf16.mxu0 0
        %1047 = vmatpush1.bf16.msra.mxu0 0
        %1048 = vmatprep.subr.bf16.mxu0 0
        %1049 = vmatpush1.bf16.msra.mxu0 0
        %1050 = vmatprep.subr.bf16.mxu0 0
        %1051 = vmatpush1.bf16.msra.mxu0 0
        %1052 = vmatprep.subr.bf16.mxu0 0
        %1053 = vmatpush1.bf16.msra.mxu0 0
        %1054 = vmatprep.subr.bf16.mxu0 0
        %1055 = vmatpush1.bf16.msra.mxu0 0
        %1056 = vmatprep.subr.bf16.mxu0 0
        %1057 = vmatpush1.bf16.msra.mxu0 0
        %1058 = vmatprep.subr.bf16.mxu0 0
        %1059 = vmatpush1.bf16.msra.mxu0 0
        %1060 = vmatprep.subr.bf16.mxu0 0
        %1061 = vmatpush1.bf16.msra.mxu0 0
        %1062 = vmatprep.subr.bf16.mxu0 0
        %1063 = vmatpush1.bf16.msra.mxu0 0
        %1064 = vmatprep.subr.bf16.mxu0 0
        %1065 = vmatpush1.bf16.msra.mxu0 0
        %1066 = vmatprep.subr.bf16.mxu0 0
        %1067 = vmatpush1.bf16.msra.mxu0 0
        %1068 = vmatprep.subr.bf16.mxu0 0
        %1069 = vmatpush1.bf16.msra.mxu0 0
        %1070 = vmatprep.subr.bf16.mxu0 0
        %1071 = vmatpush1.bf16.msra.mxu0 0
        %1072 = vmatprep.subr.bf16.mxu0 0
        %1073 = vmatpush1.bf16.msra.mxu0 0
        %1074 = vmatprep.subr.bf16.mxu0 0
        %1075 = vmatpush1.bf16.msra.mxu0 0
        %1076 = vmatprep.mubr.bf16.mxu0 0
        %1077 = vmatmul.mubr.bf16.gmra.mrb[0].mxu0 %v1036
        %v1078 = vpop.f32.mrb[0].mxu0
        %v1079 = vadd.f32 %v1013, %v1078
        %v1080 = vpop.f32.mrb[0].mxu0
        %v1081 = vpop.f32.mrb[0].mxu0
        %v1082 = vadd.f32 %v1016, %v1081
        %v1083 = vpop.f32.mrb[0].mxu0
        %1084 = vmatprep.mubr.bf16.mxu0 0
        %1085 = vmatmul.mubr.bf16.gmra.mrb[0].mxu0 %v1039
        %v1086 = vpop.f32.mrb[0].mxu0
        %v1087 = vadd.f32 %v1021, %v1086
        %v1088 = vpop.f32.mrb[0].mxu0
        %v1089 = vpop.f32.mrb[0].mxu0
        %v1090 = vadd.f32 %v1024, %v1089
        %v1091 = vpop.f32.mrb[0].mxu0
        %1092 = vmatprep.mubr.bf16.mxu0 0
        %1093 = vmatmul.mubr.bf16.gmra.mrb[0].mxu0 %v1042
        %v1094 = vpop.f32.mrb[0].mxu0
        %v1095 = vadd.f32 %v1029, %v1094
        %v1096 = vpop.f32.mrb[0].mxu0
        %v1097 = vpop.f32.mrb[0].mxu0
        %v1098 = vadd.f32 %v1032, %v1097
        %v1099 = vpop.f32.mrb[0].mxu0
        %1100 = vdwg.mxu0
        %1101 = vrot.lane.b32.xlu0 %v958, 80
        %v1102 = vpop.permute.xlu0 %1101
        %1103 = vrot.lane.b32.xlu0 %v966, 80
        %v1104 = vpop.permute.xlu0 %1103
        %1105 = vrot.lane.b32.xlu0 %v968, 80
        %v1106 = vpop.permute.xlu0 %1105
        %v1108 = vsel %vm439, %v1102, 0
        %v1111 = vsel %vm439, %v1104, 0
        %v1114 = vsel %vm439, %v1106, 0
        %1116 = vmatprep.subr.bf16.mxu0 0
        %1117 = vmatpush1.bf16.msra.mxu0 %v589
        %1118 = vmatprep.subr.bf16.mxu0 0
        %1119 = vmatpush1.bf16.msra.mxu0 0
        %1120 = vmatprep.subr.bf16.mxu0 0
        %1121 = vmatpush1.bf16.msra.mxu0 0
        %1122 = vmatprep.subr.bf16.mxu0 0
        %1123 = vmatpush1.bf16.msra.mxu0 0
        %1124 = vmatprep.subr.bf16.mxu0 0
        %1125 = vmatpush1.bf16.msra.mxu0 0
        %1126 = vmatprep.subr.bf16.mxu0 0
        %1127 = vmatpush1.bf16.msra.mxu0 0
        %1128 = vmatprep.subr.bf16.mxu0 0
        %1129 = vmatpush1.bf16.msra.mxu0 0
        %1130 = vmatprep.subr.bf16.mxu0 0
        %1131 = vmatpush1.bf16.msra.mxu0 0
        %1132 = vmatprep.subr.bf16.mxu0 0
        %1133 = vmatpush1.bf16.msra.mxu0 0
        %1134 = vmatprep.subr.bf16.mxu0 0
        %1135 = vmatpush1.bf16.msra.mxu0 0
        %1136 = vmatprep.subr.bf16.mxu0 0
        %1137 = vmatpush1.bf16.msra.mxu0 0
        %1138 = vmatprep.subr.bf16.mxu0 0
        %1139 = vmatpush1.bf16.msra.mxu0 0
        %1140 = vmatprep.subr.bf16.mxu0 0
        %1141 = vmatpush1.bf16.msra.mxu0 0
        %1142 = vmatprep.subr.bf16.mxu0 0
        %1143 = vmatpush1.bf16.msra.mxu0 0
        %1144 = vmatprep.subr.bf16.mxu0 0
        %1145 = vmatpush1.bf16.msra.mxu0 0
        %1146 = vmatprep.subr.bf16.mxu0 0
        %1147 = vmatpush1.bf16.msra.mxu0 0
        %1148 = vmatprep.mubr.bf16.mxu0 0
        %1149 = vmatmul.mubr.bf16.gmra.mrb[0].mxu0 %v1108
        %v1150 = vpop.f32.mrb[0].mxu0
        %v1151 = vadd.f32 0.0, %v1150
        %v1152 = vpop.f32.mrb[0].mxu0
        %v1153 = vpop.f32.mrb[0].mxu0
        %v1154 = vadd.f32 0.0, %v1153
        %v1155 = vpop.f32.mrb[0].mxu0
        %1156 = vmatprep.mubr.bf16.mxu0 0
        %1157 = vmatmul.mubr.bf16.gmra.mrb[0].mxu0 %v1111
        %v1158 = vpop.f32.mrb[0].mxu0
        %v1159 = vadd.f32 0.0, %v1158
        %v1160 = vpop.f32.mrb[0].mxu0
        %v1161 = vpop.f32.mrb[0].mxu0
        %v1162 = vadd.f32 0.0, %v1161
        %v1163 = vpop.f32.mrb[0].mxu0
        %1164 = vmatprep.mubr.bf16.mxu0 0
        %1165 = vmatmul.mubr.bf16.gmra.mrb[0].mxu0 %v1114
        %v1166 = vpop.f32.mrb[0].mxu0
        %v1167 = vadd.f32 0.0, %v1166
        %v1168 = vpop.f32.mrb[0].mxu0
        %v1169 = vpop.f32.mrb[0].mxu0
        %v1170 = vadd.f32 0.0, %v1169
        %v1171 = vpop.f32.mrb[0].mxu0
        %1172 = vdwg.mxu0
        %1173 = vrot.lane.b32.xlu0 %v873, 80
        %v1174 = vpop.permute.xlu0 %1173
        %1175 = vrot.lane.b32.xlu0 %v961, 80
        %v1176 = vpop.permute.xlu0 %1175
        %1177 = vrot.lane.b32.xlu0 %v963, 80
        %v1178 = vpop.permute.xlu0 %1177
        %v1180 = vsel %vm439, %v1174, 0
        %v1183 = vsel %vm439, %v1176, 0
        %v1186 = vsel %vm439, %v1178, 0
        %1188 = vmatprep.subr.bf16.mxu0 0
        %1189 = vmatpush1.bf16.msra.mxu0 %v538
        %1190 = vmatprep.subr.bf16.mxu0 0
        %1191 = vmatpush1.bf16.msra.mxu0 0
        %1192 = vmatprep.subr.bf16.mxu0 0
        %1193 = vmatpush1.bf16.msra.mxu0 0
        %1194 = vmatprep.subr.bf16.mxu0 0
        %1195 = vmatpush1.bf16.msra.mxu0 0
        %1196 = vmatprep.subr.bf16.mxu0 0
        %1197 = vmatpush1.bf16.msra.mxu0 0
        %1198 = vmatprep.subr.bf16.mxu0 0
        %1199 = vmatpush1.bf16.msra.mxu0 0
        %1200 = vmatprep.subr.bf16.mxu0 0
        %1201 = vmatpush1.bf16.msra.mxu0 0
        %1202 = vmatprep.subr.bf16.mxu0 0
        %1203 = vmatpush1.bf16.msra.mxu0 0
        %1204 = vmatprep.subr.bf16.mxu0 0
        %1205 = vmatpush1.bf16.msra.mxu0 0
        %1206 = vmatprep.subr.bf16.mxu0 0
        %1207 = vmatpush1.bf16.msra.mxu0 0
        %1208 = vmatprep.subr.bf16.mxu0 0
        %1209 = vmatpush1.bf16.msra.mxu0 0
        %1210 = vmatprep.subr.bf16.mxu0 0
        %1211 = vmatpush1.bf16.msra.mxu0 0
        %1212 = vmatprep.subr.bf16.mxu0 0
        %1213 = vmatpush1.bf16.msra.mxu0 0
        %1214 = vmatprep.subr.bf16.mxu0 0
        %1215 = vmatpush1.bf16.msra.mxu0 0
        %1216 = vmatprep.subr.bf16.mxu0 0
        %1217 = vmatpush1.bf16.msra.mxu0 0
        %1218 = vmatprep.subr.bf16.mxu0 0
        %1219 = vmatpush1.bf16.msra.mxu0 0
        %1220 = vmatprep.mubr.bf16.mxu0 0
        %1221 = vmatmul.mubr.bf16.gmra.mrb[0].mxu0 %v1180
        %v1222 = vpop.f32.mrb[0].mxu0
        %v1223 = vadd.f32 %v1151, %v1222
        %v1224 = vpop.f32.mrb[0].mxu0
        %v1225 = vpop.f32.mrb[0].mxu0
        %v1226 = vadd.f32 %v1154, %v1225
        %v1227 = vpop.f32.mrb[0].mxu0
        %1228 = vmatprep.mubr.bf16.mxu0 0
        %1229 = vmatmul.mubr.bf16.gmra.mrb[0].mxu0 %v1183
        %v1230 = vpop.f32.mrb[0].mxu0
        %v1231 = vadd.f32 %v1159, %v1230
        %v1232 = vpop.f32.mrb[0].mxu0
        %v1233 = vpop.f32.mrb[0].mxu0
        %v1234 = vadd.f32 %v1162, %v1233
        %v1235 = vpop.f32.mrb[0].mxu0
        %1236 = vmatprep.mubr.bf16.mxu0 0
        %1237 = vmatmul.mubr.bf16.gmra.mrb[0].mxu0 %v1186
        %v1238 = vpop.f32.mrb[0].mxu0
        %v1239 = vadd.f32 %v1167, %v1238
        %v1240 = vpop.f32.mrb[0].mxu0
        %v1241 = vpop.f32.mrb[0].mxu0
        %v1242 = vadd.f32 %v1170, %v1241
        %v1243 = vpop.f32.mrb[0].mxu0
        %1244 = vdwg.mxu0
        %1245 = vmatprep.subr.bf16.mxu0 0
        %1246 = vmatpush1.bf16.msra.mxu0 %v538
        %1247 = vmatprep.subr.bf16.mxu0 0
        %1248 = vmatpush1.bf16.msra.mxu0 0
        %1249 = vmatprep.subr.bf16.mxu0 0
        %1250 = vmatpush1.bf16.msra.mxu0 0
        %1251 = vmatprep.subr.bf16.mxu0 0
        %1252 = vmatpush1.bf16.msra.mxu0 0
        %1253 = vmatprep.subr.bf16.mxu0 0
        %1254 = vmatpush1.bf16.msra.mxu0 0
        %1255 = vmatprep.subr.bf16.mxu0 0
        %1256 = vmatpush1.bf16.msra.mxu0 0
        %1257 = vmatprep.subr.bf16.mxu0 0
        %1258 = vmatpush1.bf16.msra.mxu0 0
        %1259 = vmatprep.subr.bf16.mxu0 0
        %1260 = vmatpush1.bf16.msra.mxu0 0
        %1261 = vmatprep.subr.bf16.mxu0 0
        %1262 = vmatpush1.bf16.msra.mxu0 0
        %1263 = vmatprep.subr.bf16.mxu0 0
        %1264 = vmatpush1.bf16.msra.mxu0 0
        %1265 = vmatprep.subr.bf16.mxu0 0
        %1266 = vmatpush1.bf16.msra.mxu0 0
        %1267 = vmatprep.subr.bf16.mxu0 0
        %1268 = vmatpush1.bf16.msra.mxu0 0
        %1269 = vmatprep.subr.bf16.mxu0 0
        %1270 = vmatpush1.bf16.msra.mxu0 0
        %1271 = vmatprep.subr.bf16.mxu0 0
        %1272 = vmatpush1.bf16.msra.mxu0 0
        %1273 = vmatprep.subr.bf16.mxu0 0
        %1274 = vmatpush1.bf16.msra.mxu0 0
        %1275 = vmatprep.subr.bf16.mxu0 0
        %1276 = vmatpush1.bf16.msra.mxu0 0
        %1277 = vmatprep.mubr.bf16.mxu0 0
        %1278 = vmatmul.mubr.bf16.gmra.mrb[0].mxu0 %v1108
        %v1279 = vpop.f32.mrb[0].mxu0
        %v1280 = vadd.f32 0.0, %v1279
        %v1281 = vpop.f32.mrb[0].mxu0
        %v1282 = vpop.f32.mrb[0].mxu0
        %v1283 = vadd.f32 0.0, %v1282
        %v1284 = vpop.f32.mrb[0].mxu0
        %1285 = vmatprep.mubr.bf16.mxu0 0
        %1286 = vmatmul.mubr.bf16.gmra.mrb[0].mxu0 %v1111
        %v1287 = vpop.f32.mrb[0].mxu0
        %v1288 = vadd.f32 0.0, %v1287
        %v1289 = vpop.f32.mrb[0].mxu0
        %v1290 = vpop.f32.mrb[0].mxu0
        %v1291 = vadd.f32 0.0, %v1290
        %v1292 = vpop.f32.mrb[0].mxu0
        %1293 = vmatprep.mubr.bf16.mxu0 0
        %1294 = vmatmul.mubr.bf16.gmra.mrb[0].mxu0 %v1114
        %v1295 = vpop.f32.mrb[0].mxu0
        %v1296 = vadd.f32 0.0, %v1295
        %v1297 = vpop.f32.mrb[0].mxu0
        %v1298 = vpop.f32.mrb[0].mxu0
        %v1299 = vadd.f32 0.0, %v1298
        %v1300 = vpop.f32.mrb[0].mxu0
        %1301 = vdwg.mxu0
        %1302 = vmatprep.subr.bf16.mxu0 0
        %1303 = vmatpush1.bf16.msra.mxu0 %v589
        %1304 = vmatprep.subr.bf16.mxu0 0
        %1305 = vmatpush1.bf16.msra.mxu0 0
        %1306 = vmatprep.subr.bf16.mxu0 0
        %1307 = vmatpush1.bf16.msra.mxu0 0
        %1308 = vmatprep.subr.bf16.mxu0 0
        %1309 = vmatpush1.bf16.msra.mxu0 0
        %1310 = vmatprep.subr.bf16.mxu0 0
        %1311 = vmatpush1.bf16.msra.mxu0 0
        %1312 = vmatprep.subr.bf16.mxu0 0
        %1313 = vmatpush1.bf16.msra.mxu0 0
        %1314 = vmatprep.subr.bf16.mxu0 0
        %1315 = vmatpush1.bf16.msra.mxu0 0
        %1316 = vmatprep.subr.bf16.mxu0 0
        %1317 = vmatpush1.bf16.msra.mxu0 0
        %1318 = vmatprep.subr.bf16.mxu0 0
        %1319 = vmatpush1.bf16.msra.mxu0 0
        %1320 = vmatprep.subr.bf16.mxu0 0
        %1321 = vmatpush1.bf16.msra.mxu0 0
        %1322 = vmatprep.subr.bf16.mxu0 0
        %1323 = vmatpush1.bf16.msra.mxu0 0
        %1324 = vmatprep.subr.bf16.mxu0 0
        %1325 = vmatpush1.bf16.msra.mxu0 0
        %1326 = vmatprep.subr.bf16.mxu0 0
        %1327 = vmatpush1.bf16.msra.mxu0 0
        %1328 = vmatprep.subr.bf16.mxu0 0
        %1329 = vmatpush1.bf16.msra.mxu0 0
        %1330 = vmatprep.subr.bf16.mxu0 0
        %1331 = vmatpush1.bf16.msra.mxu0 0
        %1332 = vmatprep.subr.bf16.mxu0 0
        %1333 = vmatpush1.bf16.msra.mxu0 0
        %1334 = vmatprep.mubr.bf16.mxu0 0
        %1335 = vmatmul.mubr.bf16.gmra.mrb[0].mxu0 %v1180
        %v1336 = vpop.f32.mrb[0].mxu0
        %v1337 = vadd.f32 0.0, %v1336
        %v1338 = vpop.f32.mrb[0].mxu0
        %v1339 = vpop.f32.mrb[0].mxu0
        %v1340 = vadd.f32 0.0, %v1339
        %v1341 = vpop.f32.mrb[0].mxu0
        %1342 = vmatprep.mubr.bf16.mxu0 0
        %1343 = vmatmul.mubr.bf16.gmra.mrb[0].mxu0 %v1183
        %v1344 = vpop.f32.mrb[0].mxu0
        %v1345 = vadd.f32 0.0, %v1344
        %v1346 = vpop.f32.mrb[0].mxu0
        %v1347 = vpop.f32.mrb[0].mxu0
        %v1348 = vadd.f32 0.0, %v1347
        %v1349 = vpop.f32.mrb[0].mxu0
        %1350 = vmatprep.mubr.bf16.mxu0 0
        %1351 = vmatmul.mubr.bf16.gmra.mrb[0].mxu0 %v1186
        %v1352 = vpop.f32.mrb[0].mxu0
        %v1353 = vadd.f32 0.0, %v1352
        %v1354 = vpop.f32.mrb[0].mxu0
        %v1355 = vpop.f32.mrb[0].mxu0
        %v1356 = vadd.f32 0.0, %v1355
        %v1357 = vpop.f32.mrb[0].mxu0
        %1358 = vdwg.mxu0
        %v1359 = vsub.f32 %v1280, %v1337
        %v1360 = vsub.f32 %v1283, %v1340
        %v1361 = vsub.f32 %v1288, %v1345
        %v1362 = vsub.f32 %v1291, %v1348
        %v1363 = vsub.f32 %v1296, %v1353
        %v1364 = vsub.f32 %v1299, %v1356
        %v1365 = vmul.f32 %v1223, %v1223
        %v1366 = vmul.f32 %v1226, %v1226
        %v1367 = vmul.f32 %v1231, %v1231
        %v1368 = vmul.f32 %v1234, %v1234
        %v1369 = vmul.f32 %v1239, %v1239
        %v1370 = vmul.f32 %v1242, %v1242
        %v1371 = vmul.f32 %v1359, %v1359
        %v1372 = vmul.f32 %v1360, %v1360
        %v1373 = vmul.f32 %v1361, %v1361
        %v1374 = vmul.f32 %v1362, %v1362
        %v1375 = vmul.f32 %v1363, %v1363
        %v1376 = vmul.f32 %v1364, %v1364
        %v1377 = vadd.f32 %v1365, %v1371
        %v1378 = vadd.f32 %v1366, %v1372
        %v1379 = vadd.f32 %v1367, %v1373
        %v1380 = vadd.f32 %v1368, %v1374
        %v1381 = vadd.f32 %v1369, %v1375
        %v1382 = vadd.f32 %v1370, %v1376
        %v1383 = vrsqrt.pop %v1377
        %v1384 = vmul.f32 %v1377, %v1383
        %vm1385 = vcmp.eq.f32.partialorder %v1377, inf
        %v1386 = vsel %vm1385, %v1377, %v1384
        %vm1387 = vcmp.eq.f32.partialorder %v1377, 0.0
        %v1388 = vand.u32 %v1377, 2147483648
        %v1389 = vsel %vm1387, %v1388, %v1386
        %v1390 = vrsqrt.pop %v1378
        %v1391 = vmul.f32 %v1378, %v1390
        %vm1392 = vcmp.eq.f32.partialorder %v1378, inf
        %v1393 = vsel %vm1392, %v1378, %v1391
        %vm1394 = vcmp.eq.f32.partialorder %v1378, 0.0
        %v1395 = vand.u32 %v1378, 2147483648
        %v1396 = vsel %vm1394, %v1395, %v1393
        %v1397 = vrsqrt.pop %v1379
        %v1398 = vmul.f32 %v1379, %v1397
        %vm1399 = vcmp.eq.f32.partialorder %v1379, inf
        %v1400 = vsel %vm1399, %v1379, %v1398
        %vm1401 = vcmp.eq.f32.partialorder %v1379, 0.0
        %v1402 = vand.u32 %v1379, 2147483648
        %v1403 = vsel %vm1401, %v1402, %v1400
        %v1404 = vrsqrt.pop %v1380
        %v1405 = vmul.f32 %v1380, %v1404
        %vm1406 = vcmp.eq.f32.partialorder %v1380, inf
        %v1407 = vsel %vm1406, %v1380, %v1405
        %vm1408 = vcmp.eq.f32.partialorder %v1380, 0.0
        %v1409 = vand.u32 %v1380, 2147483648
        %v1410 = vsel %vm1408, %v1409, %v1407
        %v1411 = vrsqrt.pop %v1381
        %v1412 = vmul.f32 %v1381, %v1411
        %vm1413 = vcmp.eq.f32.partialorder %v1381, inf
        %v1414 = vsel %vm1413, %v1381, %v1412
        %vm1415 = vcmp.eq.f32.partialorder %v1381, 0.0
        %v1416 = vand.u32 %v1381, 2147483648
        %v1417 = vsel %vm1415, %v1416, %v1414
        %v1418 = vrsqrt.pop %v1382
        %v1419 = vmul.f32 %v1382, %v1418
        %vm1420 = vcmp.eq.f32.partialorder %v1382, inf
        %v1421 = vsel %vm1420, %v1382, %v1419
        %vm1422 = vcmp.eq.f32.partialorder %v1382, 0.0
        %v1423 = vand.u32 %v1382, 2147483648
        %v1424 = vsel %vm1422, %v1423, %v1421
        %v1425 = vand.u32 2147483647, %v1079
        %v1426 = vand.u32 2147483647, %v1389
        %v1427 = vmin.f32 %v1425, %v1426
        %v1428 = vmax.f32 %v1425, %v1426
        %v1429 = vrcp.pop %v1428
        %v1430 = vmul.f32 %v1427, %v1429
        %v1431 = vmul.f32 %v1430, %v1430
        %v1432 = vmul.f32 0.002785687, %v1431
        %v1433 = vadd.f32 %v1432, -0.015866
        %v1434 = vmul.f32 %v1433, %v1431
        %v1435 = vadd.f32 %v1434, 0.04247222
        %v1436 = vmul.f32 %v1435, %v1431
        %v1437 = vadd.f32 %v1436, -0.074975304
        %v1438 = vmul.f32 %v1437, %v1431
        %v1439 = vadd.f32 %v1438, 0.1064488
        %v1440 = vmul.f32 %v1439, %v1431
        %v1441 = vadd.f32 %v1440, -0.14207031
        %v1442 = vmul.f32 %v1441, %v1431
        %v1443 = vadd.f32 %v1442, 0.19993454
        %v1444 = vmul.f32 %v1443, %v1431
        %v1445 = vadd.f32 %v1444, -0.33333147
        %v1446 = vmul.f32 %v1445, %v1431
        %v1447 = vmul.f32 %v1446, %v1430
        %v1448 = vadd.f32 %v1447, %v1430
        %vm1449 = vcmp.gt.f32.partialorder %v1426, %v1425
        %v1450 = vsub.f32 1.5707964, %v1448
        %v1451 = vsel %vm1449, %v1450, %v1448
        %vm1452 = vcmp.lt.f32.partialorder %v1079, 0.0
        %v1453 = vsub.f32 3.1415927, %v1451
        %v1454 = vsel %vm1452, %v1453, %v1451
        %vm1455 = vcmp.lt.s32.totalorder %v1079, 0
        %v1456 = vsel %vm1455, 3.1415927, 0.0
        %vm1457 = vcmp.eq.f32.partialorder %v1389, 0.0
        %v1458 = vsel %vm1457, %v1456, %v1454
        %vm1459 = vcmp.ne.f32.partialorder %v1079, %v1079
        %vm1460 = vcmp.ne.f32.partialorder %v1389, %v1389
        %vm1461 = vmor %vm1459, %vm1460
        %v1462 = vsel %vm1461, nan, %v1458
        %vm1463 = vcmp.lt.f32.partialorder %v1079, 0.0
        %v1464 = vsel %vm1463, 2.3561945, 0.7853982
        %vm1465 = vcmp.eq.s32.totalorder %v1425, inf
        %vm1466 = vcmp.eq.s32.totalorder %v1426, inf
        %vm1467 = vmand %vm1465, %vm1466
        %v1468 = vsel %vm1467, %v1464, %v1462
        %v1469 = vand.u32 2147483647, %v1468
        %v1470 = vand.u32 %v1389, 2147483648
        %v1471 = vor.u32 %v1469, %v1470
        %v1472 = vand.u32 2147483647, %v1082
        %v1473 = vand.u32 2147483647, %v1396
        %v1474 = vmin.f32 %v1472, %v1473
        %v1475 = vmax.f32 %v1472, %v1473
        %v1476 = vrcp.pop %v1475
        %v1477 = vmul.f32 %v1474, %v1476
        %v1478 = vmul.f32 %v1477, %v1477
        %v1479 = vmul.f32 0.002785687, %v1478
        %v1480 = vadd.f32 %v1479, -0.015866
        %v1481 = vmul.f32 %v1480, %v1478
        %v1482 = vadd.f32 %v1481, 0.04247222
        %v1483 = vmul.f32 %v1482, %v1478
        %v1484 = vadd.f32 %v1483, -0.074975304
        %v1485 = vmul.f32 %v1484, %v1478
        %v1486 = vadd.f32 %v1485, 0.1064488
        %v1487 = vmul.f32 %v1486, %v1478
        %v1488 = vadd.f32 %v1487, -0.14207031
        %v1489 = vmul.f32 %v1488, %v1478
        %v1490 = vadd.f32 %v1489, 0.19993454
        %v1491 = vmul.f32 %v1490, %v1478
        %v1492 = vadd.f32 %v1491, -0.33333147
        %v1493 = vmul.f32 %v1492, %v1478
        %v1494 = vmul.f32 %v1493, %v1477
        %v1495 = vadd.f32 %v1494, %v1477
        %vm1496 = vcmp.gt.f32.partialorder %v1473, %v1472
        %v1497 = vsub.f32 1.5707964, %v1495
        %v1498 = vsel %vm1496, %v1497, %v1495
        %vm1499 = vcmp.lt.f32.partialorder %v1082, 0.0
        %v1500 = vsub.f32 3.1415927, %v1498
        %v1501 = vsel %vm1499, %v1500, %v1498
        %vm1502 = vcmp.lt.s32.totalorder %v1082, 0
        %v1503 = vsel %vm1502, 3.1415927, 0.0
        %vm1504 = vcmp.eq.f32.partialorder %v1396, 0.0
        %v1505 = vsel %vm1504, %v1503, %v1501
        %vm1506 = vcmp.ne.f32.partialorder %v1082, %v1082
        %vm1507 = vcmp.ne.f32.partialorder %v1396, %v1396
        %vm1508 = vmor %vm1506, %vm1507
        %v1509 = vsel %vm1508, nan, %v1505
        %vm1510 = vcmp.lt.f32.partialorder %v1082, 0.0
        %v1511 = vsel %vm1510, 2.3561945, 0.7853982
        %vm1512 = vcmp.eq.s32.totalorder %v1472, inf
        %vm1513 = vcmp.eq.s32.totalorder %v1473, inf
        %vm1514 = vmand %vm1512, %vm1513
        %v1515 = vsel %vm1514, %v1511, %v1509
        %v1516 = vand.u32 2147483647, %v1515
        %v1517 = vand.u32 %v1396, 2147483648
        %v1518 = vor.u32 %v1516, %v1517
        %v1519 = vand.u32 2147483647, %v1087
        %v1520 = vand.u32 2147483647, %v1403
        %v1521 = vmin.f32 %v1519, %v1520
        %v1522 = vmax.f32 %v1519, %v1520
        %v1523 = vrcp.pop %v1522
        %v1524 = vmul.f32 %v1521, %v1523
        %v1525 = vmul.f32 %v1524, %v1524
        %v1526 = vmul.f32 0.002785687, %v1525
        %v1527 = vadd.f32 %v1526, -0.015866
        %v1528 = vmul.f32 %v1527, %v1525
        %v1529 = vadd.f32 %v1528, 0.04247222
        %v1530 = vmul.f32 %v1529, %v1525
        %v1531 = vadd.f32 %v1530, -0.074975304
        %v1532 = vmul.f32 %v1531, %v1525
        %v1533 = vadd.f32 %v1532, 0.1064488
        %v1534 = vmul.f32 %v1533, %v1525
        %v1535 = vadd.f32 %v1534, -0.14207031
        %v1536 = vmul.f32 %v1535, %v1525
        %v1537 = vadd.f32 %v1536, 0.19993454
        %v1538 = vmul.f32 %v1537, %v1525
        %v1539 = vadd.f32 %v1538, -0.33333147
        %v1540 = vmul.f32 %v1539, %v1525
        %v1541 = vmul.f32 %v1540, %v1524
        %v1542 = vadd.f32 %v1541, %v1524
        %vm1543 = vcmp.gt.f32.partialorder %v1520, %v1519
        %v1544 = vsub.f32 1.5707964, %v1542
        %v1545 = vsel %vm1543, %v1544, %v1542
        %vm1546 = vcmp.lt.f32.partialorder %v1087, 0.0
        %v1547 = vsub.f32 3.1415927, %v1545
        %v1548 = vsel %vm1546, %v1547, %v1545
        %vm1549 = vcmp.lt.s32.totalorder %v1087, 0
        %v1550 = vsel %vm1549, 3.1415927, 0.0
        %vm1551 = vcmp.eq.f32.partialorder %v1403, 0.0
        %v1552 = vsel %vm1551, %v1550, %v1548
        %vm1553 = vcmp.ne.f32.partialorder %v1087, %v1087
        %vm1554 = vcmp.ne.f32.partialorder %v1403, %v1403
        %vm1555 = vmor %vm1553, %vm1554
        %v1556 = vsel %vm1555, nan, %v1552
        %vm1557 = vcmp.lt.f32.partialorder %v1087, 0.0
        %v1558 = vsel %vm1557, 2.3561945, 0.7853982
        %vm1559 = vcmp.eq.s32.totalorder %v1519, inf
        %vm1560 = vcmp.eq.s32.totalorder %v1520, inf
        %vm1561 = vmand %vm1559, %vm1560
        %v1562 = vsel %vm1561, %v1558, %v1556
        %v1563 = vand.u32 2147483647, %v1562
        %v1564 = vand.u32 %v1403, 2147483648
        %v1565 = vor.u32 %v1563, %v1564
        %v1566 = vand.u32 2147483647, %v1090
        %v1567 = vand.u32 2147483647, %v1410
        %v1568 = vmin.f32 %v1566, %v1567
        %v1569 = vmax.f32 %v1566, %v1567
        %v1570 = vrcp.pop %v1569
        %v1571 = vmul.f32 %v1568, %v1570
        %v1572 = vmul.f32 %v1571, %v1571
        %v1573 = vmul.f32 0.002785687, %v1572
        %v1574 = vadd.f32 %v1573, -0.015866
        %v1575 = vmul.f32 %v1574, %v1572
        %v1576 = vadd.f32 %v1575, 0.04247222
        %v1577 = vmul.f32 %v1576, %v1572
        %v1578 = vadd.f32 %v1577, -0.074975304
        %v1579 = vmul.f32 %v1578, %v1572
        %v1580 = vadd.f32 %v1579, 0.1064488
        %v1581 = vmul.f32 %v1580, %v1572
        %v1582 = vadd.f32 %v1581, -0.14207031
        %v1583 = vmul.f32 %v1582, %v1572
        %v1584 = vadd.f32 %v1583, 0.19993454
        %v1585 = vmul.f32 %v1584, %v1572
        %v1586 = vadd.f32 %v1585, -0.33333147
        %v1587 = vmul.f32 %v1586, %v1572
        %v1588 = vmul.f32 %v1587, %v1571
        %v1589 = vadd.f32 %v1588, %v1571
        %vm1590 = vcmp.gt.f32.partialorder %v1567, %v1566
        %v1591 = vsub.f32 1.5707964, %v1589
        %v1592 = vsel %vm1590, %v1591, %v1589
        %vm1593 = vcmp.lt.f32.partialorder %v1090, 0.0
        %v1594 = vsub.f32 3.1415927, %v1592
        %v1595 = vsel %vm1593, %v1594, %v1592
        %vm1596 = vcmp.lt.s32.totalorder %v1090, 0
        %v1597 = vsel %vm1596, 3.1415927, 0.0
        %vm1598 = vcmp.eq.f32.partialorder %v1410, 0.0
        %v1599 = vsel %vm1598, %v1597, %v1595
        %vm1600 = vcmp.ne.f32.partialorder %v1090, %v1090
        %vm1601 = vcmp.ne.f32.partialorder %v1410, %v1410
        %vm1602 = vmor %vm1600, %vm1601
        %v1603 = vsel %vm1602, nan, %v1599
        %vm1604 = vcmp.lt.f32.partialorder %v1090, 0.0
        %v1605 = vsel %vm1604, 2.3561945, 0.7853982
        %vm1606 = vcmp.eq.s32.totalorder %v1566, inf
        %vm1607 = vcmp.eq.s32.totalorder %v1567, inf
        %vm1608 = vmand %vm1606, %vm1607
        %v1609 = vsel %vm1608, %v1605, %v1603
        %v1610 = vand.u32 2147483647, %v1609
        %v1611 = vand.u32 %v1410, 2147483648
        %v1612 = vor.u32 %v1610, %v1611
        %v1613 = vand.u32 2147483647, %v1095
        %v1614 = vand.u32 2147483647, %v1417
        %v1615 = vmin.f32 %v1613, %v1614
        %v1616 = vmax.f32 %v1613, %v1614
        %v1617 = vrcp.pop %v1616
        %v1618 = vmul.f32 %v1615, %v1617
        %v1619 = vmul.f32 %v1618, %v1618
        %v1620 = vmul.f32 0.002785687, %v1619
        %v1621 = vadd.f32 %v1620, -0.015866
        %v1622 = vmul.f32 %v1621, %v1619
        %v1623 = vadd.f32 %v1622, 0.04247222
        %v1624 = vmul.f32 %v1623, %v1619
        %v1625 = vadd.f32 %v1624, -0.074975304
        %v1626 = vmul.f32 %v1625, %v1619
        %v1627 = vadd.f32 %v1626, 0.1064488
        %v1628 = vmul.f32 %v1627, %v1619
        %v1629 = vadd.f32 %v1628, -0.14207031
        %v1630 = vmul.f32 %v1629, %v1619
        %v1631 = vadd.f32 %v1630, 0.19993454
        %v1632 = vmul.f32 %v1631, %v1619
        %v1633 = vadd.f32 %v1632, -0.33333147
        %v1634 = vmul.f32 %v1633, %v1619
        %v1635 = vmul.f32 %v1634, %v1618
        %v1636 = vadd.f32 %v1635, %v1618
        %vm1637 = vcmp.gt.f32.partialorder %v1614, %v1613
        %v1638 = vsub.f32 1.5707964, %v1636
        %v1639 = vsel %vm1637, %v1638, %v1636
        %vm1640 = vcmp.lt.f32.partialorder %v1095, 0.0
        %v1641 = vsub.f32 3.1415927, %v1639
        %v1642 = vsel %vm1640, %v1641, %v1639
        %vm1643 = vcmp.lt.s32.totalorder %v1095, 0
        %v1644 = vsel %vm1643, 3.1415927, 0.0
        %vm1645 = vcmp.eq.f32.partialorder %v1417, 0.0
        %v1646 = vsel %vm1645, %v1644, %v1642
        %vm1647 = vcmp.ne.f32.partialorder %v1095, %v1095
        %vm1648 = vcmp.ne.f32.partialorder %v1417, %v1417
        %vm1649 = vmor %vm1647, %vm1648
        %v1650 = vsel %vm1649, nan, %v1646
        %vm1651 = vcmp.lt.f32.partialorder %v1095, 0.0
        %v1652 = vsel %vm1651, 2.3561945, 0.7853982
        %vm1653 = vcmp.eq.s32.totalorder %v1613, inf
        %vm1654 = vcmp.eq.s32.totalorder %v1614, inf
        %vm1655 = vmand %vm1653, %vm1654
        %v1656 = vsel %vm1655, %v1652, %v1650
        %v1657 = vand.u32 2147483647, %v1656
        %v1658 = vand.u32 %v1417, 2147483648
        %v1659 = vor.u32 %v1657, %v1658
        %v1660 = vand.u32 2147483647, %v1098
        %v1661 = vand.u32 2147483647, %v1424
        %v1662 = vmin.f32 %v1660, %v1661
        %v1663 = vmax.f32 %v1660, %v1661
        %v1664 = vrcp.pop %v1663
        %v1665 = vmul.f32 %v1662, %v1664
        %v1666 = vmul.f32 %v1665, %v1665
        %v1667 = vmul.f32 0.002785687, %v1666
        %v1668 = vadd.f32 %v1667, -0.015866
        %v1669 = vmul.f32 %v1668, %v1666
        %v1670 = vadd.f32 %v1669, 0.04247222
        %v1671 = vmul.f32 %v1670, %v1666
        %v1672 = vadd.f32 %v1671, -0.074975304
        %v1673 = vmul.f32 %v1672, %v1666
        %v1674 = vadd.f32 %v1673, 0.1064488
        %v1675 = vmul.f32 %v1674, %v1666
        %v1676 = vadd.f32 %v1675, -0.14207031
        %v1677 = vmul.f32 %v1676, %v1666
        %v1678 = vadd.f32 %v1677, 0.19993454
        %v1679 = vmul.f32 %v1678, %v1666
        %v1680 = vadd.f32 %v1679, -0.33333147
        %v1681 = vmul.f32 %v1680, %v1666
        %v1682 = vmul.f32 %v1681, %v1665
        %v1683 = vadd.f32 %v1682, %v1665
        %vm1684 = vcmp.gt.f32.partialorder %v1661, %v1660
        %v1685 = vsub.f32 1.5707964, %v1683
        %v1686 = vsel %vm1684, %v1685, %v1683
        %vm1687 = vcmp.lt.f32.partialorder %v1098, 0.0
        %v1688 = vsub.f32 3.1415927, %v1686
        %v1689 = vsel %vm1687, %v1688, %v1686
        %vm1690 = vcmp.lt.s32.totalorder %v1098, 0
        %v1691 = vsel %vm1690, 3.1415927, 0.0
        %vm1692 = vcmp.eq.f32.partialorder %v1424, 0.0
        %v1693 = vsel %vm1692, %v1691, %v1689
        %vm1694 = vcmp.ne.f32.partialorder %v1098, %v1098
        %vm1695 = vcmp.ne.f32.partialorder %v1424, %v1424
        %vm1696 = vmor %vm1694, %vm1695
        %v1697 = vsel %vm1696, nan, %v1693
        %vm1698 = vcmp.lt.f32.partialorder %v1098, 0.0
        %v1699 = vsel %vm1698, 2.3561945, 0.7853982
        %vm1700 = vcmp.eq.s32.totalorder %v1660, inf
        %vm1701 = vcmp.eq.s32.totalorder %v1661, inf
        %vm1702 = vmand %vm1700, %vm1701
        %v1703 = vsel %vm1702, %v1699, %v1697
        %v1704 = vand.u32 2147483647, %v1703
        %v1705 = vand.u32 %v1424, 2147483648
        %v1706 = vor.u32 %v1704, %v1705
        %v1707 = vsub.f32 0.0, %v1223
        %v1708 = vsub.f32 0.0, %v1226
        %v1709 = vsub.f32 0.0, %v1231
        %v1710 = vsub.f32 0.0, %v1234
        %v1711 = vsub.f32 0.0, %v1239
        %v1712 = vsub.f32 0.0, %v1242
        %v1713 = vand.u32 2147483647, %v1359
        %v1714 = vand.u32 2147483647, %v1707
        %v1715 = vmin.f32 %v1713, %v1714
        %v1716 = vmax.f32 %v1713, %v1714
        %v1717 = vrcp.pop %v1716
        %v1718 = vmul.f32 %v1715, %v1717
        %v1719 = vmul.f32 %v1718, %v1718
        %v1720 = vmul.f32 0.002785687, %v1719
        %v1721 = vadd.f32 %v1720, -0.015866
        %v1722 = vmul.f32 %v1721, %v1719
        %v1723 = vadd.f32 %v1722, 0.04247222
        %v1724 = vmul.f32 %v1723, %v1719
        %v1725 = vadd.f32 %v1724, -0.074975304
        %v1726 = vmul.f32 %v1725, %v1719
        %v1727 = vadd.f32 %v1726, 0.1064488
        %v1728 = vmul.f32 %v1727, %v1719
        %v1729 = vadd.f32 %v1728, -0.14207031
        %v1730 = vmul.f32 %v1729, %v1719
        %v1731 = vadd.f32 %v1730, 0.19993454
        %v1732 = vmul.f32 %v1731, %v1719
        %v1733 = vadd.f32 %v1732, -0.33333147
        %v1734 = vmul.f32 %v1733, %v1719
        %v1735 = vmul.f32 %v1734, %v1718
        %v1736 = vadd.f32 %v1735, %v1718
        %vm1737 = vcmp.gt.f32.partialorder %v1714, %v1713
        %v1738 = vsub.f32 1.5707964, %v1736
        %v1739 = vsel %vm1737, %v1738, %v1736
        %vm1740 = vcmp.lt.f32.partialorder %v1359, 0.0
        %v1741 = vsub.f32 3.1415927, %v1739
        %v1742 = vsel %vm1740, %v1741, %v1739
        %vm1743 = vcmp.lt.s32.totalorder %v1359, 0
        %v1744 = vsel %vm1743, 3.1415927, 0.0
        %vm1745 = vcmp.eq.f32.partialorder %v1707, 0.0
        %v1746 = vsel %vm1745, %v1744, %v1742
        %vm1747 = vcmp.ne.f32.partialorder %v1359, %v1359
        %vm1748 = vcmp.ne.f32.partialorder %v1707, %v1707
        %vm1749 = vmor %vm1747, %vm1748
        %v1750 = vsel %vm1749, nan, %v1746
        %vm1751 = vcmp.lt.f32.partialorder %v1359, 0.0
        %v1752 = vsel %vm1751, 2.3561945, 0.7853982
        %vm1753 = vcmp.eq.s32.totalorder %v1713, inf
        %vm1754 = vcmp.eq.s32.totalorder %v1714, inf
        %vm1755 = vmand %vm1753, %vm1754
        %v1756 = vsel %vm1755, %v1752, %v1750
        %v1757 = vand.u32 2147483647, %v1756
        %v1758 = vand.u32 %v1707, 2147483648
        %v1759 = vor.u32 %v1757, %v1758
        %v1760 = vand.u32 2147483647, %v1360
        %v1761 = vand.u32 2147483647, %v1708
        %v1762 = vmin.f32 %v1760, %v1761
        %v1763 = vmax.f32 %v1760, %v1761
        %v1764 = vrcp.pop %v1763
        %v1765 = vmul.f32 %v1762, %v1764
        %v1766 = vmul.f32 %v1765, %v1765
        %v1767 = vmul.f32 0.002785687, %v1766
        %v1768 = vadd.f32 %v1767, -0.015866
        %v1769 = vmul.f32 %v1768, %v1766
        %v1770 = vadd.f32 %v1769, 0.04247222
        %v1771 = vmul.f32 %v1770, %v1766
        %v1772 = vadd.f32 %v1771, -0.074975304
        %v1773 = vmul.f32 %v1772, %v1766
        %v1774 = vadd.f32 %v1773, 0.1064488
        %v1775 = vmul.f32 %v1774, %v1766
        %v1776 = vadd.f32 %v1775, -0.14207031
        %v1777 = vmul.f32 %v1776, %v1766
        %v1778 = vadd.f32 %v1777, 0.19993454
        %v1779 = vmul.f32 %v1778, %v1766
        %v1780 = vadd.f32 %v1779, -0.33333147
        %v1781 = vmul.f32 %v1780, %v1766
        %v1782 = vmul.f32 %v1781, %v1765
        %v1783 = vadd.f32 %v1782, %v1765
        %vm1784 = vcmp.gt.f32.partialorder %v1761, %v1760
        %v1785 = vsub.f32 1.5707964, %v1783
        %v1786 = vsel %vm1784, %v1785, %v1783
        %vm1787 = vcmp.lt.f32.partialorder %v1360, 0.0
        %v1788 = vsub.f32 3.1415927, %v1786
        %v1789 = vsel %vm1787, %v1788, %v1786
        %vm1790 = vcmp.lt.s32.totalorder %v1360, 0
        %v1791 = vsel %vm1790, 3.1415927, 0.0
        %vm1792 = vcmp.eq.f32.partialorder %v1708, 0.0
        %v1793 = vsel %vm1792, %v1791, %v1789
        %vm1794 = vcmp.ne.f32.partialorder %v1360, %v1360
        %vm1795 = vcmp.ne.f32.partialorder %v1708, %v1708
        %vm1796 = vmor %vm1794, %vm1795
        %v1797 = vsel %vm1796, nan, %v1793
        %vm1798 = vcmp.lt.f32.partialorder %v1360, 0.0
        %v1799 = vsel %vm1798, 2.3561945, 0.7853982
        %vm1800 = vcmp.eq.s32.totalorder %v1760, inf
        %vm1801 = vcmp.eq.s32.totalorder %v1761, inf
        %vm1802 = vmand %vm1800, %vm1801
        %v1803 = vsel %vm1802, %v1799, %v1797
        %v1804 = vand.u32 2147483647, %v1803
        %v1805 = vand.u32 %v1708, 2147483648
        %v1806 = vor.u32 %v1804, %v1805
        %v1807 = vand.u32 2147483647, %v1361
        %v1808 = vand.u32 2147483647, %v1709
        %v1809 = vmin.f32 %v1807, %v1808
        %v1810 = vmax.f32 %v1807, %v1808
        %v1811 = vrcp.pop %v1810
        %v1812 = vmul.f32 %v1809, %v1811
        %v1813 = vmul.f32 %v1812, %v1812
        %v1814 = vmul.f32 0.002785687, %v1813
        %v1815 = vadd.f32 %v1814, -0.015866
        %v1816 = vmul.f32 %v1815, %v1813
        %v1817 = vadd.f32 %v1816, 0.04247222
        %v1818 = vmul.f32 %v1817, %v1813
        %v1819 = vadd.f32 %v1818, -0.074975304
        %v1820 = vmul.f32 %v1819, %v1813
        %v1821 = vadd.f32 %v1820, 0.1064488
        %v1822 = vmul.f32 %v1821, %v1813
        %v1823 = vadd.f32 %v1822, -0.14207031
        %v1824 = vmul.f32 %v1823, %v1813
        %v1825 = vadd.f32 %v1824, 0.19993454
        %v1826 = vmul.f32 %v1825, %v1813
        %v1827 = vadd.f32 %v1826, -0.33333147
        %v1828 = vmul.f32 %v1827, %v1813
        %v1829 = vmul.f32 %v1828, %v1812
        %v1830 = vadd.f32 %v1829, %v1812
        %vm1831 = vcmp.gt.f32.partialorder %v1808, %v1807
        %v1832 = vsub.f32 1.5707964, %v1830
        %v1833 = vsel %vm1831, %v1832, %v1830
        %vm1834 = vcmp.lt.f32.partialorder %v1361, 0.0
        %v1835 = vsub.f32 3.1415927, %v1833
        %v1836 = vsel %vm1834, %v1835, %v1833
        %vm1837 = vcmp.lt.s32.totalorder %v1361, 0
        %v1838 = vsel %vm1837, 3.1415927, 0.0
        %vm1839 = vcmp.eq.f32.partialorder %v1709, 0.0
        %v1840 = vsel %vm1839, %v1838, %v1836
        %vm1841 = vcmp.ne.f32.partialorder %v1361, %v1361
        %vm1842 = vcmp.ne.f32.partialorder %v1709, %v1709
        %vm1843 = vmor %vm1841, %vm1842
        %v1844 = vsel %vm1843, nan, %v1840
        %vm1845 = vcmp.lt.f32.partialorder %v1361, 0.0
        %v1846 = vsel %vm1845, 2.3561945, 0.7853982
        %vm1847 = vcmp.eq.s32.totalorder %v1807, inf
        %vm1848 = vcmp.eq.s32.totalorder %v1808, inf
        %vm1849 = vmand %vm1847, %vm1848
        %v1850 = vsel %vm1849, %v1846, %v1844
        %v1851 = vand.u32 2147483647, %v1850
        %v1852 = vand.u32 %v1709, 2147483648
        %v1853 = vor.u32 %v1851, %v1852
        %v1854 = vand.u32 2147483647, %v1362
        %v1855 = vand.u32 2147483647, %v1710
        %v1856 = vmin.f32 %v1854, %v1855
        %v1857 = vmax.f32 %v1854, %v1855
        %v1858 = vrcp.pop %v1857
        %v1859 = vmul.f32 %v1856, %v1858
        %v1860 = vmul.f32 %v1859, %v1859
        %v1861 = vmul.f32 0.002785687, %v1860
        %v1862 = vadd.f32 %v1861, -0.015866
        %v1863 = vmul.f32 %v1862, %v1860
        %v1864 = vadd.f32 %v1863, 0.04247222
        %v1865 = vmul.f32 %v1864, %v1860
        %v1866 = vadd.f32 %v1865, -0.074975304
        %v1867 = vmul.f32 %v1866, %v1860
        %v1868 = vadd.f32 %v1867, 0.1064488
        %v1869 = vmul.f32 %v1868, %v1860
        %v1870 = vadd.f32 %v1869, -0.14207031
        %v1871 = vmul.f32 %v1870, %v1860
        %v1872 = vadd.f32 %v1871, 0.19993454
        %v1873 = vmul.f32 %v1872, %v1860
        %v1874 = vadd.f32 %v1873, -0.33333147
        %v1875 = vmul.f32 %v1874, %v1860
        %v1876 = vmul.f32 %v1875, %v1859
        %v1877 = vadd.f32 %v1876, %v1859
        %vm1878 = vcmp.gt.f32.partialorder %v1855, %v1854
        %v1879 = vsub.f32 1.5707964, %v1877
        %v1880 = vsel %vm1878, %v1879, %v1877
        %vm1881 = vcmp.lt.f32.partialorder %v1362, 0.0
        %v1882 = vsub.f32 3.1415927, %v1880
        %v1883 = vsel %vm1881, %v1882, %v1880
        %vm1884 = vcmp.lt.s32.totalorder %v1362, 0
        %v1885 = vsel %vm1884, 3.1415927, 0.0
        %vm1886 = vcmp.eq.f32.partialorder %v1710, 0.0
        %v1887 = vsel %vm1886, %v1885, %v1883
        %vm1888 = vcmp.ne.f32.partialorder %v1362, %v1362
        %vm1889 = vcmp.ne.f32.partialorder %v1710, %v1710
        %vm1890 = vmor %vm1888, %vm1889
        %v1891 = vsel %vm1890, nan, %v1887
        %vm1892 = vcmp.lt.f32.partialorder %v1362, 0.0
        %v1893 = vsel %vm1892, 2.3561945, 0.7853982
        %vm1894 = vcmp.eq.s32.totalorder %v1854, inf
        %vm1895 = vcmp.eq.s32.totalorder %v1855, inf
        %vm1896 = vmand %vm1894, %vm1895
        %v1897 = vsel %vm1896, %v1893, %v1891
        %v1898 = vand.u32 2147483647, %v1897
        %v1899 = vand.u32 %v1710, 2147483648
        %v1900 = vor.u32 %v1898, %v1899
        %v1901 = vand.u32 2147483647, %v1363
        %v1902 = vand.u32 2147483647, %v1711
        %v1903 = vmin.f32 %v1901, %v1902
        %v1904 = vmax.f32 %v1901, %v1902
        %v1905 = vrcp.pop %v1904
        %v1906 = vmul.f32 %v1903, %v1905
        %v1907 = vmul.f32 %v1906, %v1906
        %v1908 = vmul.f32 0.002785687, %v1907
        %v1909 = vadd.f32 %v1908, -0.015866
        %v1910 = vmul.f32 %v1909, %v1907
        %v1911 = vadd.f32 %v1910, 0.04247222
        %v1912 = vmul.f32 %v1911, %v1907
        %v1913 = vadd.f32 %v1912, -0.074975304
        %v1914 = vmul.f32 %v1913, %v1907
        %v1915 = vadd.f32 %v1914, 0.1064488
        %v1916 = vmul.f32 %v1915, %v1907
        %v1917 = vadd.f32 %v1916, -0.14207031
        %v1918 = vmul.f32 %v1917, %v1907
        %v1919 = vadd.f32 %v1918, 0.19993454
        %v1920 = vmul.f32 %v1919, %v1907
        %v1921 = vadd.f32 %v1920, -0.33333147
        %v1922 = vmul.f32 %v1921, %v1907
        %v1923 = vmul.f32 %v1922, %v1906
        %v1924 = vadd.f32 %v1923, %v1906
        %vm1925 = vcmp.gt.f32.partialorder %v1902, %v1901
        %v1926 = vsub.f32 1.5707964, %v1924
        %v1927 = vsel %vm1925, %v1926, %v1924
        %vm1928 = vcmp.lt.f32.partialorder %v1363, 0.0
        %v1929 = vsub.f32 3.1415927, %v1927
        %v1930 = vsel %vm1928, %v1929, %v1927
        %vm1931 = vcmp.lt.s32.totalorder %v1363, 0
        %v1932 = vsel %vm1931, 3.1415927, 0.0
        %vm1933 = vcmp.eq.f32.partialorder %v1711, 0.0
        %v1934 = vsel %vm1933, %v1932, %v1930
        %vm1935 = vcmp.ne.f32.partialorder %v1363, %v1363
        %vm1936 = vcmp.ne.f32.partialorder %v1711, %v1711
        %vm1937 = vmor %vm1935, %vm1936
        %v1938 = vsel %vm1937, nan, %v1934
        %vm1939 = vcmp.lt.f32.partialorder %v1363, 0.0
        %v1940 = vsel %vm1939, 2.3561945, 0.7853982
        %vm1941 = vcmp.eq.s32.totalorder %v1901, inf
        %vm1942 = vcmp.eq.s32.totalorder %v1902, inf
        %vm1943 = vmand %vm1941, %vm1942
        %v1944 = vsel %vm1943, %v1940, %v1938
        %v1945 = vand.u32 2147483647, %v1944
        %v1946 = vand.u32 %v1711, 2147483648
        %v1947 = vor.u32 %v1945, %v1946
        %v1948 = vand.u32 2147483647, %v1364
        %v1949 = vand.u32 2147483647, %v1712
        %v1950 = vmin.f32 %v1948, %v1949
        %v1951 = vmax.f32 %v1948, %v1949
        %v1952 = vrcp.pop %v1951
        %v1953 = vmul.f32 %v1950, %v1952
        %v1954 = vmul.f32 %v1953, %v1953
        %v1955 = vmul.f32 0.002785687, %v1954
        %v1956 = vadd.f32 %v1955, -0.015866
        %v1957 = vmul.f32 %v1956, %v1954
        %v1958 = vadd.f32 %v1957, 0.04247222
        %v1959 = vmul.f32 %v1958, %v1954
        %v1960 = vadd.f32 %v1959, -0.074975304
        %v1961 = vmul.f32 %v1960, %v1954
        %v1962 = vadd.f32 %v1961, 0.1064488
        %v1963 = vmul.f32 %v1962, %v1954
        %v1964 = vadd.f32 %v1963, -0.14207031
        %v1965 = vmul.f32 %v1964, %v1954
        %v1966 = vadd.f32 %v1965, 0.19993454
        %v1967 = vmul.f32 %v1966, %v1954
        %v1968 = vadd.f32 %v1967, -0.33333147
        %v1969 = vmul.f32 %v1968, %v1954
        %v1970 = vmul.f32 %v1969, %v1953
        %v1971 = vadd.f32 %v1970, %v1953
        %vm1972 = vcmp.gt.f32.partialorder %v1949, %v1948
        %v1973 = vsub.f32 1.5707964, %v1971
        %v1974 = vsel %vm1972, %v1973, %v1971
        %vm1975 = vcmp.lt.f32.partialorder %v1364, 0.0
        %v1976 = vsub.f32 3.1415927, %v1974
        %v1977 = vsel %vm1975, %v1976, %v1974
        %vm1978 = vcmp.lt.s32.totalorder %v1364, 0
        %v1979 = vsel %vm1978, 3.1415927, 0.0
        %vm1980 = vcmp.eq.f32.partialorder %v1712, 0.0
        %v1981 = vsel %vm1980, %v1979, %v1977
        %vm1982 = vcmp.ne.f32.partialorder %v1364, %v1364
        %vm1983 = vcmp.ne.f32.partialorder %v1712, %v1712
        %vm1984 = vmor %vm1982, %vm1983
        %v1985 = vsel %vm1984, nan, %v1981
        %vm1986 = vcmp.lt.f32.partialorder %v1364, 0.0
        %v1987 = vsel %vm1986, 2.3561945, 0.7853982
        %vm1988 = vcmp.eq.s32.totalorder %v1948, inf
        %vm1989 = vcmp.eq.s32.totalorder %v1949, inf
        %vm1990 = vmand %vm1988, %vm1989
        %v1991 = vsel %vm1990, %v1987, %v1985
        %v1992 = vand.u32 2147483647, %v1991
        %v1993 = vand.u32 %v1712, 2147483648
        %v1994 = vor.u32 %v1992, %v1993
        %1997 = vrot.lane.b32.xlu0 %v1565, 16
        %v1998 = vpop.permute.xlu0 %1997
        %1999 = vrot.lane.b32.xlu0 %v1612, 16
        %v2000 = vpop.permute.xlu0 %1999
        %2005 = vrot.lane.b32.xlu0 %v1659, 32
        %v2006 = vpop.permute.xlu0 %2005
        %2007 = vrot.lane.b32.xlu0 %v1706, 32
        %v2008 = vpop.permute.xlu0 %2007
        %v2011 = vsel %vm439, %v1471, %v1998
        %v2012 = vsel %vm439, %v1518, %v2000
        %v2013 = vsel %vm735, %v2011, %v2006
        %v2014 = vsel %vm735, %v2012, %v2008
        %2015 = vst.msk [vmem:[%s410] sm:$0xff] %vm779, %v2013
        %2016 = vst.msk [vmem:[%s410 + $0x8] sm:$0xff] %vm779, %v2014
        %2019 = vrot.lane.b32.xlu0 %v1853, 16
        %v2020 = vpop.permute.xlu0 %2019
        %2021 = vrot.lane.b32.xlu0 %v1900, 16
        %v2022 = vpop.permute.xlu0 %2021
        %2027 = vrot.lane.b32.xlu0 %v1947, 32
        %v2028 = vpop.permute.xlu0 %2027
        %2029 = vrot.lane.b32.xlu0 %v1994, 32
        %v2030 = vpop.permute.xlu0 %2029
        %v2033 = vsel %vm439, %v1759, %v2020
        %v2034 = vsel %vm439, %v1806, %v2022
        %v2035 = vsel %vm735, %v2033, %v2028
        %v2036 = vsel %vm735, %v2034, %v2030
        %2039 = vrot.lane.b32.xlu0 %v2035, 48
        %v2040 = vpop.permute.xlu0 %2039
        %2041 = vrot.lane.b32.xlu0 %v2036, 48
        %v2042 = vpop.permute.xlu0 %2041
        %vm2045 = vcmask 785792
        %2046 = vst.msk [vmem:[%s410] sm:$0xff] %vm2045, %v2040
        %2047 = vst.msk [vmem:[%s410 + $0x8] sm:$0xff] %vm2045, %v2042
        %s2048 = sand.u32 %s209, 1
        %s2049 = scalar_lea.sflag [#allocation4], %s2048
        %s2050 = sand.u32 %s209, 1
        %s2051 = smul.addr %s2050, 16
        %s2052 = scalar_lea.vmem [#allocation14], %s2051
        // Predicated region
        $region81: #{tpu_custom_call.1} parent=51 // pred_check
          %p2053 = pneg %p219
        $region82: #{tpu_custom_call.1} parent=51 // pred_check_branch
          %2055 = sbr.rel (%p2053) target = $region84
        $region83: #{tpu_custom_call.1} parent=51 // pred_region
          %s2057 = ssub.s32 256, 256
          %2058 = vsyncadd %s2049, %s2057
          %s2059 = smul.addr %s28, 2
          %s2060 = smul.addr %s2059, 128
          %s2061 = scalar_lea.hbm %s8, %s2060
          %s2062 = sshll.u32 %s2052, 4
          %s2063 = int_to_ptr.vmem [resolvable:$true] %s2062
          %2068 = dma.vmem_to_hbm [thread:$0]  %s2063, 256, %s2061, %s2049, 128, 128, 8
        $region84: #{tpu_custom_call.1} parent=51 // pred_fallthru
          _
      $region52: #{tpu_custom_call.1} parent=5 // pred_fallthru
        _
      %p2069 = scmp.le.s32.totalorder 2, %s23
      // Predicated region
      $region85: #{tpu_custom_call.1} parent=5 // pred_check
        %p2070 = pneg %p2069
      $region86: #{tpu_custom_call.1} parent=5 // pred_check_branch
        %2072 = sbr.rel (%p2070) target = $region88
      $region87: #{tpu_custom_call.1} parent=5 // pred_region
        %s2073 = ssub.s32 %s23, 2
        // Predicated region
        $region89: #{tpu_custom_call.1} parent=87 // pred_check
          %p2074 = pneg %p225
        $region90: #{tpu_custom_call.1} parent=87 // pred_check_branch
          %2076 = sbr.rel (%p2074) target = $region92
        $region91: #{tpu_custom_call.1} parent=87 // pred_region
          %s2077 = sand.u32 %s210, 1
          %s2078 = scalar_lea.sflag [#allocation4], %s2077
          %s2079 = sand.u32 %s210, 1
          %s2080 = smul.addr %s2079, 16
          %s2081 = scalar_lea.vmem [#allocation14], %s2080
          %2082 = dma.done %s2078, 256
        $region92: #{tpu_custom_call.1} parent=87 // pred_fallthru
          _
      $region88: #{tpu_custom_call.1} parent=5 // pred_fallthru
        _
    $region6: #{tpu_custom_call.1} parent=1 // loop_footer
      %s27 = sadd.s32 1, %s23
    $region7: #{tpu_custom_call.1} parent=1 // loop_footer_branch
      %22 = sbr.rel target = $region3
    $region8: #{tpu_custom_call.1} parent=1 // loop_exit
      _
    %2083 = vsyncpa [#allocation3], 1
    %s2084 = scalar_lea.sflag [#allocation3], 1
    %2085 = vsyncpa %s2084, 1
    %2086 = vsyncpa [#allocation6], 1
    %2087 = vsyncpa [#allocation9], 1
    %2088 = vsyncpa [#allocation12], 1
    %2089 = vsyncpa [#allocation4], 1
    %s2090 = scalar_lea.sflag [#allocation4], 1
    %2091 = vsyncpa %s2090, 1

</llo_original>
